<compile_context>
chip_gen: v5e
topology: v5e:2x2
jax: 0.10.0
libtpu: 0.0.40
codegen_flags: <defaults>
</compile_context>

<pallas_src>
import numpy as np
import jax
import jax.numpy as jnp
from jax import lax
from jax.experimental import pallas as pl
from jax.experimental.pallas import tpu as pltpu


# ----------------------------------------------------------------------------
# numpy helpers replicating the module's __init__ / window_sumsquare machinery
# ----------------------------------------------------------------------------
def hann_periodic(n):
    # scipy.signal.get_window('hann', n, fftbins=True)
    k = np.arange(n)
    return 0.5 - 0.5 * np.cos(2.0 * np.pi * k / n)


def pad_center(data, size):
    n = data.shape[-1]
    lpad = int((size - n) // 2)
    lengths = [(0, 0)] * data.ndim
    lengths[-1] = (lpad, int(size - n - lpad))
    return np.pad(data, lengths)


def window_sumsquare(n_frames, hop_length, win_length, n_fft, dtype=np.float32):
    n = n_fft + hop_length * (n_frames - 1)
    x = np.zeros(n, dtype=dtype)
    win_sq = hann_periodic(win_length).astype(dtype) ** 2   # norm=None -> unchanged
    win_sq = pad_center(win_sq, n_fft)
    for i in range(n_frames):
        sample = i * hop_length
        x[sample:min(n, sample + n_fft)] += win_sq[:max(0, min(n_fft, n - sample))]
    return x


def build_inverse_basis(filter_length, hop_length, win_length):
    """Reproduces ISTFT.__init__ -> self.inverse_basis (squeezed to 2D)."""
    scale = filter_length / hop_length
    fourier_basis = np.fft.fft(np.eye(filter_length))
    cutoff = int(filter_length / 2 + 1)
    fourier_basis = np.vstack(
        [np.real(fourier_basis[:cutoff, :]), np.imag(fourier_basis[:cutoff, :])]
    )
    inverse_basis = np.linalg.pinv(scale * fourier_basis).T.astype(np.float32)
    fft_window = hann_periodic(win_length).astype(np.float32)
    fft_window = pad_center(fft_window, filter_length)
    inverse_basis = inverse_basis * fft_window[None, :]      # (2*cutoff, filter_length)
    return inverse_basis, cutoff


# ----------------------------------------------------------------------------
# Pallas kernel
# ----------------------------------------------------------------------------
def istft_kernel(mag_ref, phase_ref, wcos_ref, wsin_ref, corr_ref, out_ref):
    # mag_ref, phase_ref : (bb, Fq, T)   f32  -- native (B, Fq, T) layout block
    # wcos_ref, wsin_ref : (Fq, flen)         -- inverse basis halves, flen = 2*hop
    # corr_ref           : (T, hop)      f32  -- corr row t+1 (post-OLA correction)
    # out_ref            : (bb, T, hop)  f32  -- row t = output samples [t*hop, (t+1)*hop)
    bb, Fq, Tt = mag_ref.shape
    hop = out_ref.shape[-1]

    m = mag_ref[...]
    p = phase_ref[...]
    real = m * jnp.cos(p)                      # EUP cos/sin + VPU mul, f32
    imag = m * jnp.sin(p)

    w_c = wcos_ref[...]
    w_s = wsin_ref[...]
    corr = corr_ref[...]

    # Transposed-LHS ("TN") contraction: contract the frequency (sublane) axis of
    # the activation against axis 0 of the weights.  This keeps the native HBM
    # layout (no wrapper transpose) and is MXU-native.
    tn = (((0,), (0,)), ((), ()))

    for bi in range(bb):                       # static unroll; bb is small (<= 32)
        r = real[bi].astype(w_c.dtype)         # (Fq, T)
        im = imag[bi].astype(w_s.dtype)
        fr = lax.dot_general(r, w_c, tn, preferred_element_type=jnp.float32)
        fr = fr + lax.dot_general(im, w_s, tn, preferred_element_type=jnp.float32)
        # fr: (T, flen) -- per-frame transposed-conv output, f32 accumulation.

        a = fr[:, :hop]                        # contributes to OLA row t
        b = fr[:, hop:]                        # contributes to OLA row t+1
        # 50% overlap-add.  OLA row 0 is exactly the pad_amount prefix the module
        # slices away (pad_amount == hop), so output row j = (b[j] + a[j+1]) * corr[j+1],
        # with a[T] := 0 for the last row.  corr is applied once, after the add.
        if Tt > 1:
            out_ref[bi, :Tt - 1, :] = (b[:Tt - 1, :] + a[1:, :]) * corr[:Tt - 1, :]
            out_ref[bi, Tt - 1:, :] = b[Tt - 1:, :] * corr[Tt - 1:, :]
        else:
            out_ref[bi, :, :] = b * corr


# ----------------------------------------------------------------------------
# Wrapper (the "module")
# ----------------------------------------------------------------------------
class ISTFTPallas:
    def __init__(self, num_samples, filter_length=256, hop_length=128,
                 win_length=None, window="hann", compute_dtype=jnp.float32):
        assert window == "hann"
        self.num_samples = num_samples
        self.filter_length = filter_length
        self.hop_length = hop_length
        self.win_length = win_length if win_length else filter_length
        self.pad_amount = int(filter_length / 2)
        assert filter_length == 2 * hop_length, "kernel assumes 50% overlap"
        # pad_amount == hop_length, so OLA row 0 is always discarded.
        self.compute_dtype = compute_dtype

        inv_basis, cutoff = build_inverse_basis(filter_length, hop_length, self.win_length)
        self.cutoff = cutoff
        self.wcos_np = inv_basis[:cutoff, :]                 # (Fq, filter_length), f32
        self.wsin_np = inv_basis[cutoff:, :]
        self.wcos = jnp.asarray(self.wcos_np, dtype=compute_dtype)
        self.wsin = jnp.asarray(self.wsin_np, dtype=compute_dtype)
        self._corr_cache = {}                                # memoized per n_frames

    # --- window-sum-square correction, memoized per n_frames -----------------
    def _correction(self, n_frames):
        if n_frames not in self._corr_cache:
            scale = float(self.filter_length) / self.hop_length
            ws = window_sumsquare(n_frames, self.hop_length, self.win_length,
                                  self.filter_length, dtype=np.float32)
            tiny = np.finfo(np.float32).tiny
            corr = np.where(ws > tiny, scale / ws, scale).astype(np.float32)
            corr = corr.reshape(n_frames + 1, self.hop_length)
            # Only rows 1..n_frames are needed (row 0 == the discarded pad prefix).
            self._corr_cache[n_frames] = jnp.asarray(corr[1:])        # (T, hop)
        return self._corr_cache[n_frames]

    # --- batch-block sizing ---------------------------------------------------
    def _pick_block_b(self, B, T, Fq):
        hop, flen = self.hop_length, self.filter_length
        # Per batch element per grid step: double-buffered mag+phase blocks and
        # output block, plus f32 frame intermediates.
        per_b = T * (2 * Fq * 4 * 2 + hop * 4 * 2 + flen * 4 * 2)
        budget = 20 * 2**20          # leaves ample headroom on v7x's 64 MiB VMEM
        rows_target = 512            # ~85% of HBM roofline per measured tiling data
        bb = max(1, min(B, rows_target // max(T, 1),
                        budget // max(per_b, 1), 32))
        if B > 1 and bb >= B:
            bb = (B + 1) // 2        # keep grid >= 2 so v7x's second TC has work
        return int(bb)

    def __call__(self, magnitude, phase):
        # magnitude, phase: (B, Fq, T) float32 (native PyTorch NCW layout; NOT transposed)
        B, Fq, T = magnitude.shape
        assert Fq == self.cutoff
        hop, flen = self.hop_length, self.filter_length
        bb = self._pick_block_b(B, T, Fq)
        grid = (pl.cdiv(B, bb),)
        corr = self._correction(T)
        wbytes = np.dtype(self.compute_dtype).itemsize

        # Per-step VMEM footprint (double-buffered ins/outs + weights + intermediates).
        step_bytes = (2 * (2 * bb * Fq * T * 4 + bb * T * hop * 4)
                      + 2 * Fq * flen * wbytes + T * hop * 4
                      + 2 * bb * T * flen * 4)
        vmem_limit = int(min(48 * 2**20, max(32 * 2**20, 2 * step_bytes)))

        cost = pl.CostEstimate(
            flops=int(4 * B * T * Fq * flen + 6 * B * Fq * T),
            transcendentals=int(2 * B * Fq * T),
            bytes_accessed=int(4 * (2 * B * Fq * T + B * T * hop + T * hop)
                               + 2 * Fq * flen * wbytes),
        )

        out = pl.pallas_call(
            istft_kernel,
            out_shape=jax.ShapeDtypeStruct((B, T, hop), jnp.float32),
            grid_spec=pltpu.PrefetchScalarGridSpec(
                num_scalar_prefetch=0,
                grid=grid,
                in_specs=[
                    pl.BlockSpec((bb, Fq, T), lambda i: (i, 0, 0)),
                    pl.BlockSpec((bb, Fq, T), lambda i: (i, 0, 0)),
                    pl.BlockSpec((Fq, flen), lambda i: (0, 0)),
                    pl.BlockSpec((Fq, flen), lambda i: (0, 0)),
                    pl.BlockSpec((T, hop), lambda i: (0, 0)),
                ],
                out_specs=pl.BlockSpec((bb, T, hop), lambda i: (i, 0, 0)),
            ),
            compiler_params=pltpu.CompilerParams(
                dimension_semantics=("parallel",),
                vmem_limit_bytes=vmem_limit),
            cost_estimate=cost,
        )(magnitude, phase, self.wcos, self.wsin, corr)

        # (B, T, hop) -> (B, T*hop) is a contiguous, copy-free reshape; only slice
        # if num_samples is strictly smaller (default config: num_samples == T*hop).
        wav = out.reshape(B, T * hop)
        if self.num_samples < T * hop:
            wav = wav[:, :self.num_samples]
        return wav                               # (B, num_samples)


# ----------------------------------------------------------------------------
# numpy reference (same math, no Pallas) for a sanity check
# ----------------------------------------------------------------------------
def istft_reference_np(module, magnitude, phase):
    mag = np.asarray(magnitude, dtype=np.float64)
    ph = np.asarray(phase, dtype=np.float64)
    B, Fq, T = mag.shape
    hop, flen = module.hop_length, module.filter_length
    wcos = module.wcos_np.astype(np.float64)
    wsin = module.wsin_np.astype(np.float64)
    real = mag * np.cos(ph)
    imag = mag * np.sin(ph)
    frames = (np.einsum("bft,fk->btk", real, wcos)
              + np.einsum("bft,fk->btk", imag, wsin))        # (B, T, flen)
    n_out = (T - 1) * hop + flen
    out = np.zeros((B, n_out))
    for t in range(T):
        out[:, t * hop:t * hop + flen] += frames[:, t]
    ws = window_sumsquare(T, hop, module.win_length, flen, dtype=np.float32)
    tiny = np.finfo(np.float32).tiny
    scale = float(flen) / hop
    corr = np.where(ws > tiny, scale / ws, scale)
    out = out * corr[None, :]
    out = out[:, module.pad_amount:]
    return out[:, :module.num_samples].astype(np.float32)


if __name__ == "__main__":
    # Small deterministic example: B=2 batches, filter_length=256, hop=128,
    # T=8 frames, Fq = 256/2+1 = 129 frequencies, num_samples = 1024 = T*hop.
    B, filter_length, hop, T = 2, 256, 128, 8
    num_samples = 1024
    Fq = filter_length // 2 + 1

    module = ISTFTPallas(num_samples=num_samples, filter_length=filter_length,
                         hop_length=hop)

    key = jax.random.PRNGKey(0)
    k1, k2 = jax.random.split(key)
    magnitude = jax.random.uniform(k1, (B, Fq, T), dtype=jnp.float32)
    phase = jax.random.uniform(k2, (B, Fq, T), dtype=jnp.float32,
                               minval=-np.pi, maxval=np.pi)

    y = module(magnitude, phase)
    y = jax.block_until_ready(y)
    assert y.shape == (B, num_samples), y.shape

    y_ref = istft_reference_np(module, magnitude, phase)
    np.testing.assert_allclose(np.asarray(y), y_ref, rtol=2e-2, atol=2e-2)

    print("KERNEL_OK")
</pallas_src>

<mosaic_0001>
module attributes {stable_mosaic.version = 11 : i64} {
  func.func @istft_kernel(%arg0: i32, %arg1: memref<1x129x8xf32, #tpu.memory_space<vmem>>, %arg2: memref<1x129x8xf32, #tpu.memory_space<vmem>>, %arg3: memref<129x256xf32, #tpu.memory_space<vmem>>, %arg4: memref<129x256xf32, #tpu.memory_space<vmem>>, %arg5: memref<8x128xf32, #tpu.memory_space<vmem>>, %arg6: memref<1x8x128xf32, #tpu.memory_space<vmem>>) attributes {dimension_semantics = [#tpu.dimension_semantics<parallel>], iteration_bounds = array<i64: 2>, scalar_prefetch = 0 : i64, scratch_operands = 0 : i64, tpu.core_type = #tpu.core_type<tc>, window_params = [{transform_indices = @transform_0, window_bounds = array<i64: 1, 129, 8>}, {transform_indices = @transform_1, window_bounds = array<i64: 1, 129, 8>}, {pipeline_mode = #tpu.pipeline_mode<synchronous>, transform_indices = @transform_2, window_bounds = array<i64: 129, 256>}, {pipeline_mode = #tpu.pipeline_mode<synchronous>, transform_indices = @transform_3, window_bounds = array<i64: 129, 256>}, {pipeline_mode = #tpu.pipeline_mode<synchronous>, transform_indices = @transform_4, window_bounds = array<i64: 8, 128>}, {transform_indices = @transform_5, window_bounds = array<i64: 1, 8, 128>}]} {
    %c0 = arith.constant 0 : index
    %c0_0 = arith.constant 0 : index
    %c0_1 = arith.constant 0 : index
    %0 = vector.load %arg1[%c0, %c0_0, %c0_1] : memref<1x129x8xf32, #tpu.memory_space<vmem>>, vector<1x129x8xf32>
    %c0_2 = arith.constant 0 : index
    %c0_3 = arith.constant 0 : index
    %c0_4 = arith.constant 0 : index
    %1 = vector.load %arg2[%c0_2, %c0_3, %c0_4] : memref<1x129x8xf32, #tpu.memory_space<vmem>>, vector<1x129x8xf32>
    %2 = math.cos %1 : vector<1x129x8xf32>
    %3 = arith.mulf %0, %2 : vector<1x129x8xf32>
    %4 = math.sin %1 : vector<1x129x8xf32>
    %5 = arith.mulf %0, %4 : vector<1x129x8xf32>
    %c0_5 = arith.constant 0 : index
    %c0_6 = arith.constant 0 : index
    %6 = vector.load %arg3[%c0_5, %c0_6] : memref<129x256xf32, #tpu.memory_space<vmem>>, vector<129x256xf32>
    %c0_7 = arith.constant 0 : index
    %c0_8 = arith.constant 0 : index
    %7 = vector.load %arg4[%c0_7, %c0_8] : memref<129x256xf32, #tpu.memory_space<vmem>>, vector<129x256xf32>
    %c0_9 = arith.constant 0 : index
    %c0_10 = arith.constant 0 : index
    %8 = vector.load %arg5[%c0_9, %c0_10] : memref<8x128xf32, #tpu.memory_space<vmem>>, vector<8x128xf32>
    %9 = vector.shape_cast %3 : vector<1x129x8xf32> to vector<129x8xf32>
    %10 = vector.shape_cast %5 : vector<1x129x8xf32> to vector<129x8xf32>
    %cst = arith.constant dense<0.000000e+00> : vector<8x256xf32>
    %11 = tpu.matmul %9, %6, %cst {dimension_numbers = #tpu.dot_dimension_numbers<[0], [0], [1], [1], [0, 1, 1, 1], [], []>} : vector<129x8xf32>, vector<129x256xf32>, vector<8x256xf32> -> vector<8x256xf32>
    %cst_11 = arith.constant dense<0.000000e+00> : vector<8x256xf32>
    %12 = tpu.matmul %10, %7, %cst_11 {dimension_numbers = #tpu.dot_dimension_numbers<[0], [0], [1], [1], [0, 1, 1, 1], [], []>} : vector<129x8xf32>, vector<129x256xf32>, vector<8x256xf32> -> vector<8x256xf32>
    %13 = arith.addf %11, %12 : vector<8x256xf32>
    %14 = vector.extract_strided_slice %13 {offsets = [0, 0], sizes = [8, 128], strides = [1, 1]} : vector<8x256xf32> to vector<8x128xf32>
    %15 = vector.extract_strided_slice %13 {offsets = [0, 128], sizes = [8, 128], strides = [1, 1]} : vector<8x256xf32> to vector<8x128xf32>
    %16 = vector.extract_strided_slice %15 {offsets = [0, 0], sizes = [7, 128], strides = [1, 1]} : vector<8x128xf32> to vector<7x128xf32>
    %17 = vector.extract_strided_slice %14 {offsets = [1, 0], sizes = [7, 128], strides = [1, 1]} : vector<8x128xf32> to vector<7x128xf32>
    %18 = arith.addf %16, %17 : vector<7x128xf32>
    %19 = vector.extract_strided_slice %8 {offsets = [0, 0], sizes = [7, 128], strides = [1, 1]} : vector<8x128xf32> to vector<7x128xf32>
    %20 = arith.mulf %18, %19 : vector<7x128xf32>
    %c0_12 = arith.constant 0 : index
    %c0_13 = arith.constant 0 : index
    %c0_14 = arith.constant 0 : index
    %21 = vector.load %arg6[%c0_12, %c0_13, %c0_14] : memref<1x8x128xf32, #tpu.memory_space<vmem>>, vector<1x7x128xf32>
    %22 = vector.shape_cast %21 : vector<1x7x128xf32> to vector<7x128xf32>
    %23 = vector.shape_cast %20 : vector<7x128xf32> to vector<1x7x128xf32>
    tpu.vector_store %arg6[%c0_12, %c0_13, %c0_14], %23 {strides = array<i32>} : memref<1x8x128xf32, #tpu.memory_space<vmem>>, vector<1x7x128xf32>,
    %24 = vector.extract_strided_slice %15 {offsets = [7, 0], sizes = [1, 128], strides = [1, 1]} : vector<8x128xf32> to vector<1x128xf32>
    %25 = vector.extract_strided_slice %8 {offsets = [7, 0], sizes = [1, 128], strides = [1, 1]} : vector<8x128xf32> to vector<1x128xf32>
    %26 = arith.mulf %24, %25 : vector<1x128xf32>
    %c0_15 = arith.constant 0 : index
    %c7 = arith.constant 7 : index
    %c0_16 = arith.constant 0 : index
    %27 = vector.load %arg6[%c0_15, %c7, %c0_16] : memref<1x8x128xf32, #tpu.memory_space<vmem>>, vector<1x1x128xf32>
    %28 = vector.shape_cast %27 : vector<1x1x128xf32> to vector<1x128xf32>
    %29 = vector.shape_cast %26 : vector<1x128xf32> to vector<1x1x128xf32>
    tpu.vector_store %arg6[%c0_15, %c7, %c0_16], %29 {strides = array<i32>} : memref<1x8x128xf32, #tpu.memory_space<vmem>>, vector<1x1x128xf32>,
    return
  }
  func.func @transform_0(%arg0: i32) -> (i32, i32, i32) {
    %c0_i32 = arith.constant 0 : i32
    %c0_i32_0 = arith.constant 0 : i32
    %c0_i32_1 = arith.constant 0 : i32
    return %arg0, %c0_i32, %c0_i32_0 : i32, i32, i32
  }
  func.func @transform_1(%arg0: i32) -> (i32, i32, i32) {
    %c0_i32 = arith.constant 0 : i32
    %c0_i32_0 = arith.constant 0 : i32
    %c0_i32_1 = arith.constant 0 : i32
    return %arg0, %c0_i32, %c0_i32_0 : i32, i32, i32
  }
  func.func @transform_2(%arg0: i32) -> (i32, i32) {
    %c0_i32 = arith.constant 0 : i32
    %c0_i32_0 = arith.constant 0 : i32
    %c0_i32_1 = arith.constant 0 : i32
    return %c0_i32, %c0_i32_0 : i32, i32
  }
  func.func @transform_3(%arg0: i32) -> (i32, i32) {
    %c0_i32 = arith.constant 0 : i32
    %c0_i32_0 = arith.constant 0 : i32
    %c0_i32_1 = arith.constant 0 : i32
    return %c0_i32, %c0_i32_0 : i32, i32
  }
  func.func @transform_4(%arg0: i32) -> (i32, i32) {
    %c0_i32 = arith.constant 0 : i32
    %c0_i32_0 = arith.constant 0 : i32
    %c0_i32_1 = arith.constant 0 : i32
    return %c0_i32, %c0_i32_0 : i32, i32
  }
  func.func @transform_5(%arg0: i32) -> (i32, i32, i32) {
    %c0_i32 = arith.constant 0 : i32
    %c0_i32_0 = arith.constant 0 : i32
    %c0_i32_1 = arith.constant 0 : i32
    return %arg0, %c0_i32, %c0_i32_0 : i32, i32, i32
  }
}

</mosaic_0001>

<llo_original>
// kernel: tpu_custom_call.1
$region0: #{tpu_custom_call.1}
  #allocation0 [shape = 'u32[]', space=smem, size = 0x4, offset = 0x4, fixed_abs, tag = 'smem constant byte address 0x4 - core index']
  #allocation1 [shape = 'u32[72,128]{1,0:T(1,128)}', space=vmem, size = 0x9000, scoped, tag = 'internal scratch']
  %s0 = inlined_call_operand.vmem [shape: f32[2,129,8], index: 0, kind: input, shape index: {}]
  %s1 = inlined_call_operand.vmem [shape: f32[2,129,8], index: 1, kind: input, shape index: {}]
  %s2 = inlined_call_operand.vmem [shape: f32[129,256], index: 2, kind: input, shape index: {}]
  %s3 = inlined_call_operand.vmem [shape: f32[129,256], index: 3, kind: input, shape index: {}]
  %s4 = inlined_call_operand.vmem [shape: f32[8,128], index: 4, kind: input, shape index: {}]
  %s5 = inlined_call_operand.hbm [shape: f32[2,8,128], index: 5, kind: output, shape index: {}]
  %s6 = sld [smem:[#allocation0]]
  $region53: #{tpu_custom_call.1} parent=0
    _
  %s8 = ssub.s32 1, %s6
  %s9 = scalar_select 0, %s8, %s6
  $region1: #{tpu_custom_call.1} parent=0
    #allocation2 [shape = 'u8[8192]{0}', space=vmem, size = 0x2000, scoped, tag = 'output window, operand 0']
    #allocation3 [shape = 's32[2]{0}', space=sflag, size = 0x8, scoped, tag = 'scoped memory for tpu_custom_call.1']
    %10 = vsyncpa [#allocation3], 0
    %s11 = scalar_lea.sflag [#allocation3], 1
    %12 = vsyncpa %s11, 0
    loop: start=0, step=1, limit=4
    $region2: #{tpu_custom_call.1} parent=1 // loop_pre_header
      _
    $region3: #{tpu_custom_call.1} parent=1 // loop_header
      %s14 = sphi 0, %s18
      %p15 = scmp.ge.s32.totalorder %s14, 4
      %s24 = sphi 0, %s26
      %s27 = sphi 0, %s24
      %s28 = sphi 0, %s27
      %s44 = sphi 0, %s28
      %s50 = sphi 0, %s52
      %s53 = sphi 0, %s50
      %s54 = sphi 0, %s53
      %s70 = sphi 0, %s54
      %s74 = sphi 0, %s74
      %s76 = sphi 0, %s74
      %s77 = sphi 0, %s76
      %s91 = sphi 0, %s77
      %s95 = sphi 0, %s95
      %s97 = sphi 0, %s95
      %s98 = sphi 0, %s97
      %s112 = sphi 0, %s98
      %s116 = sphi 0, %s116
      %s118 = sphi 0, %s116
      %s119 = sphi 0, %s118
      %s133 = sphi 0, %s119
      %s139 = sphi 0, %s141
      %s142 = sphi 0, %s139
      %s143 = sphi 0, %s142
      %s159 = sphi 0, %s143
    $region4: #{tpu_custom_call.1} parent=1 // loop_header_branch
      %17 = sbr.rel (%p15) target = $region8
    $region5: #{tpu_custom_call.1} parent=1 // loop_body
      %s19 = ssub.s32 %s14, 1
      %s20 = ssub.s32 %s14, 2
      %s21 = sadd.s32 %s14, 1
      %s22 = ssub.s32 %s14, %s21
      %p23 = scmp.eq.s32.totalorder %s22, 0
      %s25 = sadd.s32 %s24, 1
      %s26 = scalar_select %p23, %s24, %s25
      %p29 = pneg %p23
      %p30 = scmp.eq.s32.totalorder %s14, 1
      %p31 = por %p29, %p30
      %p32 = scmp.ne.s32.totalorder %s24, %s27
      %p33 = scmp.eq.s32.totalorder %s14, 0
      %p34 = por %p32, %p33
      %p35 = scmp.ne.s32.totalorder %s24, %s27
      %p36 = scmp.eq.s32.totalorder %s19, 1
      %p37 = por %p35, %p36
      %p38 = scmp.ne.s32.totalorder %s27, %s28
      %p39 = scmp.eq.s32.totalorder %s19, 0
      %p40 = por %p38, %p39
      %p41 = scmp.ne.s32.totalorder %s27, %s28
      %p42 = scmp.eq.s32.totalorder %s20, 1
      %p43 = por %p41, %p42
      %p45 = scmp.ne.s32.totalorder %s28, %s44
      %p46 = scmp.eq.s32.totalorder %s20, 0
      %p47 = por %p45, %p46
      %s48 = ssub.s32 %s14, %s21
      %p49 = scmp.eq.s32.totalorder %s48, 0
      %s51 = sadd.s32 %s50, 1
      %s52 = scalar_select %p49, %s50, %s51
      %p55 = pneg %p49
      %p56 = scmp.eq.s32.totalorder %s14, 1
      %p57 = por %p55, %p56
      %p58 = scmp.ne.s32.totalorder %s50, %s53
      %p59 = scmp.eq.s32.totalorder %s14, 0
      %p60 = por %p58, %p59
      %p61 = scmp.ne.s32.totalorder %s50, %s53
      %p62 = scmp.eq.s32.totalorder %s19, 1
      %p63 = por %p61, %p62
      %p64 = scmp.ne.s32.totalorder %s53, %s54
      %p65 = scmp.eq.s32.totalorder %s19, 0
      %p66 = por %p64, %p65
      %p67 = scmp.ne.s32.totalorder %s53, %s54
      %p68 = scmp.eq.s32.totalorder %s20, 1
      %p69 = por %p67, %p68
      %p71 = scmp.ne.s32.totalorder %s54, %s70
      %p72 = scmp.eq.s32.totalorder %s20, 0
      %p73 = por %p71, %p72
      %s75 = sadd.s32 %s74, 1
      %p78 = scmp.eq.s32.totalorder %s14, 1
      %p79 = scmp.ne.s32.totalorder %s74, %s76
      %p80 = scmp.eq.s32.totalorder %s14, 0
      %p81 = por %p79, %p80
      %p82 = scmp.ne.s32.totalorder %s74, %s76
      %p83 = scmp.eq.s32.totalorder %s19, 1
      %p84 = por %p82, %p83
      %p85 = scmp.ne.s32.totalorder %s76, %s77
      %p86 = scmp.eq.s32.totalorder %s19, 0
      %p87 = por %p85, %p86
      %p88 = scmp.ne.s32.totalorder %s76, %s77
      %p89 = scmp.eq.s32.totalorder %s20, 1
      %p90 = por %p88, %p89
      %p92 = scmp.ne.s32.totalorder %s77, %s91
      %p93 = scmp.eq.s32.totalorder %s20, 0
      %p94 = por %p92, %p93
      %s96 = sadd.s32 %s95, 1
      %p99 = scmp.eq.s32.totalorder %s14, 1
      %p100 = scmp.ne.s32.totalorder %s95, %s97
      %p101 = scmp.eq.s32.totalorder %s14, 0
      %p102 = por %p100, %p101
      %p103 = scmp.ne.s32.totalorder %s95, %s97
      %p104 = scmp.eq.s32.totalorder %s19, 1
      %p105 = por %p103, %p104
      %p106 = scmp.ne.s32.totalorder %s97, %s98
      %p107 = scmp.eq.s32.totalorder %s19, 0
      %p108 = por %p106, %p107
      %p109 = scmp.ne.s32.totalorder %s97, %s98
      %p110 = scmp.eq.s32.totalorder %s20, 1
      %p111 = por %p109, %p110
      %p113 = scmp.ne.s32.totalorder %s98, %s112
      %p114 = scmp.eq.s32.totalorder %s20, 0
      %p115 = por %p113, %p114
      %s117 = sadd.s32 %s116, 1
      %p120 = scmp.eq.s32.totalorder %s14, 1
      %p121 = scmp.ne.s32.totalorder %s116, %s118
      %p122 = scmp.eq.s32.totalorder %s14, 0
      %p123 = por %p121, %p122
      %p124 = scmp.ne.s32.totalorder %s116, %s118
      %p125 = scmp.eq.s32.totalorder %s19, 1
      %p126 = por %p124, %p125
      %p127 = scmp.ne.s32.totalorder %s118, %s119
      %p128 = scmp.eq.s32.totalorder %s19, 0
      %p129 = por %p127, %p128
      %p130 = scmp.ne.s32.totalorder %s118, %s119
      %p131 = scmp.eq.s32.totalorder %s20, 1
      %p132 = por %p130, %p131
      %p134 = scmp.ne.s32.totalorder %s119, %s133
      %p135 = scmp.eq.s32.totalorder %s20, 0
      %p136 = por %p134, %p135
      %s137 = ssub.s32 %s14, %s21
      %p138 = scmp.eq.s32.totalorder %s137, 0
      %s140 = sadd.s32 %s139, 1
      %s141 = scalar_select %p138, %s139, %s140
      %p144 = pneg %p138
      %p145 = scmp.eq.s32.totalorder %s14, 1
      %p146 = por %p144, %p145
      %p147 = scmp.ne.s32.totalorder %s139, %s142
      %p148 = scmp.eq.s32.totalorder %s14, 0
      %p149 = por %p147, %p148
      %p150 = scmp.ne.s32.totalorder %s139, %s142
      %p151 = scmp.eq.s32.totalorder %s19, 1
      %p152 = por %p150, %p151
      %p153 = scmp.ne.s32.totalorder %s142, %s143
      %p154 = scmp.eq.s32.totalorder %s19, 0
      %p155 = por %p153, %p154
      %p156 = scmp.ne.s32.totalorder %s142, %s143
      %p157 = scmp.eq.s32.totalorder %s20, 1
      %p158 = por %p156, %p157
      %p160 = scmp.ne.s32.totalorder %s143, %s159
      %p161 = scmp.eq.s32.totalorder %s20, 0
      %p162 = por %p160, %p161
      %p163 = scmp.le.s32.totalorder 1, %s14
      %p164 = scmp.lt.s32.totalorder %s14, 3
      %p165 = pnand %p163, %p164
      %p166 = pneg %p165
      // Predicated region
      $region9: #{tpu_custom_call.1} parent=5 // pred_check
        _
      $region10: #{tpu_custom_call.1} parent=5 // pred_check_branch
        %168 = sbr.rel (%p165) target = $region12
      $region11: #{tpu_custom_call.1} parent=5 // pred_region
        %s169 = ssub.s32 %s14, 1
        // Predicated region
        $region13: #{tpu_custom_call.1} parent=11 // pred_check
          %p170 = pneg %p87
        $region14: #{tpu_custom_call.1} parent=11 // pred_check_branch
          %172 = sbr.rel (%p170) target = $region16
        $region15: #{tpu_custom_call.1} parent=11 // pred_region
          _
        $region16: #{tpu_custom_call.1} parent=11 // pred_fallthru
          _
        // Predicated region
        $region17: #{tpu_custom_call.1} parent=11 // pred_check
          %p173 = pneg %p108
        $region18: #{tpu_custom_call.1} parent=11 // pred_check_branch
          %175 = sbr.rel (%p173) target = $region20
        $region19: #{tpu_custom_call.1} parent=11 // pred_region
          _
        $region20: #{tpu_custom_call.1} parent=11 // pred_fallthru
          _
        // Predicated region
        $region21: #{tpu_custom_call.1} parent=11 // pred_check
          %p176 = pneg %p129
        $region22: #{tpu_custom_call.1} parent=11 // pred_check_branch
          %178 = sbr.rel (%p176) target = $region24
        $region23: #{tpu_custom_call.1} parent=11 // pred_region
          _
        $region24: #{tpu_custom_call.1} parent=11 // pred_fallthru
          _
      $region12: #{tpu_custom_call.1} parent=5 // pred_fallthru
        _
      %p179 = scmp.lt.s32.totalorder %s14, 2
      // Predicated region
      $region25: #{tpu_custom_call.1} parent=5 // pred_check
        %p180 = pneg %p179
      $region26: #{tpu_custom_call.1} parent=5 // pred_check_branch
        %182 = sbr.rel (%p180) target = $region28
      $region27: #{tpu_custom_call.1} parent=5 // pred_region
        // Predicated region
        $region29: #{tpu_custom_call.1} parent=27 // pred_check
          %p183 = pneg %p34
        $region30: #{tpu_custom_call.1} parent=27 // pred_check_branch
          %185 = sbr.rel (%p183) target = $region32
        $region31: #{tpu_custom_call.1} parent=27 // pred_region
          %p186 = scmp.lt.s32.totalorder %s14, 1
          %s187 = scalar_select %p186, %s14, 1
          %s188 = smul.addr %s187, 17
          %s189 = smul.addr %s188, 8
          %s190 = scalar_lea.vmem %s0, %s189
        $region32: #{tpu_custom_call.1} parent=27 // pred_fallthru
          _
        // Predicated region
        $region33: #{tpu_custom_call.1} parent=27 // pred_check
          %p191 = pneg %p60
        $region34: #{tpu_custom_call.1} parent=27 // pred_check_branch
          %193 = sbr.rel (%p191) target = $region36
        $region35: #{tpu_custom_call.1} parent=27 // pred_region
          %p194 = scmp.lt.s32.totalorder %s14, 1
          %s195 = scalar_select %p194, %s14, 1
          %s196 = smul.addr %s195, 17
          %s197 = smul.addr %s196, 8
          %s198 = scalar_lea.vmem %s1, %s197
        $region36: #{tpu_custom_call.1} parent=27 // pred_fallthru
          _
      $region28: #{tpu_custom_call.1} parent=5 // pred_fallthru
        _
      %p199 = scmp.le.s32.totalorder 1, %s14
      %p200 = scmp.lt.s32.totalorder %s14, 3
      %p201 = pnand %p199, %p200
      %p202 = pneg %p201
      // Predicated region
      $region37: #{tpu_custom_call.1} parent=5 // pred_check
        _
      $region38: #{tpu_custom_call.1} parent=5 // pred_check_branch
        %204 = sbr.rel (%p201) target = $region40
      $region39: #{tpu_custom_call.1} parent=5 // pred_region
        %s205 = ssub.s32 %s14, 1
        %p206 = scmp.lt.s32.totalorder %s19, 1
        %s207 = scalar_select %p206, %s19, 1
        %s208 = smul.addr %s207, 17
        %s209 = smul.addr %s208, 8
        %s210 = scalar_lea.vmem %s0, %s209
        %p211 = pneg %p40
        %p212 = pneg %p37
        %p213 = scmp.lt.s32.totalorder %s19, 1
        %s214 = scalar_select %p213, %s19, 1
        %s215 = smul.addr %s214, 17
        %s216 = smul.addr %s215, 8
        %s217 = scalar_lea.vmem %s1, %s216
        %p218 = pneg %p66
        %p219 = pneg %p63
        %p220 = pneg %p87
        %p221 = pneg %p84
        %p222 = pneg %p108
        %p223 = pneg %p105
        %p224 = pneg %p129
        %p225 = pneg %p126
        %p226 = pneg %p155
        %p227 = pneg %p152
        %s228 = sand.u32 %s142, 1
        %s229 = scalar_lea.sflag [#allocation3], %s228
        %s230 = sand.u32 %s142, 1
        %s231 = smul.addr %s230, 8
        %s232 = scalar_lea.vmem [#allocation2], %s231
        %p233 = scmp.lt.s32.totalorder %s19, 1
        %s234 = scalar_select %p233, %s19, 1
        %s235 = smul.addr %s234, 17
        %s236 = smul.addr %s235, 8
        %s237 = scalar_lea.vmem %s0, %s236
        %p238 = scmp.lt.s32.totalorder %s19, 1
        %s239 = scalar_select %p238, %s19, 1
        %s240 = smul.addr %s239, 17
        %s241 = smul.addr %s240, 8
        %s242 = scalar_lea.vmem %s1, %s241
        %v243 = vld [vmem:[%s237] sm:$0xff]
        %v244 = vld [vmem:[%s237 + $0x8] sm:$0xff]
        %v245 = vld [vmem:[%s237 + $0x10] sm:$0xff]
        %v246 = vld [vmem:[%s237 + $0x18] sm:$0xff]
        %v247 = vld [vmem:[%s237 + $0x20] sm:$0xff]
        %v248 = vld [vmem:[%s237 + $0x28] sm:$0xff]
        %v249 = vld [vmem:[%s237 + $0x30] sm:$0xff]
        %v250 = vld [vmem:[%s237 + $0x38] sm:$0xff]
        %v251 = vld [vmem:[%s237 + $0x40] sm:$0xff]
        %v252 = vld [vmem:[%s237 + $0x48] sm:$0xff]
        %v253 = vld [vmem:[%s237 + $0x50] sm:$0xff]
        %v254 = vld [vmem:[%s237 + $0x58] sm:$0xff]
        %v255 = vld [vmem:[%s237 + $0x60] sm:$0xff]
        %v256 = vld [vmem:[%s237 + $0x68] sm:$0xff]
        %v257 = vld [vmem:[%s237 + $0x70] sm:$0xff]
        %v258 = vld [vmem:[%s237 + $0x78] sm:$0xff]
        %v259 = vld [vmem:[%s237 + $0x80] sm:$0x1]
        %v260 = vld [vmem:[%s242] sm:$0xff]
        %v261 = vld [vmem:[%s242 + $0x8] sm:$0xff]
        %v262 = vld [vmem:[%s242 + $0x10] sm:$0xff]
        %v263 = vld [vmem:[%s242 + $0x18] sm:$0xff]
        %v264 = vld [vmem:[%s242 + $0x20] sm:$0xff]
        %v265 = vld [vmem:[%s242 + $0x28] sm:$0xff]
        %v266 = vld [vmem:[%s242 + $0x30] sm:$0xff]
        %v267 = vld [vmem:[%s242 + $0x38] sm:$0xff]
        %v268 = vld [vmem:[%s242 + $0x40] sm:$0xff]
        %v269 = vld [vmem:[%s242 + $0x48] sm:$0xff]
        %v270 = vld [vmem:[%s242 + $0x50] sm:$0xff]
        %v271 = vld [vmem:[%s242 + $0x58] sm:$0xff]
        %v272 = vld [vmem:[%s242 + $0x60] sm:$0xff]
        %v273 = vld [vmem:[%s242 + $0x68] sm:$0xff]
        %v274 = vld [vmem:[%s242 + $0x70] sm:$0xff]
        %v275 = vld [vmem:[%s242 + $0x78] sm:$0xff]
        %v276 = vld [vmem:[%s242 + $0x80] sm:$0x1]
        %v277 = vand.u32 2147483647, %v260
        %vm278 = vcmp.le.f32.partialorder %v277, 0.7853982
        %vm279 = vcmp.lt.s32.totalorder %v260, 0
        %v280 = vand.u32 %v260, 2139095040
        %v281 = vshrl.u32 %v280, 23
        %v282 = vsub.s32 %v281, 127
        %v283 = vand.u32 2147483647, %v260
        %v284 = vand.u32 %v283, 8388607
        %v285 = vor.u32 %v284, 8388608
        %v286 = vsub.s32 0, %v285
        %v287 = vadd.s32 %v282, 1
        %vm288 = vcmp.gt.s32.totalorder %v287, 0
        %v289 = vsel %vm288, %v287, 0
        %v290 = vshrl.u32 %v289, 5
        %v291 = vand.u32 %v289, 31
        %v292 = vsub.s32 32, %v291
        %v293 = vshrl.u32 683565275, %v292
        %v294 = vshll.u32 683565275, %v291
        %v295 = vshrl.u32 2475754826, %v292
        %v296 = vor.u32 %v294, %v295
        %v297 = vshll.u32 2475754826, %v291
        %v298 = vshrl.u32 2131351028, %v292
        %v299 = vor.u32 %v297, %v298
        %v300 = vshll.u32 2131351028, %v291
        %v301 = vshrl.u32 2102212464, %v292
        %v302 = vor.u32 %v300, %v301
        %v303 = vshll.u32 2102212464, %v291
        %v304 = vshrl.u32 920167782, %v292
        %v305 = vor.u32 %v303, %v304
        %v306 = vshll.u32 920167782, %v291
        %v307 = vshrl.u32 1326507024, %v292
        %v308 = vor.u32 %v306, %v307
        %vm309 = vcmp.lt.s32.totalorder %v290, 1
        %vm310 = vcmp.lt.s32.totalorder %v290, 2
        %vm311 = vcmp.lt.s32.totalorder %v290, 3
        %vm312 = vcmp.lt.s32.totalorder %v290, 4
        %v313 = vsel %vm309, %v293, %v296
        %v314 = vsel %vm312, %v302, 2102212464
        %v315 = vsel %vm311, %v299, %v314
        %v316 = vsel %vm310, %v313, %v315
        %v317 = vsel %vm309, %v296, %v299
        %v318 = vsel %vm312, %v305, 920167782
        %v319 = vsel %vm311, %v302, %v318
        %v320 = vsel %vm310, %v317, %v319
        %v321 = vsel %vm309, %v299, %v302
        %v322 = vsel %vm312, %v308, 1326507024
        %v323 = vsel %vm311, %v305, %v322
        %v324 = vsel %vm310, %v321, %v323
        %v325 = vshll.u32 %v285, 8
        %v326 = vand.u32 %v325, 65535
        %v327 = vshrl.u32 %v325, 16
        %v328 = vand.u32 %v324, 65535
        %v329 = vshrl.u32 %v324, 16
        %v330 = vmul.u32 %v326, %v328
        %v331 = vmul.u32 %v326, %v329
        %v332 = vmul.u32 %v327, %v328
        %v333 = vmul.u32 %v327, %v329
        %v334 = vshll.u32 %v331, 16
        %v335 = vshrl.u32 %v331, 16
        %v336 = vshll.u32 %v332, 16
        %v337 = vshrl.u32 %v332, 16
        %vm338 = vc.u32 %v330, %v334
        %v339 = vsel %vm338, 1, 0
        %v340 = vadd.s32 %v330, %v334
        %v341 = vadd.s32 %v333, %v339
        %vm342 = vc.u32 %v340, %v336
        %v343 = vsel %vm342, 1, 0
        %v344 = vadd.s32 %v340, %v336
        %v345 = vadd.s32 %v341, %v343
        %v346 = vadd.s32 %v345, %v335
        %v347 = vadd.s32 %v346, %v337
        %v348 = vand.u32 %v325, 65535
        %v349 = vshrl.u32 %v325, 16
        %v350 = vand.u32 %v320, 65535
        %v351 = vshrl.u32 %v320, 16
        %v352 = vmul.u32 %v348, %v350
        %v353 = vmul.u32 %v348, %v351
        %v354 = vmul.u32 %v349, %v350
        %v355 = vmul.u32 %v349, %v351
        %v356 = vshll.u32 %v353, 16
        %v357 = vshrl.u32 %v353, 16
        %v358 = vshll.u32 %v354, 16
        %v359 = vshrl.u32 %v354, 16
        %vm360 = vc.u32 %v352, %v356
        %v361 = vsel %vm360, 1, 0
        %v362 = vadd.s32 %v352, %v356
        %v363 = vadd.s32 %v355, %v361
        %vm364 = vc.u32 %v362, %v358
        %v365 = vsel %vm364, 1, 0
        %v366 = vadd.s32 %v362, %v358
        %v367 = vadd.s32 %v363, %v365
        %v368 = vadd.s32 %v367, %v357
        %v369 = vadd.s32 %v368, %v359
        %v370 = vmul.u32 %v325, %v316
        %v371 = vadd.s32 %v347, %v366
        %vm372 = vc.u32 %v347, %v366
        %v373 = vadd.s32 %v369, 1
        %v374 = vsel %vm372, %v373, %v369
        %v375 = vadd.s32 %v370, %v374
        %v376 = vadd.s32 %v375, 536870912
        %v377 = vshrl.u32 %v376, 30
        %v378 = vshll.u32 %v377, 30
        %v379 = vsub.s32 %v375, %v378
        %vm380 = vcmp.lt.s32.totalorder %v379, 0
        %v381 = vsub.s32 0, %v379
        %v382 = vsel %vm380, %v381, %v379
        %v383 = vclz %v382
        %v384 = vsub.s32 %v383, 2
        %vm385 = vcmp.gt.s32.totalorder 0, %v384
        %v386 = vsel %vm385, 0, %v384
        %v387 = vsub.s32 32, %v386
        %v388 = vshll.u32 %v379, %v386
        %v389 = vshrl.u32 %v371, %v387
        %v390 = vor.u32 %v388, %v389
        %v391 = vsub.s32 4294967266, %v386
        %v392 = vadd.s32 %v391, 127
        %v393 = vshll.u32 %v392, 23
        %v394 = vor.u32 4788187, %v393
        %v395 = vand.u32 2147483647, %v394
        %v397 = vcvt.s32.f32 %v390
        %v398 = vmul.f32 %v397, %v395
        %v399 = vxor.u32 %v398, 2147483648
        %v400 = vsel %vm279, %v399, %v398
        %v401 = vsub.s32 4, %v377
        %v402 = vsel %vm279, %v401, %v377
        %v403 = vsel %vm278, %v260, %v400
        %v404 = vsel %vm278, 0, %v402
        %v405 = vmul.f32 %v403, %v403
        %v406 = vmul.f32 %v405, -0.001358992
        %v407 = vadd.f32 %v406, 0.041655596
        %v408 = vmul.f32 %v405, %v407
        %v409 = vadd.f32 %v408, -0.4999988
        %v410 = vmul.f32 %v405, %v409
        %v411 = vadd.f32 1.0, %v410
        %v412 = vmul.f32 %v403, %v403
        %v413 = vmul.f32 %v412, -0.00019511016
        %v414 = vadd.f32 %v413, 0.008332121
        %v415 = vmul.f32 %v412, %v414
        %v416 = vadd.f32 %v415, -0.16666654
        %v417 = vmul.f32 %v412, %v416
        %v418 = vadd.f32 %v417, 1.0
        %v419 = vmul.f32 %v418, %v403
        %vm420 = vweird.f32 %v260
        %v421 = vand.u32 %v404, 3
        %vm422 = vcmp.lt.s32.totalorder %v421, 2
        %vm423 = vcmp.eq.s32.totalorder %v421, 0
        %v424 = vxor.u32 %v419, 2147483648
        %v425 = vsel %vm423, %v411, %v424
        %vm426 = vcmp.eq.s32.totalorder %v421, 2
        %v427 = vxor.u32 %v411, 2147483648
        %v428 = vsel %vm426, %v427, %v419
        %v429 = vsel %vm422, %v425, %v428
        %v430 = vsel %vm420, nan, %v429
        %v431 = vand.u32 2147483647, %v261
        %vm432 = vcmp.le.f32.partialorder %v431, 0.7853982
        %vm433 = vcmp.lt.s32.totalorder %v261, 0
        %v434 = vand.u32 %v261, 2139095040
        %v435 = vshrl.u32 %v434, 23
        %v436 = vsub.s32 %v435, 127
        %v437 = vand.u32 2147483647, %v261
        %v438 = vand.u32 %v437, 8388607
        %v439 = vor.u32 %v438, 8388608
        %v440 = vsub.s32 0, %v439
        %v441 = vadd.s32 %v436, 1
        %vm442 = vcmp.gt.s32.totalorder %v441, 0
        %v443 = vsel %vm442, %v441, 0
        %v444 = vshrl.u32 %v443, 5
        %v445 = vand.u32 %v443, 31
        %v446 = vsub.s32 32, %v445
        %v447 = vshrl.u32 683565275, %v446
        %v448 = vshll.u32 683565275, %v445
        %v449 = vshrl.u32 2475754826, %v446
        %v450 = vor.u32 %v448, %v449
        %v451 = vshll.u32 2475754826, %v445
        %v452 = vshrl.u32 2131351028, %v446
        %v453 = vor.u32 %v451, %v452
        %v454 = vshll.u32 2131351028, %v445
        %v455 = vshrl.u32 2102212464, %v446
        %v456 = vor.u32 %v454, %v455
        %v457 = vshll.u32 2102212464, %v445
        %v458 = vshrl.u32 920167782, %v446
        %v459 = vor.u32 %v457, %v458
        %v460 = vshll.u32 920167782, %v445
        %v461 = vshrl.u32 1326507024, %v446
        %v462 = vor.u32 %v460, %v461
        %vm463 = vcmp.lt.s32.totalorder %v444, 1
        %vm464 = vcmp.lt.s32.totalorder %v444, 2
        %vm465 = vcmp.lt.s32.totalorder %v444, 3
        %vm466 = vcmp.lt.s32.totalorder %v444, 4
        %v467 = vsel %vm463, %v447, %v450
        %v468 = vsel %vm466, %v456, 2102212464
        %v469 = vsel %vm465, %v453, %v468
        %v470 = vsel %vm464, %v467, %v469
        %v471 = vsel %vm463, %v450, %v453
        %v472 = vsel %vm466, %v459, 920167782
        %v473 = vsel %vm465, %v456, %v472
        %v474 = vsel %vm464, %v471, %v473
        %v475 = vsel %vm463, %v453, %v456
        %v476 = vsel %vm466, %v462, 1326507024
        %v477 = vsel %vm465, %v459, %v476
        %v478 = vsel %vm464, %v475, %v477
        %v479 = vshll.u32 %v439, 8
        %v480 = vand.u32 %v479, 65535
        %v481 = vshrl.u32 %v479, 16
        %v482 = vand.u32 %v478, 65535
        %v483 = vshrl.u32 %v478, 16
        %v484 = vmul.u32 %v480, %v482
        %v485 = vmul.u32 %v480, %v483
        %v486 = vmul.u32 %v481, %v482
        %v487 = vmul.u32 %v481, %v483
        %v488 = vshll.u32 %v485, 16
        %v489 = vshrl.u32 %v485, 16
        %v490 = vshll.u32 %v486, 16
        %v491 = vshrl.u32 %v486, 16
        %vm492 = vc.u32 %v484, %v488
        %v493 = vsel %vm492, 1, 0
        %v494 = vadd.s32 %v484, %v488
        %v495 = vadd.s32 %v487, %v493
        %vm496 = vc.u32 %v494, %v490
        %v497 = vsel %vm496, 1, 0
        %v498 = vadd.s32 %v494, %v490
        %v499 = vadd.s32 %v495, %v497
        %v500 = vadd.s32 %v499, %v489
        %v501 = vadd.s32 %v500, %v491
        %v502 = vand.u32 %v479, 65535
        %v503 = vshrl.u32 %v479, 16
        %v504 = vand.u32 %v474, 65535
        %v505 = vshrl.u32 %v474, 16
        %v506 = vmul.u32 %v502, %v504
        %v507 = vmul.u32 %v502, %v505
        %v508 = vmul.u32 %v503, %v504
        %v509 = vmul.u32 %v503, %v505
        %v510 = vshll.u32 %v507, 16
        %v511 = vshrl.u32 %v507, 16
        %v512 = vshll.u32 %v508, 16
        %v513 = vshrl.u32 %v508, 16
        %vm514 = vc.u32 %v506, %v510
        %v515 = vsel %vm514, 1, 0
        %v516 = vadd.s32 %v506, %v510
        %v517 = vadd.s32 %v509, %v515
        %vm518 = vc.u32 %v516, %v512
        %v519 = vsel %vm518, 1, 0
        %v520 = vadd.s32 %v516, %v512
        %v521 = vadd.s32 %v517, %v519
        %v522 = vadd.s32 %v521, %v511
        %v523 = vadd.s32 %v522, %v513
        %v524 = vmul.u32 %v479, %v470
        %v525 = vadd.s32 %v501, %v520
        %vm526 = vc.u32 %v501, %v520
        %v527 = vadd.s32 %v523, 1
        %v528 = vsel %vm526, %v527, %v523
        %v529 = vadd.s32 %v524, %v528
        %v530 = vadd.s32 %v529, 536870912
        %v531 = vshrl.u32 %v530, 30
        %v532 = vshll.u32 %v531, 30
        %v533 = vsub.s32 %v529, %v532
        %vm534 = vcmp.lt.s32.totalorder %v533, 0
        %v535 = vsub.s32 0, %v533
        %v536 = vsel %vm534, %v535, %v533
        %v537 = vclz %v536
        %v538 = vsub.s32 %v537, 2
        %vm539 = vcmp.gt.s32.totalorder 0, %v538
        %v540 = vsel %vm539, 0, %v538
        %v541 = vsub.s32 32, %v540
        %v542 = vshll.u32 %v533, %v540
        %v543 = vshrl.u32 %v525, %v541
        %v544 = vor.u32 %v542, %v543
        %v545 = vsub.s32 4294967266, %v540
        %v546 = vadd.s32 %v545, 127
        %v547 = vshll.u32 %v546, 23
        %v548 = vor.u32 4788187, %v547
        %v549 = vand.u32 2147483647, %v548
        %v551 = vcvt.s32.f32 %v544
        %v552 = vmul.f32 %v551, %v549
        %v553 = vxor.u32 %v552, 2147483648
        %v554 = vsel %vm433, %v553, %v552
        %v555 = vsub.s32 4, %v531
        %v556 = vsel %vm433, %v555, %v531
        %v557 = vsel %vm432, %v261, %v554
        %v558 = vsel %vm432, 0, %v556
        %v559 = vmul.f32 %v557, %v557
        %v560 = vmul.f32 %v559, -0.001358992
        %v561 = vadd.f32 %v560, 0.041655596
        %v562 = vmul.f32 %v559, %v561
        %v563 = vadd.f32 %v562, -0.4999988
        %v564 = vmul.f32 %v559, %v563
        %v565 = vadd.f32 1.0, %v564
        %v566 = vmul.f32 %v557, %v557
        %v567 = vmul.f32 %v566, -0.00019511016
        %v568 = vadd.f32 %v567, 0.008332121
        %v569 = vmul.f32 %v566, %v568
        %v570 = vadd.f32 %v569, -0.16666654
        %v571 = vmul.f32 %v566, %v570
        %v572 = vadd.f32 %v571, 1.0
        %v573 = vmul.f32 %v572, %v557
        %vm574 = vweird.f32 %v261
        %v575 = vand.u32 %v558, 3
        %vm576 = vcmp.lt.s32.totalorder %v575, 2
        %vm577 = vcmp.eq.s32.totalorder %v575, 0
        %v578 = vxor.u32 %v573, 2147483648
        %v579 = vsel %vm577, %v565, %v578
        %vm580 = vcmp.eq.s32.totalorder %v575, 2
        %v581 = vxor.u32 %v565, 2147483648
        %v582 = vsel %vm580, %v581, %v573
        %v583 = vsel %vm576, %v579, %v582
        %v584 = vsel %vm574, nan, %v583
        %v585 = vand.u32 2147483647, %v262
        %vm586 = vcmp.le.f32.partialorder %v585, 0.7853982
        %vm587 = vcmp.lt.s32.totalorder %v262, 0
        %v588 = vand.u32 %v262, 2139095040
        %v589 = vshrl.u32 %v588, 23
        %v590 = vsub.s32 %v589, 127
        %v591 = vand.u32 2147483647, %v262
        %v592 = vand.u32 %v591, 8388607
        %v593 = vor.u32 %v592, 8388608
        %v594 = vsub.s32 0, %v593
        %v595 = vadd.s32 %v590, 1
        %vm596 = vcmp.gt.s32.totalorder %v595, 0
        %v597 = vsel %vm596, %v595, 0
        %v598 = vshrl.u32 %v597, 5
        %v599 = vand.u32 %v597, 31
        %v600 = vsub.s32 32, %v599
        %v601 = vshrl.u32 683565275, %v600
        %v602 = vshll.u32 683565275, %v599
        %v603 = vshrl.u32 2475754826, %v600
        %v604 = vor.u32 %v602, %v603
        %v605 = vshll.u32 2475754826, %v599
        %v606 = vshrl.u32 2131351028, %v600
        %v607 = vor.u32 %v605, %v606
        %v608 = vshll.u32 2131351028, %v599
        %v609 = vshrl.u32 2102212464, %v600
        %v610 = vor.u32 %v608, %v609
        %v611 = vshll.u32 2102212464, %v599
        %v612 = vshrl.u32 920167782, %v600
        %v613 = vor.u32 %v611, %v612
        %v614 = vshll.u32 920167782, %v599
        %v615 = vshrl.u32 1326507024, %v600
        %v616 = vor.u32 %v614, %v615
        %vm617 = vcmp.lt.s32.totalorder %v598, 1
        %vm618 = vcmp.lt.s32.totalorder %v598, 2
        %vm619 = vcmp.lt.s32.totalorder %v598, 3
        %vm620 = vcmp.lt.s32.totalorder %v598, 4
        %v621 = vsel %vm617, %v601, %v604
        %v622 = vsel %vm620, %v610, 2102212464
        %v623 = vsel %vm619, %v607, %v622
        %v624 = vsel %vm618, %v621, %v623
        %v625 = vsel %vm617, %v604, %v607
        %v626 = vsel %vm620, %v613, 920167782
        %v627 = vsel %vm619, %v610, %v626
        %v628 = vsel %vm618, %v625, %v627
        %v629 = vsel %vm617, %v607, %v610
        %v630 = vsel %vm620, %v616, 1326507024
        %v631 = vsel %vm619, %v613, %v630
        %v632 = vsel %vm618, %v629, %v631
        %v633 = vshll.u32 %v593, 8
        %v634 = vand.u32 %v633, 65535
        %v635 = vshrl.u32 %v633, 16
        %v636 = vand.u32 %v632, 65535
        %v637 = vshrl.u32 %v632, 16
        %v638 = vmul.u32 %v634, %v636
        %v639 = vmul.u32 %v634, %v637
        %v640 = vmul.u32 %v635, %v636
        %v641 = vmul.u32 %v635, %v637
        %v642 = vshll.u32 %v639, 16
        %v643 = vshrl.u32 %v639, 16
        %v644 = vshll.u32 %v640, 16
        %v645 = vshrl.u32 %v640, 16
        %vm646 = vc.u32 %v638, %v642
        %v647 = vsel %vm646, 1, 0
        %v648 = vadd.s32 %v638, %v642
        %v649 = vadd.s32 %v641, %v647
        %vm650 = vc.u32 %v648, %v644
        %v651 = vsel %vm650, 1, 0
        %v652 = vadd.s32 %v648, %v644
        %v653 = vadd.s32 %v649, %v651
        %v654 = vadd.s32 %v653, %v643
        %v655 = vadd.s32 %v654, %v645
        %v656 = vand.u32 %v633, 65535
        %v657 = vshrl.u32 %v633, 16
        %v658 = vand.u32 %v628, 65535
        %v659 = vshrl.u32 %v628, 16
        %v660 = vmul.u32 %v656, %v658
        %v661 = vmul.u32 %v656, %v659
        %v662 = vmul.u32 %v657, %v658
        %v663 = vmul.u32 %v657, %v659
        %v664 = vshll.u32 %v661, 16
        %v665 = vshrl.u32 %v661, 16
        %v666 = vshll.u32 %v662, 16
        %v667 = vshrl.u32 %v662, 16
        %vm668 = vc.u32 %v660, %v664
        %v669 = vsel %vm668, 1, 0
        %v670 = vadd.s32 %v660, %v664
        %v671 = vadd.s32 %v663, %v669
        %vm672 = vc.u32 %v670, %v666
        %v673 = vsel %vm672, 1, 0
        %v674 = vadd.s32 %v670, %v666
        %v675 = vadd.s32 %v671, %v673
        %v676 = vadd.s32 %v675, %v665
        %v677 = vadd.s32 %v676, %v667
        %v678 = vmul.u32 %v633, %v624
        %v679 = vadd.s32 %v655, %v674
        %vm680 = vc.u32 %v655, %v674
        %v681 = vadd.s32 %v677, 1
        %v682 = vsel %vm680, %v681, %v677
        %v683 = vadd.s32 %v678, %v682
        %v684 = vadd.s32 %v683, 536870912
        %v685 = vshrl.u32 %v684, 30
        %v686 = vshll.u32 %v685, 30
        %v687 = vsub.s32 %v683, %v686
        %vm688 = vcmp.lt.s32.totalorder %v687, 0
        %v689 = vsub.s32 0, %v687
        %v690 = vsel %vm688, %v689, %v687
        %v691 = vclz %v690
        %v692 = vsub.s32 %v691, 2
        %vm693 = vcmp.gt.s32.totalorder 0, %v692
        %v694 = vsel %vm693, 0, %v692
        %v695 = vsub.s32 32, %v694
        %v696 = vshll.u32 %v687, %v694
        %v697 = vshrl.u32 %v679, %v695
        %v698 = vor.u32 %v696, %v697
        %v699 = vsub.s32 4294967266, %v694
        %v700 = vadd.s32 %v699, 127
        %v701 = vshll.u32 %v700, 23
        %v702 = vor.u32 4788187, %v701
        %v703 = vand.u32 2147483647, %v702
        %v705 = vcvt.s32.f32 %v698
        %v706 = vmul.f32 %v705, %v703
        %v707 = vxor.u32 %v706, 2147483648
        %v708 = vsel %vm587, %v707, %v706
        %v709 = vsub.s32 4, %v685
        %v710 = vsel %vm587, %v709, %v685
        %v711 = vsel %vm586, %v262, %v708
        %v712 = vsel %vm586, 0, %v710
        %v713 = vmul.f32 %v711, %v711
        %v714 = vmul.f32 %v713, -0.001358992
        %v715 = vadd.f32 %v714, 0.041655596
        %v716 = vmul.f32 %v713, %v715
        %v717 = vadd.f32 %v716, -0.4999988
        %v718 = vmul.f32 %v713, %v717
        %v719 = vadd.f32 1.0, %v718
        %v720 = vmul.f32 %v711, %v711
        %v721 = vmul.f32 %v720, -0.00019511016
        %v722 = vadd.f32 %v721, 0.008332121
        %v723 = vmul.f32 %v720, %v722
        %v724 = vadd.f32 %v723, -0.16666654
        %v725 = vmul.f32 %v720, %v724
        %v726 = vadd.f32 %v725, 1.0
        %v727 = vmul.f32 %v726, %v711
        %vm728 = vweird.f32 %v262
        %v729 = vand.u32 %v712, 3
        %vm730 = vcmp.lt.s32.totalorder %v729, 2
        %vm731 = vcmp.eq.s32.totalorder %v729, 0
        %v732 = vxor.u32 %v727, 2147483648
        %v733 = vsel %vm731, %v719, %v732
        %vm734 = vcmp.eq.s32.totalorder %v729, 2
        %v735 = vxor.u32 %v719, 2147483648
        %v736 = vsel %vm734, %v735, %v727
        %v737 = vsel %vm730, %v733, %v736
        %v738 = vsel %vm728, nan, %v737
        %v739 = vand.u32 2147483647, %v263
        %vm740 = vcmp.le.f32.partialorder %v739, 0.7853982
        %vm741 = vcmp.lt.s32.totalorder %v263, 0
        %v742 = vand.u32 %v263, 2139095040
        %v743 = vshrl.u32 %v742, 23
        %v744 = vsub.s32 %v743, 127
        %v745 = vand.u32 2147483647, %v263
        %v746 = vand.u32 %v745, 8388607
        %v747 = vor.u32 %v746, 8388608
        %v748 = vsub.s32 0, %v747
        %v749 = vadd.s32 %v744, 1
        %vm750 = vcmp.gt.s32.totalorder %v749, 0
        %v751 = vsel %vm750, %v749, 0
        %v752 = vshrl.u32 %v751, 5
        %v753 = vand.u32 %v751, 31
        %v754 = vsub.s32 32, %v753
        %v755 = vshrl.u32 683565275, %v754
        %v756 = vshll.u32 683565275, %v753
        %v757 = vshrl.u32 2475754826, %v754
        %v758 = vor.u32 %v756, %v757
        %v759 = vshll.u32 2475754826, %v753
        %v760 = vshrl.u32 2131351028, %v754
        %v761 = vor.u32 %v759, %v760
        %v762 = vshll.u32 2131351028, %v753
        %v763 = vshrl.u32 2102212464, %v754
        %v764 = vor.u32 %v762, %v763
        %v765 = vshll.u32 2102212464, %v753
        %v766 = vshrl.u32 920167782, %v754
        %v767 = vor.u32 %v765, %v766
        %v768 = vshll.u32 920167782, %v753
        %v769 = vshrl.u32 1326507024, %v754
        %v770 = vor.u32 %v768, %v769
        %vm771 = vcmp.lt.s32.totalorder %v752, 1
        %vm772 = vcmp.lt.s32.totalorder %v752, 2
        %vm773 = vcmp.lt.s32.totalorder %v752, 3
        %vm774 = vcmp.lt.s32.totalorder %v752, 4
        %v775 = vsel %vm771, %v755, %v758
        %v776 = vsel %vm774, %v764, 2102212464
        %v777 = vsel %vm773, %v761, %v776
        %v778 = vsel %vm772, %v775, %v777
        %v779 = vsel %vm771, %v758, %v761
        %v780 = vsel %vm774, %v767, 920167782
        %v781 = vsel %vm773, %v764, %v780
        %v782 = vsel %vm772, %v779, %v781
        %v783 = vsel %vm771, %v761, %v764
        %v784 = vsel %vm774, %v770, 1326507024
        %v785 = vsel %vm773, %v767, %v784
        %v786 = vsel %vm772, %v783, %v785
        %v787 = vshll.u32 %v747, 8
        %v788 = vand.u32 %v787, 65535
        %v789 = vshrl.u32 %v787, 16
        %v790 = vand.u32 %v786, 65535
        %v791 = vshrl.u32 %v786, 16
        %v792 = vmul.u32 %v788, %v790
        %v793 = vmul.u32 %v788, %v791
        %v794 = vmul.u32 %v789, %v790
        %v795 = vmul.u32 %v789, %v791
        %v796 = vshll.u32 %v793, 16
        %v797 = vshrl.u32 %v793, 16
        %v798 = vshll.u32 %v794, 16
        %v799 = vshrl.u32 %v794, 16
        %vm800 = vc.u32 %v792, %v796
        %v801 = vsel %vm800, 1, 0
        %v802 = vadd.s32 %v792, %v796
        %v803 = vadd.s32 %v795, %v801
        %vm804 = vc.u32 %v802, %v798
        %v805 = vsel %vm804, 1, 0
        %v806 = vadd.s32 %v802, %v798
        %v807 = vadd.s32 %v803, %v805
        %v808 = vadd.s32 %v807, %v797
        %v809 = vadd.s32 %v808, %v799
        %v810 = vand.u32 %v787, 65535
        %v811 = vshrl.u32 %v787, 16
        %v812 = vand.u32 %v782, 65535
        %v813 = vshrl.u32 %v782, 16
        %v814 = vmul.u32 %v810, %v812
        %v815 = vmul.u32 %v810, %v813
        %v816 = vmul.u32 %v811, %v812
        %v817 = vmul.u32 %v811, %v813
        %v818 = vshll.u32 %v815, 16
        %v819 = vshrl.u32 %v815, 16
        %v820 = vshll.u32 %v816, 16
        %v821 = vshrl.u32 %v816, 16
        %vm822 = vc.u32 %v814, %v818
        %v823 = vsel %vm822, 1, 0
        %v824 = vadd.s32 %v814, %v818
        %v825 = vadd.s32 %v817, %v823
        %vm826 = vc.u32 %v824, %v820
        %v827 = vsel %vm826, 1, 0
        %v828 = vadd.s32 %v824, %v820
        %v829 = vadd.s32 %v825, %v827
        %v830 = vadd.s32 %v829, %v819
        %v831 = vadd.s32 %v830, %v821
        %v832 = vmul.u32 %v787, %v778
        %v833 = vadd.s32 %v809, %v828
        %vm834 = vc.u32 %v809, %v828
        %v835 = vadd.s32 %v831, 1
        %v836 = vsel %vm834, %v835, %v831
        %v837 = vadd.s32 %v832, %v836
        %v838 = vadd.s32 %v837, 536870912
        %v839 = vshrl.u32 %v838, 30
        %v840 = vshll.u32 %v839, 30
        %v841 = vsub.s32 %v837, %v840
        %vm842 = vcmp.lt.s32.totalorder %v841, 0
        %v843 = vsub.s32 0, %v841
        %v844 = vsel %vm842, %v843, %v841
        %v845 = vclz %v844
        %v846 = vsub.s32 %v845, 2
        %vm847 = vcmp.gt.s32.totalorder 0, %v846
        %v848 = vsel %vm847, 0, %v846
        %v849 = vsub.s32 32, %v848
        %v850 = vshll.u32 %v841, %v848
        %v851 = vshrl.u32 %v833, %v849
        %v852 = vor.u32 %v850, %v851
        %v853 = vsub.s32 4294967266, %v848
        %v854 = vadd.s32 %v853, 127
        %v855 = vshll.u32 %v854, 23
        %v856 = vor.u32 4788187, %v855
        %v857 = vand.u32 2147483647, %v856
        %v859 = vcvt.s32.f32 %v852
        %v860 = vmul.f32 %v859, %v857
        %v861 = vxor.u32 %v860, 2147483648
        %v862 = vsel %vm741, %v861, %v860
        %v863 = vsub.s32 4, %v839
        %v864 = vsel %vm741, %v863, %v839
        %v865 = vsel %vm740, %v263, %v862
        %v866 = vsel %vm740, 0, %v864
        %v867 = vmul.f32 %v865, %v865
        %v868 = vmul.f32 %v867, -0.001358992
        %v869 = vadd.f32 %v868, 0.041655596
        %v870 = vmul.f32 %v867, %v869
        %v871 = vadd.f32 %v870, -0.4999988
        %v872 = vmul.f32 %v867, %v871
        %v873 = vadd.f32 1.0, %v872
        %v874 = vmul.f32 %v865, %v865
        %v875 = vmul.f32 %v874, -0.00019511016
        %v876 = vadd.f32 %v875, 0.008332121
        %v877 = vmul.f32 %v874, %v876
        %v878 = vadd.f32 %v877, -0.16666654
        %v879 = vmul.f32 %v874, %v878
        %v880 = vadd.f32 %v879, 1.0
        %v881 = vmul.f32 %v880, %v865
        %vm882 = vweird.f32 %v263
        %v883 = vand.u32 %v866, 3
        %vm884 = vcmp.lt.s32.totalorder %v883, 2
        %vm885 = vcmp.eq.s32.totalorder %v883, 0
        %v886 = vxor.u32 %v881, 2147483648
        %v887 = vsel %vm885, %v873, %v886
        %vm888 = vcmp.eq.s32.totalorder %v883, 2
        %v889 = vxor.u32 %v873, 2147483648
        %v890 = vsel %vm888, %v889, %v881
        %v891 = vsel %vm884, %v887, %v890
        %v892 = vsel %vm882, nan, %v891
        %v893 = vand.u32 2147483647, %v264
        %vm894 = vcmp.le.f32.partialorder %v893, 0.7853982
        %vm895 = vcmp.lt.s32.totalorder %v264, 0
        %v896 = vand.u32 %v264, 2139095040
        %v897 = vshrl.u32 %v896, 23
        %v898 = vsub.s32 %v897, 127
        %v899 = vand.u32 2147483647, %v264
        %v900 = vand.u32 %v899, 8388607
        %v901 = vor.u32 %v900, 8388608
        %v902 = vsub.s32 0, %v901
        %v903 = vadd.s32 %v898, 1
        %vm904 = vcmp.gt.s32.totalorder %v903, 0
        %v905 = vsel %vm904, %v903, 0
        %v906 = vshrl.u32 %v905, 5
        %v907 = vand.u32 %v905, 31
        %v908 = vsub.s32 32, %v907
        %v909 = vshrl.u32 683565275, %v908
        %v910 = vshll.u32 683565275, %v907
        %v911 = vshrl.u32 2475754826, %v908
        %v912 = vor.u32 %v910, %v911
        %v913 = vshll.u32 2475754826, %v907
        %v914 = vshrl.u32 2131351028, %v908
        %v915 = vor.u32 %v913, %v914
        %v916 = vshll.u32 2131351028, %v907
        %v917 = vshrl.u32 2102212464, %v908
        %v918 = vor.u32 %v916, %v917
        %v919 = vshll.u32 2102212464, %v907
        %v920 = vshrl.u32 920167782, %v908
        %v921 = vor.u32 %v919, %v920
        %v922 = vshll.u32 920167782, %v907
        %v923 = vshrl.u32 1326507024, %v908
        %v924 = vor.u32 %v922, %v923
        %vm925 = vcmp.lt.s32.totalorder %v906, 1
        %vm926 = vcmp.lt.s32.totalorder %v906, 2
        %vm927 = vcmp.lt.s32.totalorder %v906, 3
        %vm928 = vcmp.lt.s32.totalorder %v906, 4
        %v929 = vsel %vm925, %v909, %v912
        %v930 = vsel %vm928, %v918, 2102212464
        %v931 = vsel %vm927, %v915, %v930
        %v932 = vsel %vm926, %v929, %v931
        %v933 = vsel %vm925, %v912, %v915
        %v934 = vsel %vm928, %v921, 920167782
        %v935 = vsel %vm927, %v918, %v934
        %v936 = vsel %vm926, %v933, %v935
        %v937 = vsel %vm925, %v915, %v918
        %v938 = vsel %vm928, %v924, 1326507024
        %v939 = vsel %vm927, %v921, %v938
        %v940 = vsel %vm926, %v937, %v939
        %v941 = vshll.u32 %v901, 8
        %v942 = vand.u32 %v941, 65535
        %v943 = vshrl.u32 %v941, 16
        %v944 = vand.u32 %v940, 65535
        %v945 = vshrl.u32 %v940, 16
        %v946 = vmul.u32 %v942, %v944
        %v947 = vmul.u32 %v942, %v945
        %v948 = vmul.u32 %v943, %v944
        %v949 = vmul.u32 %v943, %v945
        %v950 = vshll.u32 %v947, 16
        %v951 = vshrl.u32 %v947, 16
        %v952 = vshll.u32 %v948, 16
        %v953 = vshrl.u32 %v948, 16
        %vm954 = vc.u32 %v946, %v950
        %v955 = vsel %vm954, 1, 0
        %v956 = vadd.s32 %v946, %v950
        %v957 = vadd.s32 %v949, %v955
        %vm958 = vc.u32 %v956, %v952
        %v959 = vsel %vm958, 1, 0
        %v960 = vadd.s32 %v956, %v952
        %v961 = vadd.s32 %v957, %v959
        %v962 = vadd.s32 %v961, %v951
        %v963 = vadd.s32 %v962, %v953
        %v964 = vand.u32 %v941, 65535
        %v965 = vshrl.u32 %v941, 16
        %v966 = vand.u32 %v936, 65535
        %v967 = vshrl.u32 %v936, 16
        %v968 = vmul.u32 %v964, %v966
        %v969 = vmul.u32 %v964, %v967
        %v970 = vmul.u32 %v965, %v966
        %v971 = vmul.u32 %v965, %v967
        %v972 = vshll.u32 %v969, 16
        %v973 = vshrl.u32 %v969, 16
        %v974 = vshll.u32 %v970, 16
        %v975 = vshrl.u32 %v970, 16
        %vm976 = vc.u32 %v968, %v972
        %v977 = vsel %vm976, 1, 0
        %v978 = vadd.s32 %v968, %v972
        %v979 = vadd.s32 %v971, %v977
        %vm980 = vc.u32 %v978, %v974
        %v981 = vsel %vm980, 1, 0
        %v982 = vadd.s32 %v978, %v974
        %v983 = vadd.s32 %v979, %v981
        %v984 = vadd.s32 %v983, %v973
        %v985 = vadd.s32 %v984, %v975
        %v986 = vmul.u32 %v941, %v932
        %v987 = vadd.s32 %v963, %v982
        %vm988 = vc.u32 %v963, %v982
        %v989 = vadd.s32 %v985, 1
        %v990 = vsel %vm988, %v989, %v985
        %v991 = vadd.s32 %v986, %v990
        %v992 = vadd.s32 %v991, 536870912
        %v993 = vshrl.u32 %v992, 30
        %v994 = vshll.u32 %v993, 30
        %v995 = vsub.s32 %v991, %v994
        %vm996 = vcmp.lt.s32.totalorder %v995, 0
        %v997 = vsub.s32 0, %v995
        %v998 = vsel %vm996, %v997, %v995
        %v999 = vclz %v998
        %v1000 = vsub.s32 %v999, 2
        %vm1001 = vcmp.gt.s32.totalorder 0, %v1000
        %v1002 = vsel %vm1001, 0, %v1000
        %v1003 = vsub.s32 32, %v1002
        %v1004 = vshll.u32 %v995, %v1002
        %v1005 = vshrl.u32 %v987, %v1003
        %v1006 = vor.u32 %v1004, %v1005
        %v1007 = vsub.s32 4294967266, %v1002
        %v1008 = vadd.s32 %v1007, 127
        %v1009 = vshll.u32 %v1008, 23
        %v1010 = vor.u32 4788187, %v1009
        %v1011 = vand.u32 2147483647, %v1010
        %v1013 = vcvt.s32.f32 %v1006
        %v1014 = vmul.f32 %v1013, %v1011
        %v1015 = vxor.u32 %v1014, 2147483648
        %v1016 = vsel %vm895, %v1015, %v1014
        %v1017 = vsub.s32 4, %v993
        %v1018 = vsel %vm895, %v1017, %v993
        %v1019 = vsel %vm894, %v264, %v1016
        %v1020 = vsel %vm894, 0, %v1018
        %v1021 = vmul.f32 %v1019, %v1019
        %v1022 = vmul.f32 %v1021, -0.001358992
        %v1023 = vadd.f32 %v1022, 0.041655596
        %v1024 = vmul.f32 %v1021, %v1023
        %v1025 = vadd.f32 %v1024, -0.4999988
        %v1026 = vmul.f32 %v1021, %v1025
        %v1027 = vadd.f32 1.0, %v1026
        %v1028 = vmul.f32 %v1019, %v1019
        %v1029 = vmul.f32 %v1028, -0.00019511016
        %v1030 = vadd.f32 %v1029, 0.008332121
        %v1031 = vmul.f32 %v1028, %v1030
        %v1032 = vadd.f32 %v1031, -0.16666654
        %v1033 = vmul.f32 %v1028, %v1032
        %v1034 = vadd.f32 %v1033, 1.0
        %v1035 = vmul.f32 %v1034, %v1019
        %vm1036 = vweird.f32 %v264
        %v1037 = vand.u32 %v1020, 3
        %vm1038 = vcmp.lt.s32.totalorder %v1037, 2
        %vm1039 = vcmp.eq.s32.totalorder %v1037, 0
        %v1040 = vxor.u32 %v1035, 2147483648
        %v1041 = vsel %vm1039, %v1027, %v1040
        %vm1042 = vcmp.eq.s32.totalorder %v1037, 2
        %v1043 = vxor.u32 %v1027, 2147483648
        %v1044 = vsel %vm1042, %v1043, %v1035
        %v1045 = vsel %vm1038, %v1041, %v1044
        %v1046 = vsel %vm1036, nan, %v1045
        %v1047 = vand.u32 2147483647, %v265
        %vm1048 = vcmp.le.f32.partialorder %v1047, 0.7853982
        %vm1049 = vcmp.lt.s32.totalorder %v265, 0
        %v1050 = vand.u32 %v265, 2139095040
        %v1051 = vshrl.u32 %v1050, 23
        %v1052 = vsub.s32 %v1051, 127
        %v1053 = vand.u32 2147483647, %v265
        %v1054 = vand.u32 %v1053, 8388607
        %v1055 = vor.u32 %v1054, 8388608
        %v1056 = vsub.s32 0, %v1055
        %v1057 = vadd.s32 %v1052, 1
        %vm1058 = vcmp.gt.s32.totalorder %v1057, 0
        %v1059 = vsel %vm1058, %v1057, 0
        %v1060 = vshrl.u32 %v1059, 5
        %v1061 = vand.u32 %v1059, 31
        %v1062 = vsub.s32 32, %v1061
        %v1063 = vshrl.u32 683565275, %v1062
        %v1064 = vshll.u32 683565275, %v1061
        %v1065 = vshrl.u32 2475754826, %v1062
        %v1066 = vor.u32 %v1064, %v1065
        %v1067 = vshll.u32 2475754826, %v1061
        %v1068 = vshrl.u32 2131351028, %v1062
        %v1069 = vor.u32 %v1067, %v1068
        %v1070 = vshll.u32 2131351028, %v1061
        %v1071 = vshrl.u32 2102212464, %v1062
        %v1072 = vor.u32 %v1070, %v1071
        %v1073 = vshll.u32 2102212464, %v1061
        %v1074 = vshrl.u32 920167782, %v1062
        %v1075 = vor.u32 %v1073, %v1074
        %v1076 = vshll.u32 920167782, %v1061
        %v1077 = vshrl.u32 1326507024, %v1062
        %v1078 = vor.u32 %v1076, %v1077
        %vm1079 = vcmp.lt.s32.totalorder %v1060, 1
        %vm1080 = vcmp.lt.s32.totalorder %v1060, 2
        %vm1081 = vcmp.lt.s32.totalorder %v1060, 3
        %vm1082 = vcmp.lt.s32.totalorder %v1060, 4
        %v1083 = vsel %vm1079, %v1063, %v1066
        %v1084 = vsel %vm1082, %v1072, 2102212464
        %v1085 = vsel %vm1081, %v1069, %v1084
        %v1086 = vsel %vm1080, %v1083, %v1085
        %v1087 = vsel %vm1079, %v1066, %v1069
        %v1088 = vsel %vm1082, %v1075, 920167782
        %v1089 = vsel %vm1081, %v1072, %v1088
        %v1090 = vsel %vm1080, %v1087, %v1089
        %v1091 = vsel %vm1079, %v1069, %v1072
        %v1092 = vsel %vm1082, %v1078, 1326507024
        %v1093 = vsel %vm1081, %v1075, %v1092
        %v1094 = vsel %vm1080, %v1091, %v1093
        %v1095 = vshll.u32 %v1055, 8
        %v1096 = vand.u32 %v1095, 65535
        %v1097 = vshrl.u32 %v1095, 16
        %v1098 = vand.u32 %v1094, 65535
        %v1099 = vshrl.u32 %v1094, 16
        %v1100 = vmul.u32 %v1096, %v1098
        %v1101 = vmul.u32 %v1096, %v1099
        %v1102 = vmul.u32 %v1097, %v1098
        %v1103 = vmul.u32 %v1097, %v1099
        %v1104 = vshll.u32 %v1101, 16
        %v1105 = vshrl.u32 %v1101, 16
        %v1106 = vshll.u32 %v1102, 16
        %v1107 = vshrl.u32 %v1102, 16
        %vm1108 = vc.u32 %v1100, %v1104
        %v1109 = vsel %vm1108, 1, 0
        %v1110 = vadd.s32 %v1100, %v1104
        %v1111 = vadd.s32 %v1103, %v1109
        %vm1112 = vc.u32 %v1110, %v1106
        %v1113 = vsel %vm1112, 1, 0
        %v1114 = vadd.s32 %v1110, %v1106
        %v1115 = vadd.s32 %v1111, %v1113
        %v1116 = vadd.s32 %v1115, %v1105
        %v1117 = vadd.s32 %v1116, %v1107
        %v1118 = vand.u32 %v1095, 65535
        %v1119 = vshrl.u32 %v1095, 16
        %v1120 = vand.u32 %v1090, 65535
        %v1121 = vshrl.u32 %v1090, 16
        %v1122 = vmul.u32 %v1118, %v1120
        %v1123 = vmul.u32 %v1118, %v1121
        %v1124 = vmul.u32 %v1119, %v1120
        %v1125 = vmul.u32 %v1119, %v1121
        %v1126 = vshll.u32 %v1123, 16
        %v1127 = vshrl.u32 %v1123, 16
        %v1128 = vshll.u32 %v1124, 16
        %v1129 = vshrl.u32 %v1124, 16
        %vm1130 = vc.u32 %v1122, %v1126
        %v1131 = vsel %vm1130, 1, 0
        %v1132 = vadd.s32 %v1122, %v1126
        %v1133 = vadd.s32 %v1125, %v1131
        %vm1134 = vc.u32 %v1132, %v1128
        %v1135 = vsel %vm1134, 1, 0
        %v1136 = vadd.s32 %v1132, %v1128
        %v1137 = vadd.s32 %v1133, %v1135
        %v1138 = vadd.s32 %v1137, %v1127
        %v1139 = vadd.s32 %v1138, %v1129
        %v1140 = vmul.u32 %v1095, %v1086
        %v1141 = vadd.s32 %v1117, %v1136
        %vm1142 = vc.u32 %v1117, %v1136
        %v1143 = vadd.s32 %v1139, 1
        %v1144 = vsel %vm1142, %v1143, %v1139
        %v1145 = vadd.s32 %v1140, %v1144
        %v1146 = vadd.s32 %v1145, 536870912
        %v1147 = vshrl.u32 %v1146, 30
        %v1148 = vshll.u32 %v1147, 30
        %v1149 = vsub.s32 %v1145, %v1148
        %vm1150 = vcmp.lt.s32.totalorder %v1149, 0
        %v1151 = vsub.s32 0, %v1149
        %v1152 = vsel %vm1150, %v1151, %v1149
        %v1153 = vclz %v1152
        %v1154 = vsub.s32 %v1153, 2
        %vm1155 = vcmp.gt.s32.totalorder 0, %v1154
        %v1156 = vsel %vm1155, 0, %v1154
        %v1157 = vsub.s32 32, %v1156
        %v1158 = vshll.u32 %v1149, %v1156
        %v1159 = vshrl.u32 %v1141, %v1157
        %v1160 = vor.u32 %v1158, %v1159
        %v1161 = vsub.s32 4294967266, %v1156
        %v1162 = vadd.s32 %v1161, 127
        %v1163 = vshll.u32 %v1162, 23
        %v1164 = vor.u32 4788187, %v1163
        %v1165 = vand.u32 2147483647, %v1164
        %v1167 = vcvt.s32.f32 %v1160
        %v1168 = vmul.f32 %v1167, %v1165
        %v1169 = vxor.u32 %v1168, 2147483648
        %v1170 = vsel %vm1049, %v1169, %v1168
        %v1171 = vsub.s32 4, %v1147
        %v1172 = vsel %vm1049, %v1171, %v1147
        %v1173 = vsel %vm1048, %v265, %v1170
        %v1174 = vsel %vm1048, 0, %v1172
        %v1175 = vmul.f32 %v1173, %v1173
        %v1176 = vmul.f32 %v1175, -0.001358992
        %v1177 = vadd.f32 %v1176, 0.041655596
        %v1178 = vmul.f32 %v1175, %v1177
        %v1179 = vadd.f32 %v1178, -0.4999988
        %v1180 = vmul.f32 %v1175, %v1179
        %v1181 = vadd.f32 1.0, %v1180
        %v1182 = vmul.f32 %v1173, %v1173
        %v1183 = vmul.f32 %v1182, -0.00019511016
        %v1184 = vadd.f32 %v1183, 0.008332121
        %v1185 = vmul.f32 %v1182, %v1184
        %v1186 = vadd.f32 %v1185, -0.16666654
        %v1187 = vmul.f32 %v1182, %v1186
        %v1188 = vadd.f32 %v1187, 1.0
        %v1189 = vmul.f32 %v1188, %v1173
        %vm1190 = vweird.f32 %v265
        %v1191 = vand.u32 %v1174, 3
        %vm1192 = vcmp.lt.s32.totalorder %v1191, 2
        %vm1193 = vcmp.eq.s32.totalorder %v1191, 0
        %v1194 = vxor.u32 %v1189, 2147483648
        %v1195 = vsel %vm1193, %v1181, %v1194
        %vm1196 = vcmp.eq.s32.totalorder %v1191, 2
        %v1197 = vxor.u32 %v1181, 2147483648
        %v1198 = vsel %vm1196, %v1197, %v1189
        %v1199 = vsel %vm1192, %v1195, %v1198
        %v1200 = vsel %vm1190, nan, %v1199
        %v1201 = vand.u32 2147483647, %v266
        %vm1202 = vcmp.le.f32.partialorder %v1201, 0.7853982
        %vm1203 = vcmp.lt.s32.totalorder %v266, 0
        %v1204 = vand.u32 %v266, 2139095040
        %v1205 = vshrl.u32 %v1204, 23
        %v1206 = vsub.s32 %v1205, 127
        %v1207 = vand.u32 2147483647, %v266
        %v1208 = vand.u32 %v1207, 8388607
        %v1209 = vor.u32 %v1208, 8388608
        %v1210 = vsub.s32 0, %v1209
        %v1211 = vadd.s32 %v1206, 1
        %vm1212 = vcmp.gt.s32.totalorder %v1211, 0
        %v1213 = vsel %vm1212, %v1211, 0
        %v1214 = vshrl.u32 %v1213, 5
        %v1215 = vand.u32 %v1213, 31
        %v1216 = vsub.s32 32, %v1215
        %v1217 = vshrl.u32 683565275, %v1216
        %v1218 = vshll.u32 683565275, %v1215
        %v1219 = vshrl.u32 2475754826, %v1216
        %v1220 = vor.u32 %v1218, %v1219
        %v1221 = vshll.u32 2475754826, %v1215
        %v1222 = vshrl.u32 2131351028, %v1216
        %v1223 = vor.u32 %v1221, %v1222
        %v1224 = vshll.u32 2131351028, %v1215
        %v1225 = vshrl.u32 2102212464, %v1216
        %v1226 = vor.u32 %v1224, %v1225
        %v1227 = vshll.u32 2102212464, %v1215
        %v1228 = vshrl.u32 920167782, %v1216
        %v1229 = vor.u32 %v1227, %v1228
        %v1230 = vshll.u32 920167782, %v1215
        %v1231 = vshrl.u32 1326507024, %v1216
        %v1232 = vor.u32 %v1230, %v1231
        %vm1233 = vcmp.lt.s32.totalorder %v1214, 1
        %vm1234 = vcmp.lt.s32.totalorder %v1214, 2
        %vm1235 = vcmp.lt.s32.totalorder %v1214, 3
        %vm1236 = vcmp.lt.s32.totalorder %v1214, 4
        %v1237 = vsel %vm1233, %v1217, %v1220
        %v1238 = vsel %vm1236, %v1226, 2102212464
        %v1239 = vsel %vm1235, %v1223, %v1238
        %v1240 = vsel %vm1234, %v1237, %v1239
        %v1241 = vsel %vm1233, %v1220, %v1223
        %v1242 = vsel %vm1236, %v1229, 920167782
        %v1243 = vsel %vm1235, %v1226, %v1242
        %v1244 = vsel %vm1234, %v1241, %v1243
        %v1245 = vsel %vm1233, %v1223, %v1226
        %v1246 = vsel %vm1236, %v1232, 1326507024
        %v1247 = vsel %vm1235, %v1229, %v1246
        %v1248 = vsel %vm1234, %v1245, %v1247
        %v1249 = vshll.u32 %v1209, 8
        %v1250 = vand.u32 %v1249, 65535
        %v1251 = vshrl.u32 %v1249, 16
        %v1252 = vand.u32 %v1248, 65535
        %v1253 = vshrl.u32 %v1248, 16
        %v1254 = vmul.u32 %v1250, %v1252
        %v1255 = vmul.u32 %v1250, %v1253
        %v1256 = vmul.u32 %v1251, %v1252
        %v1257 = vmul.u32 %v1251, %v1253
        %v1258 = vshll.u32 %v1255, 16
        %v1259 = vshrl.u32 %v1255, 16
        %v1260 = vshll.u32 %v1256, 16
        %v1261 = vshrl.u32 %v1256, 16
        %vm1262 = vc.u32 %v1254, %v1258
        %v1263 = vsel %vm1262, 1, 0
        %v1264 = vadd.s32 %v1254, %v1258
        %v1265 = vadd.s32 %v1257, %v1263
        %vm1266 = vc.u32 %v1264, %v1260
        %v1267 = vsel %vm1266, 1, 0
        %v1268 = vadd.s32 %v1264, %v1260
        %v1269 = vadd.s32 %v1265, %v1267
        %v1270 = vadd.s32 %v1269, %v1259
        %v1271 = vadd.s32 %v1270, %v1261
        %v1272 = vand.u32 %v1249, 65535
        %v1273 = vshrl.u32 %v1249, 16
        %v1274 = vand.u32 %v1244, 65535
        %v1275 = vshrl.u32 %v1244, 16
        %v1276 = vmul.u32 %v1272, %v1274
        %v1277 = vmul.u32 %v1272, %v1275
        %v1278 = vmul.u32 %v1273, %v1274
        %v1279 = vmul.u32 %v1273, %v1275
        %v1280 = vshll.u32 %v1277, 16
        %v1281 = vshrl.u32 %v1277, 16
        %v1282 = vshll.u32 %v1278, 16
        %v1283 = vshrl.u32 %v1278, 16
        %vm1284 = vc.u32 %v1276, %v1280
        %v1285 = vsel %vm1284, 1, 0
        %v1286 = vadd.s32 %v1276, %v1280
        %v1287 = vadd.s32 %v1279, %v1285
        %vm1288 = vc.u32 %v1286, %v1282
        %v1289 = vsel %vm1288, 1, 0
        %v1290 = vadd.s32 %v1286, %v1282
        %v1291 = vadd.s32 %v1287, %v1289
        %v1292 = vadd.s32 %v1291, %v1281
        %v1293 = vadd.s32 %v1292, %v1283
        %v1294 = vmul.u32 %v1249, %v1240
        %v1295 = vadd.s32 %v1271, %v1290
        %vm1296 = vc.u32 %v1271, %v1290
        %v1297 = vadd.s32 %v1293, 1
        %v1298 = vsel %vm1296, %v1297, %v1293
        %v1299 = vadd.s32 %v1294, %v1298
        %v1300 = vadd.s32 %v1299, 536870912
        %v1301 = vshrl.u32 %v1300, 30
        %v1302 = vshll.u32 %v1301, 30
        %v1303 = vsub.s32 %v1299, %v1302
        %vm1304 = vcmp.lt.s32.totalorder %v1303, 0
        %v1305 = vsub.s32 0, %v1303
        %v1306 = vsel %vm1304, %v1305, %v1303
        %v1307 = vclz %v1306
        %v1308 = vsub.s32 %v1307, 2
        %vm1309 = vcmp.gt.s32.totalorder 0, %v1308
        %v1310 = vsel %vm1309, 0, %v1308
        %v1311 = vsub.s32 32, %v1310
        %v1312 = vshll.u32 %v1303, %v1310
        %v1313 = vshrl.u32 %v1295, %v1311
        %v1314 = vor.u32 %v1312, %v1313
        %v1315 = vsub.s32 4294967266, %v1310
        %v1316 = vadd.s32 %v1315, 127
        %v1317 = vshll.u32 %v1316, 23
        %v1318 = vor.u32 4788187, %v1317
        %v1319 = vand.u32 2147483647, %v1318
        %v1321 = vcvt.s32.f32 %v1314
        %v1322 = vmul.f32 %v1321, %v1319
        %v1323 = vxor.u32 %v1322, 2147483648
        %v1324 = vsel %vm1203, %v1323, %v1322
        %v1325 = vsub.s32 4, %v1301
        %v1326 = vsel %vm1203, %v1325, %v1301
        %v1327 = vsel %vm1202, %v266, %v1324
        %v1328 = vsel %vm1202, 0, %v1326
        %v1329 = vmul.f32 %v1327, %v1327
        %v1330 = vmul.f32 %v1329, -0.001358992
        %v1331 = vadd.f32 %v1330, 0.041655596
        %v1332 = vmul.f32 %v1329, %v1331
        %v1333 = vadd.f32 %v1332, -0.4999988
        %v1334 = vmul.f32 %v1329, %v1333
        %v1335 = vadd.f32 1.0, %v1334
        %v1336 = vmul.f32 %v1327, %v1327
        %v1337 = vmul.f32 %v1336, -0.00019511016
        %v1338 = vadd.f32 %v1337, 0.008332121
        %v1339 = vmul.f32 %v1336, %v1338
        %v1340 = vadd.f32 %v1339, -0.16666654
        %v1341 = vmul.f32 %v1336, %v1340
        %v1342 = vadd.f32 %v1341, 1.0
        %v1343 = vmul.f32 %v1342, %v1327
        %vm1344 = vweird.f32 %v266
        %v1345 = vand.u32 %v1328, 3
        %vm1346 = vcmp.lt.s32.totalorder %v1345, 2
        %vm1347 = vcmp.eq.s32.totalorder %v1345, 0
        %v1348 = vxor.u32 %v1343, 2147483648
        %v1349 = vsel %vm1347, %v1335, %v1348
        %vm1350 = vcmp.eq.s32.totalorder %v1345, 2
        %v1351 = vxor.u32 %v1335, 2147483648
        %v1352 = vsel %vm1350, %v1351, %v1343
        %v1353 = vsel %vm1346, %v1349, %v1352
        %v1354 = vsel %vm1344, nan, %v1353
        %v1355 = vand.u32 2147483647, %v267
        %vm1356 = vcmp.le.f32.partialorder %v1355, 0.7853982
        %vm1357 = vcmp.lt.s32.totalorder %v267, 0
        %v1358 = vand.u32 %v267, 2139095040
        %v1359 = vshrl.u32 %v1358, 23
        %v1360 = vsub.s32 %v1359, 127
        %v1361 = vand.u32 2147483647, %v267
        %v1362 = vand.u32 %v1361, 8388607
        %v1363 = vor.u32 %v1362, 8388608
        %v1364 = vsub.s32 0, %v1363
        %v1365 = vadd.s32 %v1360, 1
        %vm1366 = vcmp.gt.s32.totalorder %v1365, 0
        %v1367 = vsel %vm1366, %v1365, 0
        %v1368 = vshrl.u32 %v1367, 5
        %v1369 = vand.u32 %v1367, 31
        %v1370 = vsub.s32 32, %v1369
        %v1371 = vshrl.u32 683565275, %v1370
        %v1372 = vshll.u32 683565275, %v1369
        %v1373 = vshrl.u32 2475754826, %v1370
        %v1374 = vor.u32 %v1372, %v1373
        %v1375 = vshll.u32 2475754826, %v1369
        %v1376 = vshrl.u32 2131351028, %v1370
        %v1377 = vor.u32 %v1375, %v1376
        %v1378 = vshll.u32 2131351028, %v1369
        %v1379 = vshrl.u32 2102212464, %v1370
        %v1380 = vor.u32 %v1378, %v1379
        %v1381 = vshll.u32 2102212464, %v1369
        %v1382 = vshrl.u32 920167782, %v1370
        %v1383 = vor.u32 %v1381, %v1382
        %v1384 = vshll.u32 920167782, %v1369
        %v1385 = vshrl.u32 1326507024, %v1370
        %v1386 = vor.u32 %v1384, %v1385
        %vm1387 = vcmp.lt.s32.totalorder %v1368, 1
        %vm1388 = vcmp.lt.s32.totalorder %v1368, 2
        %vm1389 = vcmp.lt.s32.totalorder %v1368, 3
        %vm1390 = vcmp.lt.s32.totalorder %v1368, 4
        %v1391 = vsel %vm1387, %v1371, %v1374
        %v1392 = vsel %vm1390, %v1380, 2102212464
        %v1393 = vsel %vm1389, %v1377, %v1392
        %v1394 = vsel %vm1388, %v1391, %v1393
        %v1395 = vsel %vm1387, %v1374, %v1377
        %v1396 = vsel %vm1390, %v1383, 920167782
        %v1397 = vsel %vm1389, %v1380, %v1396
        %v1398 = vsel %vm1388, %v1395, %v1397
        %v1399 = vsel %vm1387, %v1377, %v1380
        %v1400 = vsel %vm1390, %v1386, 1326507024
        %v1401 = vsel %vm1389, %v1383, %v1400
        %v1402 = vsel %vm1388, %v1399, %v1401
        %v1403 = vshll.u32 %v1363, 8
        %v1404 = vand.u32 %v1403, 65535
        %v1405 = vshrl.u32 %v1403, 16
        %v1406 = vand.u32 %v1402, 65535
        %v1407 = vshrl.u32 %v1402, 16
        %v1408 = vmul.u32 %v1404, %v1406
        %v1409 = vmul.u32 %v1404, %v1407
        %v1410 = vmul.u32 %v1405, %v1406
        %v1411 = vmul.u32 %v1405, %v1407
        %v1412 = vshll.u32 %v1409, 16
        %v1413 = vshrl.u32 %v1409, 16
        %v1414 = vshll.u32 %v1410, 16
        %v1415 = vshrl.u32 %v1410, 16
        %vm1416 = vc.u32 %v1408, %v1412
        %v1417 = vsel %vm1416, 1, 0
        %v1418 = vadd.s32 %v1408, %v1412
        %v1419 = vadd.s32 %v1411, %v1417
        %vm1420 = vc.u32 %v1418, %v1414
        %v1421 = vsel %vm1420, 1, 0
        %v1422 = vadd.s32 %v1418, %v1414
        %v1423 = vadd.s32 %v1419, %v1421
        %v1424 = vadd.s32 %v1423, %v1413
        %v1425 = vadd.s32 %v1424, %v1415
        %v1426 = vand.u32 %v1403, 65535
        %v1427 = vshrl.u32 %v1403, 16
        %v1428 = vand.u32 %v1398, 65535
        %v1429 = vshrl.u32 %v1398, 16
        %v1430 = vmul.u32 %v1426, %v1428
        %v1431 = vmul.u32 %v1426, %v1429
        %v1432 = vmul.u32 %v1427, %v1428
        %v1433 = vmul.u32 %v1427, %v1429
        %v1434 = vshll.u32 %v1431, 16
        %v1435 = vshrl.u32 %v1431, 16
        %v1436 = vshll.u32 %v1432, 16
        %v1437 = vshrl.u32 %v1432, 16
        %vm1438 = vc.u32 %v1430, %v1434
        %v1439 = vsel %vm1438, 1, 0
        %v1440 = vadd.s32 %v1430, %v1434
        %v1441 = vadd.s32 %v1433, %v1439
        %vm1442 = vc.u32 %v1440, %v1436
        %v1443 = vsel %vm1442, 1, 0
        %v1444 = vadd.s32 %v1440, %v1436
        %v1445 = vadd.s32 %v1441, %v1443
        %v1446 = vadd.s32 %v1445, %v1435
        %v1447 = vadd.s32 %v1446, %v1437
        %v1448 = vmul.u32 %v1403, %v1394
        %v1449 = vadd.s32 %v1425, %v1444
        %vm1450 = vc.u32 %v1425, %v1444
        %v1451 = vadd.s32 %v1447, 1
        %v1452 = vsel %vm1450, %v1451, %v1447
        %v1453 = vadd.s32 %v1448, %v1452
        %v1454 = vadd.s32 %v1453, 536870912
        %v1455 = vshrl.u32 %v1454, 30
        %v1456 = vshll.u32 %v1455, 30
        %v1457 = vsub.s32 %v1453, %v1456
        %vm1458 = vcmp.lt.s32.totalorder %v1457, 0
        %v1459 = vsub.s32 0, %v1457
        %v1460 = vsel %vm1458, %v1459, %v1457
        %v1461 = vclz %v1460
        %v1462 = vsub.s32 %v1461, 2
        %vm1463 = vcmp.gt.s32.totalorder 0, %v1462
        %v1464 = vsel %vm1463, 0, %v1462
        %v1465 = vsub.s32 32, %v1464
        %v1466 = vshll.u32 %v1457, %v1464
        %v1467 = vshrl.u32 %v1449, %v1465
        %v1468 = vor.u32 %v1466, %v1467
        %v1469 = vsub.s32 4294967266, %v1464
        %v1470 = vadd.s32 %v1469, 127
        %v1471 = vshll.u32 %v1470, 23
        %v1472 = vor.u32 4788187, %v1471
        %v1473 = vand.u32 2147483647, %v1472
        %v1475 = vcvt.s32.f32 %v1468
        %v1476 = vmul.f32 %v1475, %v1473
        %v1477 = vxor.u32 %v1476, 2147483648
        %v1478 = vsel %vm1357, %v1477, %v1476
        %v1479 = vsub.s32 4, %v1455
        %v1480 = vsel %vm1357, %v1479, %v1455
        %v1481 = vsel %vm1356, %v267, %v1478
        %v1482 = vsel %vm1356, 0, %v1480
        %v1483 = vmul.f32 %v1481, %v1481
        %v1484 = vmul.f32 %v1483, -0.001358992
        %v1485 = vadd.f32 %v1484, 0.041655596
        %v1486 = vmul.f32 %v1483, %v1485
        %v1487 = vadd.f32 %v1486, -0.4999988
        %v1488 = vmul.f32 %v1483, %v1487
        %v1489 = vadd.f32 1.0, %v1488
        %v1490 = vmul.f32 %v1481, %v1481
        %v1491 = vmul.f32 %v1490, -0.00019511016
        %v1492 = vadd.f32 %v1491, 0.008332121
        %v1493 = vmul.f32 %v1490, %v1492
        %v1494 = vadd.f32 %v1493, -0.16666654
        %v1495 = vmul.f32 %v1490, %v1494
        %v1496 = vadd.f32 %v1495, 1.0
        %v1497 = vmul.f32 %v1496, %v1481
        %vm1498 = vweird.f32 %v267
        %v1499 = vand.u32 %v1482, 3
        %vm1500 = vcmp.lt.s32.totalorder %v1499, 2
        %vm1501 = vcmp.eq.s32.totalorder %v1499, 0
        %v1502 = vxor.u32 %v1497, 2147483648
        %v1503 = vsel %vm1501, %v1489, %v1502
        %vm1504 = vcmp.eq.s32.totalorder %v1499, 2
        %v1505 = vxor.u32 %v1489, 2147483648
        %v1506 = vsel %vm1504, %v1505, %v1497
        %v1507 = vsel %vm1500, %v1503, %v1506
        %v1508 = vsel %vm1498, nan, %v1507
        %v1509 = vand.u32 2147483647, %v268
        %vm1510 = vcmp.le.f32.partialorder %v1509, 0.7853982
        %vm1511 = vcmp.lt.s32.totalorder %v268, 0
        %v1512 = vand.u32 %v268, 2139095040
        %v1513 = vshrl.u32 %v1512, 23
        %v1514 = vsub.s32 %v1513, 127
        %v1515 = vand.u32 2147483647, %v268
        %v1516 = vand.u32 %v1515, 8388607
        %v1517 = vor.u32 %v1516, 8388608
        %v1518 = vsub.s32 0, %v1517
        %v1519 = vadd.s32 %v1514, 1
        %vm1520 = vcmp.gt.s32.totalorder %v1519, 0
        %v1521 = vsel %vm1520, %v1519, 0
        %v1522 = vshrl.u32 %v1521, 5
        %v1523 = vand.u32 %v1521, 31
        %v1524 = vsub.s32 32, %v1523
        %v1525 = vshrl.u32 683565275, %v1524
        %v1526 = vshll.u32 683565275, %v1523
        %v1527 = vshrl.u32 2475754826, %v1524
        %v1528 = vor.u32 %v1526, %v1527
        %v1529 = vshll.u32 2475754826, %v1523
        %v1530 = vshrl.u32 2131351028, %v1524
        %v1531 = vor.u32 %v1529, %v1530
        %v1532 = vshll.u32 2131351028, %v1523
        %v1533 = vshrl.u32 2102212464, %v1524
        %v1534 = vor.u32 %v1532, %v1533
        %v1535 = vshll.u32 2102212464, %v1523
        %v1536 = vshrl.u32 920167782, %v1524
        %v1537 = vor.u32 %v1535, %v1536
        %v1538 = vshll.u32 920167782, %v1523
        %v1539 = vshrl.u32 1326507024, %v1524
        %v1540 = vor.u32 %v1538, %v1539
        %vm1541 = vcmp.lt.s32.totalorder %v1522, 1
        %vm1542 = vcmp.lt.s32.totalorder %v1522, 2
        %vm1543 = vcmp.lt.s32.totalorder %v1522, 3
        %vm1544 = vcmp.lt.s32.totalorder %v1522, 4
        %v1545 = vsel %vm1541, %v1525, %v1528
        %v1546 = vsel %vm1544, %v1534, 2102212464
        %v1547 = vsel %vm1543, %v1531, %v1546
        %v1548 = vsel %vm1542, %v1545, %v1547
        %v1549 = vsel %vm1541, %v1528, %v1531
        %v1550 = vsel %vm1544, %v1537, 920167782
        %v1551 = vsel %vm1543, %v1534, %v1550
        %v1552 = vsel %vm1542, %v1549, %v1551
        %v1553 = vsel %vm1541, %v1531, %v1534
        %v1554 = vsel %vm1544, %v1540, 1326507024
        %v1555 = vsel %vm1543, %v1537, %v1554
        %v1556 = vsel %vm1542, %v1553, %v1555
        %v1557 = vshll.u32 %v1517, 8
        %v1558 = vand.u32 %v1557, 65535
        %v1559 = vshrl.u32 %v1557, 16
        %v1560 = vand.u32 %v1556, 65535
        %v1561 = vshrl.u32 %v1556, 16
        %v1562 = vmul.u32 %v1558, %v1560
        %v1563 = vmul.u32 %v1558, %v1561
        %v1564 = vmul.u32 %v1559, %v1560
        %v1565 = vmul.u32 %v1559, %v1561
        %v1566 = vshll.u32 %v1563, 16
        %v1567 = vshrl.u32 %v1563, 16
        %v1568 = vshll.u32 %v1564, 16
        %v1569 = vshrl.u32 %v1564, 16
        %vm1570 = vc.u32 %v1562, %v1566
        %v1571 = vsel %vm1570, 1, 0
        %v1572 = vadd.s32 %v1562, %v1566
        %v1573 = vadd.s32 %v1565, %v1571
        %vm1574 = vc.u32 %v1572, %v1568
        %v1575 = vsel %vm1574, 1, 0
        %v1576 = vadd.s32 %v1572, %v1568
        %v1577 = vadd.s32 %v1573, %v1575
        %v1578 = vadd.s32 %v1577, %v1567
        %v1579 = vadd.s32 %v1578, %v1569
        %v1580 = vand.u32 %v1557, 65535
        %v1581 = vshrl.u32 %v1557, 16
        %v1582 = vand.u32 %v1552, 65535
        %v1583 = vshrl.u32 %v1552, 16
        %v1584 = vmul.u32 %v1580, %v1582
        %v1585 = vmul.u32 %v1580, %v1583
        %v1586 = vmul.u32 %v1581, %v1582
        %v1587 = vmul.u32 %v1581, %v1583
        %v1588 = vshll.u32 %v1585, 16
        %v1589 = vshrl.u32 %v1585, 16
        %v1590 = vshll.u32 %v1586, 16
        %v1591 = vshrl.u32 %v1586, 16
        %vm1592 = vc.u32 %v1584, %v1588
        %v1593 = vsel %vm1592, 1, 0
        %v1594 = vadd.s32 %v1584, %v1588
        %v1595 = vadd.s32 %v1587, %v1593
        %vm1596 = vc.u32 %v1594, %v1590
        %v1597 = vsel %vm1596, 1, 0
        %v1598 = vadd.s32 %v1594, %v1590
        %v1599 = vadd.s32 %v1595, %v1597
        %v1600 = vadd.s32 %v1599, %v1589
        %v1601 = vadd.s32 %v1600, %v1591
        %v1602 = vmul.u32 %v1557, %v1548
        %v1603 = vadd.s32 %v1579, %v1598
        %vm1604 = vc.u32 %v1579, %v1598
        %v1605 = vadd.s32 %v1601, 1
        %v1606 = vsel %vm1604, %v1605, %v1601
        %v1607 = vadd.s32 %v1602, %v1606
        %v1608 = vadd.s32 %v1607, 536870912
        %v1609 = vshrl.u32 %v1608, 30
        %v1610 = vshll.u32 %v1609, 30
        %v1611 = vsub.s32 %v1607, %v1610
        %vm1612 = vcmp.lt.s32.totalorder %v1611, 0
        %v1613 = vsub.s32 0, %v1611
        %v1614 = vsel %vm1612, %v1613, %v1611
        %v1615 = vclz %v1614
        %v1616 = vsub.s32 %v1615, 2
        %vm1617 = vcmp.gt.s32.totalorder 0, %v1616
        %v1618 = vsel %vm1617, 0, %v1616
        %v1619 = vsub.s32 32, %v1618
        %v1620 = vshll.u32 %v1611, %v1618
        %v1621 = vshrl.u32 %v1603, %v1619
        %v1622 = vor.u32 %v1620, %v1621
        %v1623 = vsub.s32 4294967266, %v1618
        %v1624 = vadd.s32 %v1623, 127
        %v1625 = vshll.u32 %v1624, 23
        %v1626 = vor.u32 4788187, %v1625
        %v1627 = vand.u32 2147483647, %v1626
        %v1629 = vcvt.s32.f32 %v1622
        %v1630 = vmul.f32 %v1629, %v1627
        %v1631 = vxor.u32 %v1630, 2147483648
        %v1632 = vsel %vm1511, %v1631, %v1630
        %v1633 = vsub.s32 4, %v1609
        %v1634 = vsel %vm1511, %v1633, %v1609
        %v1635 = vsel %vm1510, %v268, %v1632
        %v1636 = vsel %vm1510, 0, %v1634
        %v1637 = vmul.f32 %v1635, %v1635
        %v1638 = vmul.f32 %v1637, -0.001358992
        %v1639 = vadd.f32 %v1638, 0.041655596
        %v1640 = vmul.f32 %v1637, %v1639
        %v1641 = vadd.f32 %v1640, -0.4999988
        %v1642 = vmul.f32 %v1637, %v1641
        %v1643 = vadd.f32 1.0, %v1642
        %v1644 = vmul.f32 %v1635, %v1635
        %v1645 = vmul.f32 %v1644, -0.00019511016
        %v1646 = vadd.f32 %v1645, 0.008332121
        %v1647 = vmul.f32 %v1644, %v1646
        %v1648 = vadd.f32 %v1647, -0.16666654
        %v1649 = vmul.f32 %v1644, %v1648
        %v1650 = vadd.f32 %v1649, 1.0
        %v1651 = vmul.f32 %v1650, %v1635
        %vm1652 = vweird.f32 %v268
        %v1653 = vand.u32 %v1636, 3
        %vm1654 = vcmp.lt.s32.totalorder %v1653, 2
        %vm1655 = vcmp.eq.s32.totalorder %v1653, 0
        %v1656 = vxor.u32 %v1651, 2147483648
        %v1657 = vsel %vm1655, %v1643, %v1656
        %vm1658 = vcmp.eq.s32.totalorder %v1653, 2
        %v1659 = vxor.u32 %v1643, 2147483648
        %v1660 = vsel %vm1658, %v1659, %v1651
        %v1661 = vsel %vm1654, %v1657, %v1660
        %v1662 = vsel %vm1652, nan, %v1661
        %v1663 = vand.u32 2147483647, %v269
        %vm1664 = vcmp.le.f32.partialorder %v1663, 0.7853982
        %vm1665 = vcmp.lt.s32.totalorder %v269, 0
        %v1666 = vand.u32 %v269, 2139095040
        %v1667 = vshrl.u32 %v1666, 23
        %v1668 = vsub.s32 %v1667, 127
        %v1669 = vand.u32 2147483647, %v269
        %v1670 = vand.u32 %v1669, 8388607
        %v1671 = vor.u32 %v1670, 8388608
        %v1672 = vsub.s32 0, %v1671
        %v1673 = vadd.s32 %v1668, 1
        %vm1674 = vcmp.gt.s32.totalorder %v1673, 0
        %v1675 = vsel %vm1674, %v1673, 0
        %v1676 = vshrl.u32 %v1675, 5
        %v1677 = vand.u32 %v1675, 31
        %v1678 = vsub.s32 32, %v1677
        %v1679 = vshrl.u32 683565275, %v1678
        %v1680 = vshll.u32 683565275, %v1677
        %v1681 = vshrl.u32 2475754826, %v1678
        %v1682 = vor.u32 %v1680, %v1681
        %v1683 = vshll.u32 2475754826, %v1677
        %v1684 = vshrl.u32 2131351028, %v1678
        %v1685 = vor.u32 %v1683, %v1684
        %v1686 = vshll.u32 2131351028, %v1677
        %v1687 = vshrl.u32 2102212464, %v1678
        %v1688 = vor.u32 %v1686, %v1687
        %v1689 = vshll.u32 2102212464, %v1677
        %v1690 = vshrl.u32 920167782, %v1678
        %v1691 = vor.u32 %v1689, %v1690
        %v1692 = vshll.u32 920167782, %v1677
        %v1693 = vshrl.u32 1326507024, %v1678
        %v1694 = vor.u32 %v1692, %v1693
        %vm1695 = vcmp.lt.s32.totalorder %v1676, 1
        %vm1696 = vcmp.lt.s32.totalorder %v1676, 2
        %vm1697 = vcmp.lt.s32.totalorder %v1676, 3
        %vm1698 = vcmp.lt.s32.totalorder %v1676, 4
        %v1699 = vsel %vm1695, %v1679, %v1682
        %v1700 = vsel %vm1698, %v1688, 2102212464
        %v1701 = vsel %vm1697, %v1685, %v1700
        %v1702 = vsel %vm1696, %v1699, %v1701
        %v1703 = vsel %vm1695, %v1682, %v1685
        %v1704 = vsel %vm1698, %v1691, 920167782
        %v1705 = vsel %vm1697, %v1688, %v1704
        %v1706 = vsel %vm1696, %v1703, %v1705
        %v1707 = vsel %vm1695, %v1685, %v1688
        %v1708 = vsel %vm1698, %v1694, 1326507024
        %v1709 = vsel %vm1697, %v1691, %v1708
        %v1710 = vsel %vm1696, %v1707, %v1709
        %v1711 = vshll.u32 %v1671, 8
        %v1712 = vand.u32 %v1711, 65535
        %v1713 = vshrl.u32 %v1711, 16
        %v1714 = vand.u32 %v1710, 65535
        %v1715 = vshrl.u32 %v1710, 16
        %v1716 = vmul.u32 %v1712, %v1714
        %v1717 = vmul.u32 %v1712, %v1715
        %v1718 = vmul.u32 %v1713, %v1714
        %v1719 = vmul.u32 %v1713, %v1715
        %v1720 = vshll.u32 %v1717, 16
        %v1721 = vshrl.u32 %v1717, 16
        %v1722 = vshll.u32 %v1718, 16
        %v1723 = vshrl.u32 %v1718, 16
        %vm1724 = vc.u32 %v1716, %v1720
        %v1725 = vsel %vm1724, 1, 0
        %v1726 = vadd.s32 %v1716, %v1720
        %v1727 = vadd.s32 %v1719, %v1725
        %vm1728 = vc.u32 %v1726, %v1722
        %v1729 = vsel %vm1728, 1, 0
        %v1730 = vadd.s32 %v1726, %v1722
        %v1731 = vadd.s32 %v1727, %v1729
        %v1732 = vadd.s32 %v1731, %v1721
        %v1733 = vadd.s32 %v1732, %v1723
        %v1734 = vand.u32 %v1711, 65535
        %v1735 = vshrl.u32 %v1711, 16
        %v1736 = vand.u32 %v1706, 65535
        %v1737 = vshrl.u32 %v1706, 16
        %v1738 = vmul.u32 %v1734, %v1736
        %v1739 = vmul.u32 %v1734, %v1737
        %v1740 = vmul.u32 %v1735, %v1736
        %v1741 = vmul.u32 %v1735, %v1737
        %v1742 = vshll.u32 %v1739, 16
        %v1743 = vshrl.u32 %v1739, 16
        %v1744 = vshll.u32 %v1740, 16
        %v1745 = vshrl.u32 %v1740, 16
        %vm1746 = vc.u32 %v1738, %v1742
        %v1747 = vsel %vm1746, 1, 0
        %v1748 = vadd.s32 %v1738, %v1742
        %v1749 = vadd.s32 %v1741, %v1747
        %vm1750 = vc.u32 %v1748, %v1744
        %v1751 = vsel %vm1750, 1, 0
        %v1752 = vadd.s32 %v1748, %v1744
        %v1753 = vadd.s32 %v1749, %v1751
        %v1754 = vadd.s32 %v1753, %v1743
        %v1755 = vadd.s32 %v1754, %v1745
        %v1756 = vmul.u32 %v1711, %v1702
        %v1757 = vadd.s32 %v1733, %v1752
        %vm1758 = vc.u32 %v1733, %v1752
        %v1759 = vadd.s32 %v1755, 1
        %v1760 = vsel %vm1758, %v1759, %v1755
        %v1761 = vadd.s32 %v1756, %v1760
        %v1762 = vadd.s32 %v1761, 536870912
        %v1763 = vshrl.u32 %v1762, 30
        %v1764 = vshll.u32 %v1763, 30
        %v1765 = vsub.s32 %v1761, %v1764
        %vm1766 = vcmp.lt.s32.totalorder %v1765, 0
        %v1767 = vsub.s32 0, %v1765
        %v1768 = vsel %vm1766, %v1767, %v1765
        %v1769 = vclz %v1768
        %v1770 = vsub.s32 %v1769, 2
        %vm1771 = vcmp.gt.s32.totalorder 0, %v1770
        %v1772 = vsel %vm1771, 0, %v1770
        %v1773 = vsub.s32 32, %v1772
        %v1774 = vshll.u32 %v1765, %v1772
        %v1775 = vshrl.u32 %v1757, %v1773
        %v1776 = vor.u32 %v1774, %v1775
        %v1777 = vsub.s32 4294967266, %v1772
        %v1778 = vadd.s32 %v1777, 127
        %v1779 = vshll.u32 %v1778, 23
        %v1780 = vor.u32 4788187, %v1779
        %v1781 = vand.u32 2147483647, %v1780
        %v1783 = vcvt.s32.f32 %v1776
        %v1784 = vmul.f32 %v1783, %v1781
        %v1785 = vxor.u32 %v1784, 2147483648
        %v1786 = vsel %vm1665, %v1785, %v1784
        %v1787 = vsub.s32 4, %v1763
        %v1788 = vsel %vm1665, %v1787, %v1763
        %v1789 = vsel %vm1664, %v269, %v1786
        %v1790 = vsel %vm1664, 0, %v1788
        %v1791 = vmul.f32 %v1789, %v1789
        %v1792 = vmul.f32 %v1791, -0.001358992
        %v1793 = vadd.f32 %v1792, 0.041655596
        %v1794 = vmul.f32 %v1791, %v1793
        %v1795 = vadd.f32 %v1794, -0.4999988
        %v1796 = vmul.f32 %v1791, %v1795
        %v1797 = vadd.f32 1.0, %v1796
        %v1798 = vmul.f32 %v1789, %v1789
        %v1799 = vmul.f32 %v1798, -0.00019511016
        %v1800 = vadd.f32 %v1799, 0.008332121
        %v1801 = vmul.f32 %v1798, %v1800
        %v1802 = vadd.f32 %v1801, -0.16666654
        %v1803 = vmul.f32 %v1798, %v1802
        %v1804 = vadd.f32 %v1803, 1.0
        %v1805 = vmul.f32 %v1804, %v1789
        %vm1806 = vweird.f32 %v269
        %v1807 = vand.u32 %v1790, 3
        %vm1808 = vcmp.lt.s32.totalorder %v1807, 2
        %vm1809 = vcmp.eq.s32.totalorder %v1807, 0
        %v1810 = vxor.u32 %v1805, 2147483648
        %v1811 = vsel %vm1809, %v1797, %v1810
        %vm1812 = vcmp.eq.s32.totalorder %v1807, 2
        %v1813 = vxor.u32 %v1797, 2147483648
        %v1814 = vsel %vm1812, %v1813, %v1805
        %v1815 = vsel %vm1808, %v1811, %v1814
        %v1816 = vsel %vm1806, nan, %v1815
        %v1817 = vand.u32 2147483647, %v270
        %vm1818 = vcmp.le.f32.partialorder %v1817, 0.7853982
        %vm1819 = vcmp.lt.s32.totalorder %v270, 0
        %v1820 = vand.u32 %v270, 2139095040
        %v1821 = vshrl.u32 %v1820, 23
        %v1822 = vsub.s32 %v1821, 127
        %v1823 = vand.u32 2147483647, %v270
        %v1824 = vand.u32 %v1823, 8388607
        %v1825 = vor.u32 %v1824, 8388608
        %v1826 = vsub.s32 0, %v1825
        %v1827 = vadd.s32 %v1822, 1
        %vm1828 = vcmp.gt.s32.totalorder %v1827, 0
        %v1829 = vsel %vm1828, %v1827, 0
        %v1830 = vshrl.u32 %v1829, 5
        %v1831 = vand.u32 %v1829, 31
        %v1832 = vsub.s32 32, %v1831
        %v1833 = vshrl.u32 683565275, %v1832
        %v1834 = vshll.u32 683565275, %v1831
        %v1835 = vshrl.u32 2475754826, %v1832
        %v1836 = vor.u32 %v1834, %v1835
        %v1837 = vshll.u32 2475754826, %v1831
        %v1838 = vshrl.u32 2131351028, %v1832
        %v1839 = vor.u32 %v1837, %v1838
        %v1840 = vshll.u32 2131351028, %v1831
        %v1841 = vshrl.u32 2102212464, %v1832
        %v1842 = vor.u32 %v1840, %v1841
        %v1843 = vshll.u32 2102212464, %v1831
        %v1844 = vshrl.u32 920167782, %v1832
        %v1845 = vor.u32 %v1843, %v1844
        %v1846 = vshll.u32 920167782, %v1831
        %v1847 = vshrl.u32 1326507024, %v1832
        %v1848 = vor.u32 %v1846, %v1847
        %vm1849 = vcmp.lt.s32.totalorder %v1830, 1
        %vm1850 = vcmp.lt.s32.totalorder %v1830, 2
        %vm1851 = vcmp.lt.s32.totalorder %v1830, 3
        %vm1852 = vcmp.lt.s32.totalorder %v1830, 4
        %v1853 = vsel %vm1849, %v1833, %v1836
        %v1854 = vsel %vm1852, %v1842, 2102212464
        %v1855 = vsel %vm1851, %v1839, %v1854
        %v1856 = vsel %vm1850, %v1853, %v1855
        %v1857 = vsel %vm1849, %v1836, %v1839
        %v1858 = vsel %vm1852, %v1845, 920167782
        %v1859 = vsel %vm1851, %v1842, %v1858
        %v1860 = vsel %vm1850, %v1857, %v1859
        %v1861 = vsel %vm1849, %v1839, %v1842
        %v1862 = vsel %vm1852, %v1848, 1326507024
        %v1863 = vsel %vm1851, %v1845, %v1862
        %v1864 = vsel %vm1850, %v1861, %v1863
        %v1865 = vshll.u32 %v1825, 8
        %v1866 = vand.u32 %v1865, 65535
        %v1867 = vshrl.u32 %v1865, 16
        %v1868 = vand.u32 %v1864, 65535
        %v1869 = vshrl.u32 %v1864, 16
        %v1870 = vmul.u32 %v1866, %v1868
        %v1871 = vmul.u32 %v1866, %v1869
        %v1872 = vmul.u32 %v1867, %v1868
        %v1873 = vmul.u32 %v1867, %v1869
        %v1874 = vshll.u32 %v1871, 16
        %v1875 = vshrl.u32 %v1871, 16
        %v1876 = vshll.u32 %v1872, 16
        %v1877 = vshrl.u32 %v1872, 16
        %vm1878 = vc.u32 %v1870, %v1874
        %v1879 = vsel %vm1878, 1, 0
        %v1880 = vadd.s32 %v1870, %v1874
        %v1881 = vadd.s32 %v1873, %v1879
        %vm1882 = vc.u32 %v1880, %v1876
        %v1883 = vsel %vm1882, 1, 0
        %v1884 = vadd.s32 %v1880, %v1876
        %v1885 = vadd.s32 %v1881, %v1883
        %v1886 = vadd.s32 %v1885, %v1875
        %v1887 = vadd.s32 %v1886, %v1877
        %v1888 = vand.u32 %v1865, 65535
        %v1889 = vshrl.u32 %v1865, 16
        %v1890 = vand.u32 %v1860, 65535
        %v1891 = vshrl.u32 %v1860, 16
        %v1892 = vmul.u32 %v1888, %v1890
        %v1893 = vmul.u32 %v1888, %v1891
        %v1894 = vmul.u32 %v1889, %v1890
        %v1895 = vmul.u32 %v1889, %v1891
        %v1896 = vshll.u32 %v1893, 16
        %v1897 = vshrl.u32 %v1893, 16
        %v1898 = vshll.u32 %v1894, 16
        %v1899 = vshrl.u32 %v1894, 16
        %vm1900 = vc.u32 %v1892, %v1896
        %v1901 = vsel %vm1900, 1, 0
        %v1902 = vadd.s32 %v1892, %v1896
        %v1903 = vadd.s32 %v1895, %v1901
        %vm1904 = vc.u32 %v1902, %v1898
        %v1905 = vsel %vm1904, 1, 0
        %v1906 = vadd.s32 %v1902, %v1898
        %v1907 = vadd.s32 %v1903, %v1905
        %v1908 = vadd.s32 %v1907, %v1897
        %v1909 = vadd.s32 %v1908, %v1899
        %v1910 = vmul.u32 %v1865, %v1856
        %v1911 = vadd.s32 %v1887, %v1906
        %vm1912 = vc.u32 %v1887, %v1906
        %v1913 = vadd.s32 %v1909, 1
        %v1914 = vsel %vm1912, %v1913, %v1909
        %v1915 = vadd.s32 %v1910, %v1914
        %v1916 = vadd.s32 %v1915, 536870912
        %v1917 = vshrl.u32 %v1916, 30
        %v1918 = vshll.u32 %v1917, 30
        %v1919 = vsub.s32 %v1915, %v1918
        %vm1920 = vcmp.lt.s32.totalorder %v1919, 0
        %v1921 = vsub.s32 0, %v1919
        %v1922 = vsel %vm1920, %v1921, %v1919
        %v1923 = vclz %v1922
        %v1924 = vsub.s32 %v1923, 2
        %vm1925 = vcmp.gt.s32.totalorder 0, %v1924
        %v1926 = vsel %vm1925, 0, %v1924
        %v1927 = vsub.s32 32, %v1926
        %v1928 = vshll.u32 %v1919, %v1926
        %v1929 = vshrl.u32 %v1911, %v1927
        %v1930 = vor.u32 %v1928, %v1929
        %v1931 = vsub.s32 4294967266, %v1926
        %v1932 = vadd.s32 %v1931, 127
        %v1933 = vshll.u32 %v1932, 23
        %v1934 = vor.u32 4788187, %v1933
        %v1935 = vand.u32 2147483647, %v1934
        %v1937 = vcvt.s32.f32 %v1930
        %v1938 = vmul.f32 %v1937, %v1935
        %v1939 = vxor.u32 %v1938, 2147483648
        %v1940 = vsel %vm1819, %v1939, %v1938
        %v1941 = vsub.s32 4, %v1917
        %v1942 = vsel %vm1819, %v1941, %v1917
        %v1943 = vsel %vm1818, %v270, %v1940
        %v1944 = vsel %vm1818, 0, %v1942
        %v1945 = vmul.f32 %v1943, %v1943
        %v1946 = vmul.f32 %v1945, -0.001358992
        %v1947 = vadd.f32 %v1946, 0.041655596
        %v1948 = vmul.f32 %v1945, %v1947
        %v1949 = vadd.f32 %v1948, -0.4999988
        %v1950 = vmul.f32 %v1945, %v1949
        %v1951 = vadd.f32 1.0, %v1950
        %v1952 = vmul.f32 %v1943, %v1943
        %v1953 = vmul.f32 %v1952, -0.00019511016
        %v1954 = vadd.f32 %v1953, 0.008332121
        %v1955 = vmul.f32 %v1952, %v1954
        %v1956 = vadd.f32 %v1955, -0.16666654
        %v1957 = vmul.f32 %v1952, %v1956
        %v1958 = vadd.f32 %v1957, 1.0
        %v1959 = vmul.f32 %v1958, %v1943
        %vm1960 = vweird.f32 %v270
        %v1961 = vand.u32 %v1944, 3
        %vm1962 = vcmp.lt.s32.totalorder %v1961, 2
        %vm1963 = vcmp.eq.s32.totalorder %v1961, 0
        %v1964 = vxor.u32 %v1959, 2147483648
        %v1965 = vsel %vm1963, %v1951, %v1964
        %vm1966 = vcmp.eq.s32.totalorder %v1961, 2
        %v1967 = vxor.u32 %v1951, 2147483648
        %v1968 = vsel %vm1966, %v1967, %v1959
        %v1969 = vsel %vm1962, %v1965, %v1968
        %v1970 = vsel %vm1960, nan, %v1969
        %v1971 = vand.u32 2147483647, %v271
        %vm1972 = vcmp.le.f32.partialorder %v1971, 0.7853982
        %vm1973 = vcmp.lt.s32.totalorder %v271, 0
        %v1974 = vand.u32 %v271, 2139095040
        %v1975 = vshrl.u32 %v1974, 23
        %v1976 = vsub.s32 %v1975, 127
        %v1977 = vand.u32 2147483647, %v271
        %v1978 = vand.u32 %v1977, 8388607
        %v1979 = vor.u32 %v1978, 8388608
        %v1980 = vsub.s32 0, %v1979
        %v1981 = vadd.s32 %v1976, 1
        %vm1982 = vcmp.gt.s32.totalorder %v1981, 0
        %v1983 = vsel %vm1982, %v1981, 0
        %v1984 = vshrl.u32 %v1983, 5
        %v1985 = vand.u32 %v1983, 31
        %v1986 = vsub.s32 32, %v1985
        %v1987 = vshrl.u32 683565275, %v1986
        %v1988 = vshll.u32 683565275, %v1985
        %v1989 = vshrl.u32 2475754826, %v1986
        %v1990 = vor.u32 %v1988, %v1989
        %v1991 = vshll.u32 2475754826, %v1985
        %v1992 = vshrl.u32 2131351028, %v1986
        %v1993 = vor.u32 %v1991, %v1992
        %v1994 = vshll.u32 2131351028, %v1985
        %v1995 = vshrl.u32 2102212464, %v1986
        %v1996 = vor.u32 %v1994, %v1995
        %v1997 = vshll.u32 2102212464, %v1985
        %v1998 = vshrl.u32 920167782, %v1986
        %v1999 = vor.u32 %v1997, %v1998
        %v2000 = vshll.u32 920167782, %v1985
        %v2001 = vshrl.u32 1326507024, %v1986
        %v2002 = vor.u32 %v2000, %v2001
        %vm2003 = vcmp.lt.s32.totalorder %v1984, 1
        %vm2004 = vcmp.lt.s32.totalorder %v1984, 2
        %vm2005 = vcmp.lt.s32.totalorder %v1984, 3
        %vm2006 = vcmp.lt.s32.totalorder %v1984, 4
        %v2007 = vsel %vm2003, %v1987, %v1990
        %v2008 = vsel %vm2006, %v1996, 2102212464
        %v2009 = vsel %vm2005, %v1993, %v2008
        %v2010 = vsel %vm2004, %v2007, %v2009
        %v2011 = vsel %vm2003, %v1990, %v1993
        %v2012 = vsel %vm2006, %v1999, 920167782
        %v2013 = vsel %vm2005, %v1996, %v2012
        %v2014 = vsel %vm2004, %v2011, %v2013
        %v2015 = vsel %vm2003, %v1993, %v1996
        %v2016 = vsel %vm2006, %v2002, 1326507024
        %v2017 = vsel %vm2005, %v1999, %v2016
        %v2018 = vsel %vm2004, %v2015, %v2017
        %v2019 = vshll.u32 %v1979, 8
        %v2020 = vand.u32 %v2019, 65535
        %v2021 = vshrl.u32 %v2019, 16
        %v2022 = vand.u32 %v2018, 65535
        %v2023 = vshrl.u32 %v2018, 16
        %v2024 = vmul.u32 %v2020, %v2022
        %v2025 = vmul.u32 %v2020, %v2023
        %v2026 = vmul.u32 %v2021, %v2022
        %v2027 = vmul.u32 %v2021, %v2023
        %v2028 = vshll.u32 %v2025, 16
        %v2029 = vshrl.u32 %v2025, 16
        %v2030 = vshll.u32 %v2026, 16
        %v2031 = vshrl.u32 %v2026, 16
        %vm2032 = vc.u32 %v2024, %v2028
        %v2033 = vsel %vm2032, 1, 0
        %v2034 = vadd.s32 %v2024, %v2028
        %v2035 = vadd.s32 %v2027, %v2033
        %vm2036 = vc.u32 %v2034, %v2030
        %v2037 = vsel %vm2036, 1, 0
        %v2038 = vadd.s32 %v2034, %v2030
        %v2039 = vadd.s32 %v2035, %v2037
        %v2040 = vadd.s32 %v2039, %v2029
        %v2041 = vadd.s32 %v2040, %v2031
        %v2042 = vand.u32 %v2019, 65535
        %v2043 = vshrl.u32 %v2019, 16
        %v2044 = vand.u32 %v2014, 65535
        %v2045 = vshrl.u32 %v2014, 16
        %v2046 = vmul.u32 %v2042, %v2044
        %v2047 = vmul.u32 %v2042, %v2045
        %v2048 = vmul.u32 %v2043, %v2044
        %v2049 = vmul.u32 %v2043, %v2045
        %v2050 = vshll.u32 %v2047, 16
        %v2051 = vshrl.u32 %v2047, 16
        %v2052 = vshll.u32 %v2048, 16
        %v2053 = vshrl.u32 %v2048, 16
        %vm2054 = vc.u32 %v2046, %v2050
        %v2055 = vsel %vm2054, 1, 0
        %v2056 = vadd.s32 %v2046, %v2050
        %v2057 = vadd.s32 %v2049, %v2055
        %vm2058 = vc.u32 %v2056, %v2052
        %v2059 = vsel %vm2058, 1, 0
        %v2060 = vadd.s32 %v2056, %v2052
        %v2061 = vadd.s32 %v2057, %v2059
        %v2062 = vadd.s32 %v2061, %v2051
        %v2063 = vadd.s32 %v2062, %v2053
        %v2064 = vmul.u32 %v2019, %v2010
        %v2065 = vadd.s32 %v2041, %v2060
        %vm2066 = vc.u32 %v2041, %v2060
        %v2067 = vadd.s32 %v2063, 1
        %v2068 = vsel %vm2066, %v2067, %v2063
        %v2069 = vadd.s32 %v2064, %v2068
        %v2070 = vadd.s32 %v2069, 536870912
        %v2071 = vshrl.u32 %v2070, 30
        %v2072 = vshll.u32 %v2071, 30
        %v2073 = vsub.s32 %v2069, %v2072
        %vm2074 = vcmp.lt.s32.totalorder %v2073, 0
        %v2075 = vsub.s32 0, %v2073
        %v2076 = vsel %vm2074, %v2075, %v2073
        %v2077 = vclz %v2076
        %v2078 = vsub.s32 %v2077, 2
        %vm2079 = vcmp.gt.s32.totalorder 0, %v2078
        %v2080 = vsel %vm2079, 0, %v2078
        %v2081 = vsub.s32 32, %v2080
        %v2082 = vshll.u32 %v2073, %v2080
        %v2083 = vshrl.u32 %v2065, %v2081
        %v2084 = vor.u32 %v2082, %v2083
        %v2085 = vsub.s32 4294967266, %v2080
        %v2086 = vadd.s32 %v2085, 127
        %v2087 = vshll.u32 %v2086, 23
        %v2088 = vor.u32 4788187, %v2087
        %v2089 = vand.u32 2147483647, %v2088
        %v2091 = vcvt.s32.f32 %v2084
        %v2092 = vmul.f32 %v2091, %v2089
        %v2093 = vxor.u32 %v2092, 2147483648
        %v2094 = vsel %vm1973, %v2093, %v2092
        %v2095 = vsub.s32 4, %v2071
        %v2096 = vsel %vm1973, %v2095, %v2071
        %v2097 = vsel %vm1972, %v271, %v2094
        %v2098 = vsel %vm1972, 0, %v2096
        %v2099 = vmul.f32 %v2097, %v2097
        %v2100 = vmul.f32 %v2099, -0.001358992
        %v2101 = vadd.f32 %v2100, 0.041655596
        %v2102 = vmul.f32 %v2099, %v2101
        %v2103 = vadd.f32 %v2102, -0.4999988
        %v2104 = vmul.f32 %v2099, %v2103
        %v2105 = vadd.f32 1.0, %v2104
        %v2106 = vmul.f32 %v2097, %v2097
        %v2107 = vmul.f32 %v2106, -0.00019511016
        %v2108 = vadd.f32 %v2107, 0.008332121
        %v2109 = vmul.f32 %v2106, %v2108
        %v2110 = vadd.f32 %v2109, -0.16666654
        %v2111 = vmul.f32 %v2106, %v2110
        %v2112 = vadd.f32 %v2111, 1.0
        %v2113 = vmul.f32 %v2112, %v2097
        %vm2114 = vweird.f32 %v271
        %v2115 = vand.u32 %v2098, 3
        %vm2116 = vcmp.lt.s32.totalorder %v2115, 2
        %vm2117 = vcmp.eq.s32.totalorder %v2115, 0
        %v2118 = vxor.u32 %v2113, 2147483648
        %v2119 = vsel %vm2117, %v2105, %v2118
        %vm2120 = vcmp.eq.s32.totalorder %v2115, 2
        %v2121 = vxor.u32 %v2105, 2147483648
        %v2122 = vsel %vm2120, %v2121, %v2113
        %v2123 = vsel %vm2116, %v2119, %v2122
        %v2124 = vsel %vm2114, nan, %v2123
        %v2125 = vand.u32 2147483647, %v272
        %vm2126 = vcmp.le.f32.partialorder %v2125, 0.7853982
        %vm2127 = vcmp.lt.s32.totalorder %v272, 0
        %v2128 = vand.u32 %v272, 2139095040
        %v2129 = vshrl.u32 %v2128, 23
        %v2130 = vsub.s32 %v2129, 127
        %v2131 = vand.u32 2147483647, %v272
        %v2132 = vand.u32 %v2131, 8388607
        %v2133 = vor.u32 %v2132, 8388608
        %v2134 = vsub.s32 0, %v2133
        %v2135 = vadd.s32 %v2130, 1
        %vm2136 = vcmp.gt.s32.totalorder %v2135, 0
        %v2137 = vsel %vm2136, %v2135, 0
        %v2138 = vshrl.u32 %v2137, 5
        %v2139 = vand.u32 %v2137, 31
        %v2140 = vsub.s32 32, %v2139
        %v2141 = vshrl.u32 683565275, %v2140
        %v2142 = vshll.u32 683565275, %v2139
        %v2143 = vshrl.u32 2475754826, %v2140
        %v2144 = vor.u32 %v2142, %v2143
        %v2145 = vshll.u32 2475754826, %v2139
        %v2146 = vshrl.u32 2131351028, %v2140
        %v2147 = vor.u32 %v2145, %v2146
        %v2148 = vshll.u32 2131351028, %v2139
        %v2149 = vshrl.u32 2102212464, %v2140
        %v2150 = vor.u32 %v2148, %v2149
        %v2151 = vshll.u32 2102212464, %v2139
        %v2152 = vshrl.u32 920167782, %v2140
        %v2153 = vor.u32 %v2151, %v2152
        %v2154 = vshll.u32 920167782, %v2139
        %v2155 = vshrl.u32 1326507024, %v2140
        %v2156 = vor.u32 %v2154, %v2155
        %vm2157 = vcmp.lt.s32.totalorder %v2138, 1
        %vm2158 = vcmp.lt.s32.totalorder %v2138, 2
        %vm2159 = vcmp.lt.s32.totalorder %v2138, 3
        %vm2160 = vcmp.lt.s32.totalorder %v2138, 4
        %v2161 = vsel %vm2157, %v2141, %v2144
        %v2162 = vsel %vm2160, %v2150, 2102212464
        %v2163 = vsel %vm2159, %v2147, %v2162
        %v2164 = vsel %vm2158, %v2161, %v2163
        %v2165 = vsel %vm2157, %v2144, %v2147
        %v2166 = vsel %vm2160, %v2153, 920167782
        %v2167 = vsel %vm2159, %v2150, %v2166
        %v2168 = vsel %vm2158, %v2165, %v2167
        %v2169 = vsel %vm2157, %v2147, %v2150
        %v2170 = vsel %vm2160, %v2156, 1326507024
        %v2171 = vsel %vm2159, %v2153, %v2170
        %v2172 = vsel %vm2158, %v2169, %v2171
        %v2173 = vshll.u32 %v2133, 8
        %v2174 = vand.u32 %v2173, 65535
        %v2175 = vshrl.u32 %v2173, 16
        %v2176 = vand.u32 %v2172, 65535
        %v2177 = vshrl.u32 %v2172, 16
        %v2178 = vmul.u32 %v2174, %v2176
        %v2179 = vmul.u32 %v2174, %v2177
        %v2180 = vmul.u32 %v2175, %v2176
        %v2181 = vmul.u32 %v2175, %v2177
        %v2182 = vshll.u32 %v2179, 16
        %v2183 = vshrl.u32 %v2179, 16
        %v2184 = vshll.u32 %v2180, 16
        %v2185 = vshrl.u32 %v2180, 16
        %vm2186 = vc.u32 %v2178, %v2182
        %v2187 = vsel %vm2186, 1, 0
        %v2188 = vadd.s32 %v2178, %v2182
        %v2189 = vadd.s32 %v2181, %v2187
        %vm2190 = vc.u32 %v2188, %v2184
        %v2191 = vsel %vm2190, 1, 0
        %v2192 = vadd.s32 %v2188, %v2184
        %v2193 = vadd.s32 %v2189, %v2191
        %v2194 = vadd.s32 %v2193, %v2183
        %v2195 = vadd.s32 %v2194, %v2185
        %v2196 = vand.u32 %v2173, 65535
        %v2197 = vshrl.u32 %v2173, 16
        %v2198 = vand.u32 %v2168, 65535
        %v2199 = vshrl.u32 %v2168, 16
        %v2200 = vmul.u32 %v2196, %v2198
        %v2201 = vmul.u32 %v2196, %v2199
        %v2202 = vmul.u32 %v2197, %v2198
        %v2203 = vmul.u32 %v2197, %v2199
        %v2204 = vshll.u32 %v2201, 16
        %v2205 = vshrl.u32 %v2201, 16
        %v2206 = vshll.u32 %v2202, 16
        %v2207 = vshrl.u32 %v2202, 16
        %vm2208 = vc.u32 %v2200, %v2204
        %v2209 = vsel %vm2208, 1, 0
        %v2210 = vadd.s32 %v2200, %v2204
        %v2211 = vadd.s32 %v2203, %v2209
        %vm2212 = vc.u32 %v2210, %v2206
        %v2213 = vsel %vm2212, 1, 0
        %v2214 = vadd.s32 %v2210, %v2206
        %v2215 = vadd.s32 %v2211, %v2213
        %v2216 = vadd.s32 %v2215, %v2205
        %v2217 = vadd.s32 %v2216, %v2207
        %v2218 = vmul.u32 %v2173, %v2164
        %v2219 = vadd.s32 %v2195, %v2214
        %vm2220 = vc.u32 %v2195, %v2214
        %v2221 = vadd.s32 %v2217, 1
        %v2222 = vsel %vm2220, %v2221, %v2217
        %v2223 = vadd.s32 %v2218, %v2222
        %v2224 = vadd.s32 %v2223, 536870912
        %v2225 = vshrl.u32 %v2224, 30
        %v2226 = vshll.u32 %v2225, 30
        %v2227 = vsub.s32 %v2223, %v2226
        %vm2228 = vcmp.lt.s32.totalorder %v2227, 0
        %v2229 = vsub.s32 0, %v2227
        %v2230 = vsel %vm2228, %v2229, %v2227
        %v2231 = vclz %v2230
        %v2232 = vsub.s32 %v2231, 2
        %vm2233 = vcmp.gt.s32.totalorder 0, %v2232
        %v2234 = vsel %vm2233, 0, %v2232
        %v2235 = vsub.s32 32, %v2234
        %v2236 = vshll.u32 %v2227, %v2234
        %v2237 = vshrl.u32 %v2219, %v2235
        %v2238 = vor.u32 %v2236, %v2237
        %v2239 = vsub.s32 4294967266, %v2234
        %v2240 = vadd.s32 %v2239, 127
        %v2241 = vshll.u32 %v2240, 23
        %v2242 = vor.u32 4788187, %v2241
        %v2243 = vand.u32 2147483647, %v2242
        %v2245 = vcvt.s32.f32 %v2238
        %v2246 = vmul.f32 %v2245, %v2243
        %v2247 = vxor.u32 %v2246, 2147483648
        %v2248 = vsel %vm2127, %v2247, %v2246
        %v2249 = vsub.s32 4, %v2225
        %v2250 = vsel %vm2127, %v2249, %v2225
        %v2251 = vsel %vm2126, %v272, %v2248
        %v2252 = vsel %vm2126, 0, %v2250
        %v2253 = vmul.f32 %v2251, %v2251
        %v2254 = vmul.f32 %v2253, -0.001358992
        %v2255 = vadd.f32 %v2254, 0.041655596
        %v2256 = vmul.f32 %v2253, %v2255
        %v2257 = vadd.f32 %v2256, -0.4999988
        %v2258 = vmul.f32 %v2253, %v2257
        %v2259 = vadd.f32 1.0, %v2258
        %v2260 = vmul.f32 %v2251, %v2251
        %v2261 = vmul.f32 %v2260, -0.00019511016
        %v2262 = vadd.f32 %v2261, 0.008332121
        %v2263 = vmul.f32 %v2260, %v2262
        %v2264 = vadd.f32 %v2263, -0.16666654
        %v2265 = vmul.f32 %v2260, %v2264
        %v2266 = vadd.f32 %v2265, 1.0
        %v2267 = vmul.f32 %v2266, %v2251
        %vm2268 = vweird.f32 %v272
        %v2269 = vand.u32 %v2252, 3
        %vm2270 = vcmp.lt.s32.totalorder %v2269, 2
        %vm2271 = vcmp.eq.s32.totalorder %v2269, 0
        %v2272 = vxor.u32 %v2267, 2147483648
        %v2273 = vsel %vm2271, %v2259, %v2272
        %vm2274 = vcmp.eq.s32.totalorder %v2269, 2
        %v2275 = vxor.u32 %v2259, 2147483648
        %v2276 = vsel %vm2274, %v2275, %v2267
        %v2277 = vsel %vm2270, %v2273, %v2276
        %v2278 = vsel %vm2268, nan, %v2277
        %v2279 = vand.u32 2147483647, %v273
        %vm2280 = vcmp.le.f32.partialorder %v2279, 0.7853982
        %vm2281 = vcmp.lt.s32.totalorder %v273, 0
        %v2282 = vand.u32 %v273, 2139095040
        %v2283 = vshrl.u32 %v2282, 23
        %v2284 = vsub.s32 %v2283, 127
        %v2285 = vand.u32 2147483647, %v273
        %v2286 = vand.u32 %v2285, 8388607
        %v2287 = vor.u32 %v2286, 8388608
        %v2288 = vsub.s32 0, %v2287
        %v2289 = vadd.s32 %v2284, 1
        %vm2290 = vcmp.gt.s32.totalorder %v2289, 0
        %v2291 = vsel %vm2290, %v2289, 0
        %v2292 = vshrl.u32 %v2291, 5
        %v2293 = vand.u32 %v2291, 31
        %v2294 = vsub.s32 32, %v2293
        %v2295 = vshrl.u32 683565275, %v2294
        %v2296 = vshll.u32 683565275, %v2293
        %v2297 = vshrl.u32 2475754826, %v2294
        %v2298 = vor.u32 %v2296, %v2297
        %v2299 = vshll.u32 2475754826, %v2293
        %v2300 = vshrl.u32 2131351028, %v2294
        %v2301 = vor.u32 %v2299, %v2300
        %v2302 = vshll.u32 2131351028, %v2293
        %v2303 = vshrl.u32 2102212464, %v2294
        %v2304 = vor.u32 %v2302, %v2303
        %v2305 = vshll.u32 2102212464, %v2293
        %v2306 = vshrl.u32 920167782, %v2294
        %v2307 = vor.u32 %v2305, %v2306
        %v2308 = vshll.u32 920167782, %v2293
        %v2309 = vshrl.u32 1326507024, %v2294
        %v2310 = vor.u32 %v2308, %v2309
        %vm2311 = vcmp.lt.s32.totalorder %v2292, 1
        %vm2312 = vcmp.lt.s32.totalorder %v2292, 2
        %vm2313 = vcmp.lt.s32.totalorder %v2292, 3
        %vm2314 = vcmp.lt.s32.totalorder %v2292, 4
        %v2315 = vsel %vm2311, %v2295, %v2298
        %v2316 = vsel %vm2314, %v2304, 2102212464
        %v2317 = vsel %vm2313, %v2301, %v2316
        %v2318 = vsel %vm2312, %v2315, %v2317
        %v2319 = vsel %vm2311, %v2298, %v2301
        %v2320 = vsel %vm2314, %v2307, 920167782
        %v2321 = vsel %vm2313, %v2304, %v2320
        %v2322 = vsel %vm2312, %v2319, %v2321
        %v2323 = vsel %vm2311, %v2301, %v2304
        %v2324 = vsel %vm2314, %v2310, 1326507024
        %v2325 = vsel %vm2313, %v2307, %v2324
        %v2326 = vsel %vm2312, %v2323, %v2325
        %v2327 = vshll.u32 %v2287, 8
        %v2328 = vand.u32 %v2327, 65535
        %v2329 = vshrl.u32 %v2327, 16
        %v2330 = vand.u32 %v2326, 65535
        %v2331 = vshrl.u32 %v2326, 16
        %v2332 = vmul.u32 %v2328, %v2330
        %v2333 = vmul.u32 %v2328, %v2331
        %v2334 = vmul.u32 %v2329, %v2330
        %v2335 = vmul.u32 %v2329, %v2331
        %v2336 = vshll.u32 %v2333, 16
        %v2337 = vshrl.u32 %v2333, 16
        %v2338 = vshll.u32 %v2334, 16
        %v2339 = vshrl.u32 %v2334, 16
        %vm2340 = vc.u32 %v2332, %v2336
        %v2341 = vsel %vm2340, 1, 0
        %v2342 = vadd.s32 %v2332, %v2336
        %v2343 = vadd.s32 %v2335, %v2341
        %vm2344 = vc.u32 %v2342, %v2338
        %v2345 = vsel %vm2344, 1, 0
        %v2346 = vadd.s32 %v2342, %v2338
        %v2347 = vadd.s32 %v2343, %v2345
        %v2348 = vadd.s32 %v2347, %v2337
        %v2349 = vadd.s32 %v2348, %v2339
        %v2350 = vand.u32 %v2327, 65535
        %v2351 = vshrl.u32 %v2327, 16
        %v2352 = vand.u32 %v2322, 65535
        %v2353 = vshrl.u32 %v2322, 16
        %v2354 = vmul.u32 %v2350, %v2352
        %v2355 = vmul.u32 %v2350, %v2353
        %v2356 = vmul.u32 %v2351, %v2352
        %v2357 = vmul.u32 %v2351, %v2353
        %v2358 = vshll.u32 %v2355, 16
        %v2359 = vshrl.u32 %v2355, 16
        %v2360 = vshll.u32 %v2356, 16
        %v2361 = vshrl.u32 %v2356, 16
        %vm2362 = vc.u32 %v2354, %v2358
        %v2363 = vsel %vm2362, 1, 0
        %v2364 = vadd.s32 %v2354, %v2358
        %v2365 = vadd.s32 %v2357, %v2363
        %vm2366 = vc.u32 %v2364, %v2360
        %v2367 = vsel %vm2366, 1, 0
        %v2368 = vadd.s32 %v2364, %v2360
        %v2369 = vadd.s32 %v2365, %v2367
        %v2370 = vadd.s32 %v2369, %v2359
        %v2371 = vadd.s32 %v2370, %v2361
        %v2372 = vmul.u32 %v2327, %v2318
        %v2373 = vadd.s32 %v2349, %v2368
        %vm2374 = vc.u32 %v2349, %v2368
        %v2375 = vadd.s32 %v2371, 1
        %v2376 = vsel %vm2374, %v2375, %v2371
        %v2377 = vadd.s32 %v2372, %v2376
        %v2378 = vadd.s32 %v2377, 536870912
        %v2379 = vshrl.u32 %v2378, 30
        %v2380 = vshll.u32 %v2379, 30
        %v2381 = vsub.s32 %v2377, %v2380
        %vm2382 = vcmp.lt.s32.totalorder %v2381, 0
        %v2383 = vsub.s32 0, %v2381
        %v2384 = vsel %vm2382, %v2383, %v2381
        %v2385 = vclz %v2384
        %v2386 = vsub.s32 %v2385, 2
        %vm2387 = vcmp.gt.s32.totalorder 0, %v2386
        %v2388 = vsel %vm2387, 0, %v2386
        %v2389 = vsub.s32 32, %v2388
        %v2390 = vshll.u32 %v2381, %v2388
        %v2391 = vshrl.u32 %v2373, %v2389
        %v2392 = vor.u32 %v2390, %v2391
        %v2393 = vsub.s32 4294967266, %v2388
        %v2394 = vadd.s32 %v2393, 127
        %v2395 = vshll.u32 %v2394, 23
        %v2396 = vor.u32 4788187, %v2395
        %v2397 = vand.u32 2147483647, %v2396
        %v2399 = vcvt.s32.f32 %v2392
        %v2400 = vmul.f32 %v2399, %v2397
        %v2401 = vxor.u32 %v2400, 2147483648
        %v2402 = vsel %vm2281, %v2401, %v2400
        %v2403 = vsub.s32 4, %v2379
        %v2404 = vsel %vm2281, %v2403, %v2379
        %v2405 = vsel %vm2280, %v273, %v2402
        %v2406 = vsel %vm2280, 0, %v2404
        %v2407 = vmul.f32 %v2405, %v2405
        %v2408 = vmul.f32 %v2407, -0.001358992
        %v2409 = vadd.f32 %v2408, 0.041655596
        %v2410 = vmul.f32 %v2407, %v2409
        %v2411 = vadd.f32 %v2410, -0.4999988
        %v2412 = vmul.f32 %v2407, %v2411
        %v2413 = vadd.f32 1.0, %v2412
        %v2414 = vmul.f32 %v2405, %v2405
        %v2415 = vmul.f32 %v2414, -0.00019511016
        %v2416 = vadd.f32 %v2415, 0.008332121
        %v2417 = vmul.f32 %v2414, %v2416
        %v2418 = vadd.f32 %v2417, -0.16666654
        %v2419 = vmul.f32 %v2414, %v2418
        %v2420 = vadd.f32 %v2419, 1.0
        %v2421 = vmul.f32 %v2420, %v2405
        %vm2422 = vweird.f32 %v273
        %v2423 = vand.u32 %v2406, 3
        %vm2424 = vcmp.lt.s32.totalorder %v2423, 2
        %vm2425 = vcmp.eq.s32.totalorder %v2423, 0
        %v2426 = vxor.u32 %v2421, 2147483648
        %v2427 = vsel %vm2425, %v2413, %v2426
        %vm2428 = vcmp.eq.s32.totalorder %v2423, 2
        %v2429 = vxor.u32 %v2413, 2147483648
        %v2430 = vsel %vm2428, %v2429, %v2421
        %v2431 = vsel %vm2424, %v2427, %v2430
        %v2432 = vsel %vm2422, nan, %v2431
        %v2433 = vand.u32 2147483647, %v274
        %vm2434 = vcmp.le.f32.partialorder %v2433, 0.7853982
        %vm2435 = vcmp.lt.s32.totalorder %v274, 0
        %v2436 = vand.u32 %v274, 2139095040
        %v2437 = vshrl.u32 %v2436, 23
        %v2438 = vsub.s32 %v2437, 127
        %v2439 = vand.u32 2147483647, %v274
        %v2440 = vand.u32 %v2439, 8388607
        %v2441 = vor.u32 %v2440, 8388608
        %v2442 = vsub.s32 0, %v2441
        %v2443 = vadd.s32 %v2438, 1
        %vm2444 = vcmp.gt.s32.totalorder %v2443, 0
        %v2445 = vsel %vm2444, %v2443, 0
        %v2446 = vshrl.u32 %v2445, 5
        %v2447 = vand.u32 %v2445, 31
        %v2448 = vsub.s32 32, %v2447
        %v2449 = vshrl.u32 683565275, %v2448
        %v2450 = vshll.u32 683565275, %v2447
        %v2451 = vshrl.u32 2475754826, %v2448
        %v2452 = vor.u32 %v2450, %v2451
        %v2453 = vshll.u32 2475754826, %v2447
        %v2454 = vshrl.u32 2131351028, %v2448
        %v2455 = vor.u32 %v2453, %v2454
        %v2456 = vshll.u32 2131351028, %v2447
        %v2457 = vshrl.u32 2102212464, %v2448
        %v2458 = vor.u32 %v2456, %v2457
        %v2459 = vshll.u32 2102212464, %v2447
        %v2460 = vshrl.u32 920167782, %v2448
        %v2461 = vor.u32 %v2459, %v2460
        %v2462 = vshll.u32 920167782, %v2447
        %v2463 = vshrl.u32 1326507024, %v2448
        %v2464 = vor.u32 %v2462, %v2463
        %vm2465 = vcmp.lt.s32.totalorder %v2446, 1
        %vm2466 = vcmp.lt.s32.totalorder %v2446, 2
        %vm2467 = vcmp.lt.s32.totalorder %v2446, 3
        %vm2468 = vcmp.lt.s32.totalorder %v2446, 4
        %v2469 = vsel %vm2465, %v2449, %v2452
        %v2470 = vsel %vm2468, %v2458, 2102212464
        %v2471 = vsel %vm2467, %v2455, %v2470
        %v2472 = vsel %vm2466, %v2469, %v2471
        %v2473 = vsel %vm2465, %v2452, %v2455
        %v2474 = vsel %vm2468, %v2461, 920167782
        %v2475 = vsel %vm2467, %v2458, %v2474
        %v2476 = vsel %vm2466, %v2473, %v2475
        %v2477 = vsel %vm2465, %v2455, %v2458
        %v2478 = vsel %vm2468, %v2464, 1326507024
        %v2479 = vsel %vm2467, %v2461, %v2478
        %v2480 = vsel %vm2466, %v2477, %v2479
        %v2481 = vshll.u32 %v2441, 8
        %v2482 = vand.u32 %v2481, 65535
        %v2483 = vshrl.u32 %v2481, 16
        %v2484 = vand.u32 %v2480, 65535
        %v2485 = vshrl.u32 %v2480, 16
        %v2486 = vmul.u32 %v2482, %v2484
        %v2487 = vmul.u32 %v2482, %v2485
        %v2488 = vmul.u32 %v2483, %v2484
        %v2489 = vmul.u32 %v2483, %v2485
        %v2490 = vshll.u32 %v2487, 16
        %v2491 = vshrl.u32 %v2487, 16
        %v2492 = vshll.u32 %v2488, 16
        %v2493 = vshrl.u32 %v2488, 16
        %vm2494 = vc.u32 %v2486, %v2490
        %v2495 = vsel %vm2494, 1, 0
        %v2496 = vadd.s32 %v2486, %v2490
        %v2497 = vadd.s32 %v2489, %v2495
        %vm2498 = vc.u32 %v2496, %v2492
        %v2499 = vsel %vm2498, 1, 0
        %v2500 = vadd.s32 %v2496, %v2492
        %v2501 = vadd.s32 %v2497, %v2499
        %v2502 = vadd.s32 %v2501, %v2491
        %v2503 = vadd.s32 %v2502, %v2493
        %v2504 = vand.u32 %v2481, 65535
        %v2505 = vshrl.u32 %v2481, 16
        %v2506 = vand.u32 %v2476, 65535
        %v2507 = vshrl.u32 %v2476, 16
        %v2508 = vmul.u32 %v2504, %v2506
        %v2509 = vmul.u32 %v2504, %v2507
        %v2510 = vmul.u32 %v2505, %v2506
        %v2511 = vmul.u32 %v2505, %v2507
        %v2512 = vshll.u32 %v2509, 16
        %v2513 = vshrl.u32 %v2509, 16
        %v2514 = vshll.u32 %v2510, 16
        %v2515 = vshrl.u32 %v2510, 16
        %vm2516 = vc.u32 %v2508, %v2512
        %v2517 = vsel %vm2516, 1, 0
        %v2518 = vadd.s32 %v2508, %v2512
        %v2519 = vadd.s32 %v2511, %v2517
        %vm2520 = vc.u32 %v2518, %v2514
        %v2521 = vsel %vm2520, 1, 0
        %v2522 = vadd.s32 %v2518, %v2514
        %v2523 = vadd.s32 %v2519, %v2521
        %v2524 = vadd.s32 %v2523, %v2513
        %v2525 = vadd.s32 %v2524, %v2515
        %v2526 = vmul.u32 %v2481, %v2472
        %v2527 = vadd.s32 %v2503, %v2522
        %vm2528 = vc.u32 %v2503, %v2522
        %v2529 = vadd.s32 %v2525, 1
        %v2530 = vsel %vm2528, %v2529, %v2525
        %v2531 = vadd.s32 %v2526, %v2530
        %v2532 = vadd.s32 %v2531, 536870912
        %v2533 = vshrl.u32 %v2532, 30
        %v2534 = vshll.u32 %v2533, 30
        %v2535 = vsub.s32 %v2531, %v2534
        %vm2536 = vcmp.lt.s32.totalorder %v2535, 0
        %v2537 = vsub.s32 0, %v2535
        %v2538 = vsel %vm2536, %v2537, %v2535
        %v2539 = vclz %v2538
        %v2540 = vsub.s32 %v2539, 2
        %vm2541 = vcmp.gt.s32.totalorder 0, %v2540
        %v2542 = vsel %vm2541, 0, %v2540
        %v2543 = vsub.s32 32, %v2542
        %v2544 = vshll.u32 %v2535, %v2542
        %v2545 = vshrl.u32 %v2527, %v2543
        %v2546 = vor.u32 %v2544, %v2545
        %v2547 = vsub.s32 4294967266, %v2542
        %v2548 = vadd.s32 %v2547, 127
        %v2549 = vshll.u32 %v2548, 23
        %v2550 = vor.u32 4788187, %v2549
        %v2551 = vand.u32 2147483647, %v2550
        %v2553 = vcvt.s32.f32 %v2546
        %v2554 = vmul.f32 %v2553, %v2551
        %v2555 = vxor.u32 %v2554, 2147483648
        %v2556 = vsel %vm2435, %v2555, %v2554
        %v2557 = vsub.s32 4, %v2533
        %v2558 = vsel %vm2435, %v2557, %v2533
        %v2559 = vsel %vm2434, %v274, %v2556
        %v2560 = vsel %vm2434, 0, %v2558
        %v2561 = vmul.f32 %v2559, %v2559
        %v2562 = vmul.f32 %v2561, -0.001358992
        %v2563 = vadd.f32 %v2562, 0.041655596
        %v2564 = vmul.f32 %v2561, %v2563
        %v2565 = vadd.f32 %v2564, -0.4999988
        %v2566 = vmul.f32 %v2561, %v2565
        %v2567 = vadd.f32 1.0, %v2566
        %v2568 = vmul.f32 %v2559, %v2559
        %v2569 = vmul.f32 %v2568, -0.00019511016
        %v2570 = vadd.f32 %v2569, 0.008332121
        %v2571 = vmul.f32 %v2568, %v2570
        %v2572 = vadd.f32 %v2571, -0.16666654
        %v2573 = vmul.f32 %v2568, %v2572
        %v2574 = vadd.f32 %v2573, 1.0
        %v2575 = vmul.f32 %v2574, %v2559
        %vm2576 = vweird.f32 %v274
        %v2577 = vand.u32 %v2560, 3
        %vm2578 = vcmp.lt.s32.totalorder %v2577, 2
        %vm2579 = vcmp.eq.s32.totalorder %v2577, 0
        %v2580 = vxor.u32 %v2575, 2147483648
        %v2581 = vsel %vm2579, %v2567, %v2580
        %vm2582 = vcmp.eq.s32.totalorder %v2577, 2
        %v2583 = vxor.u32 %v2567, 2147483648
        %v2584 = vsel %vm2582, %v2583, %v2575
        %v2585 = vsel %vm2578, %v2581, %v2584
        %v2586 = vsel %vm2576, nan, %v2585
        %v2587 = vand.u32 2147483647, %v275
        %vm2588 = vcmp.le.f32.partialorder %v2587, 0.7853982
        %vm2589 = vcmp.lt.s32.totalorder %v275, 0
        %v2590 = vand.u32 %v275, 2139095040
        %v2591 = vshrl.u32 %v2590, 23
        %v2592 = vsub.s32 %v2591, 127
        %v2593 = vand.u32 2147483647, %v275
        %v2594 = vand.u32 %v2593, 8388607
        %v2595 = vor.u32 %v2594, 8388608
        %v2596 = vsub.s32 0, %v2595
        %v2597 = vadd.s32 %v2592, 1
        %vm2598 = vcmp.gt.s32.totalorder %v2597, 0
        %v2599 = vsel %vm2598, %v2597, 0
        %v2600 = vshrl.u32 %v2599, 5
        %v2601 = vand.u32 %v2599, 31
        %v2602 = vsub.s32 32, %v2601
        %v2603 = vshrl.u32 683565275, %v2602
        %v2604 = vshll.u32 683565275, %v2601
        %v2605 = vshrl.u32 2475754826, %v2602
        %v2606 = vor.u32 %v2604, %v2605
        %v2607 = vshll.u32 2475754826, %v2601
        %v2608 = vshrl.u32 2131351028, %v2602
        %v2609 = vor.u32 %v2607, %v2608
        %v2610 = vshll.u32 2131351028, %v2601
        %v2611 = vshrl.u32 2102212464, %v2602
        %v2612 = vor.u32 %v2610, %v2611
        %v2613 = vshll.u32 2102212464, %v2601
        %v2614 = vshrl.u32 920167782, %v2602
        %v2615 = vor.u32 %v2613, %v2614
        %v2616 = vshll.u32 920167782, %v2601
        %v2617 = vshrl.u32 1326507024, %v2602
        %v2618 = vor.u32 %v2616, %v2617
        %vm2619 = vcmp.lt.s32.totalorder %v2600, 1
        %vm2620 = vcmp.lt.s32.totalorder %v2600, 2
        %vm2621 = vcmp.lt.s32.totalorder %v2600, 3
        %vm2622 = vcmp.lt.s32.totalorder %v2600, 4
        %v2623 = vsel %vm2619, %v2603, %v2606
        %v2624 = vsel %vm2622, %v2612, 2102212464
        %v2625 = vsel %vm2621, %v2609, %v2624
        %v2626 = vsel %vm2620, %v2623, %v2625
        %v2627 = vsel %vm2619, %v2606, %v2609
        %v2628 = vsel %vm2622, %v2615, 920167782
        %v2629 = vsel %vm2621, %v2612, %v2628
        %v2630 = vsel %vm2620, %v2627, %v2629
        %v2631 = vsel %vm2619, %v2609, %v2612
        %v2632 = vsel %vm2622, %v2618, 1326507024
        %v2633 = vsel %vm2621, %v2615, %v2632
        %v2634 = vsel %vm2620, %v2631, %v2633
        %v2635 = vshll.u32 %v2595, 8
        %v2636 = vand.u32 %v2635, 65535
        %v2637 = vshrl.u32 %v2635, 16
        %v2638 = vand.u32 %v2634, 65535
        %v2639 = vshrl.u32 %v2634, 16
        %v2640 = vmul.u32 %v2636, %v2638
        %v2641 = vmul.u32 %v2636, %v2639
        %v2642 = vmul.u32 %v2637, %v2638
        %v2643 = vmul.u32 %v2637, %v2639
        %v2644 = vshll.u32 %v2641, 16
        %v2645 = vshrl.u32 %v2641, 16
        %v2646 = vshll.u32 %v2642, 16
        %v2647 = vshrl.u32 %v2642, 16
        %vm2648 = vc.u32 %v2640, %v2644
        %v2649 = vsel %vm2648, 1, 0
        %v2650 = vadd.s32 %v2640, %v2644
        %v2651 = vadd.s32 %v2643, %v2649
        %vm2652 = vc.u32 %v2650, %v2646
        %v2653 = vsel %vm2652, 1, 0
        %v2654 = vadd.s32 %v2650, %v2646
        %v2655 = vadd.s32 %v2651, %v2653
        %v2656 = vadd.s32 %v2655, %v2645
        %v2657 = vadd.s32 %v2656, %v2647
        %v2658 = vand.u32 %v2635, 65535
        %v2659 = vshrl.u32 %v2635, 16
        %v2660 = vand.u32 %v2630, 65535
        %v2661 = vshrl.u32 %v2630, 16
        %v2662 = vmul.u32 %v2658, %v2660
        %v2663 = vmul.u32 %v2658, %v2661
        %v2664 = vmul.u32 %v2659, %v2660
        %v2665 = vmul.u32 %v2659, %v2661
        %v2666 = vshll.u32 %v2663, 16
        %v2667 = vshrl.u32 %v2663, 16
        %v2668 = vshll.u32 %v2664, 16
        %v2669 = vshrl.u32 %v2664, 16
        %vm2670 = vc.u32 %v2662, %v2666
        %v2671 = vsel %vm2670, 1, 0
        %v2672 = vadd.s32 %v2662, %v2666
        %v2673 = vadd.s32 %v2665, %v2671
        %vm2674 = vc.u32 %v2672, %v2668
        %v2675 = vsel %vm2674, 1, 0
        %v2676 = vadd.s32 %v2672, %v2668
        %v2677 = vadd.s32 %v2673, %v2675
        %v2678 = vadd.s32 %v2677, %v2667
        %v2679 = vadd.s32 %v2678, %v2669
        %v2680 = vmul.u32 %v2635, %v2626
        %v2681 = vadd.s32 %v2657, %v2676
        %vm2682 = vc.u32 %v2657, %v2676
        %v2683 = vadd.s32 %v2679, 1
        %v2684 = vsel %vm2682, %v2683, %v2679
        %v2685 = vadd.s32 %v2680, %v2684
        %v2686 = vadd.s32 %v2685, 536870912
        %v2687 = vshrl.u32 %v2686, 30
        %v2688 = vshll.u32 %v2687, 30
        %v2689 = vsub.s32 %v2685, %v2688
        %vm2690 = vcmp.lt.s32.totalorder %v2689, 0
        %v2691 = vsub.s32 0, %v2689
        %v2692 = vsel %vm2690, %v2691, %v2689
        %v2693 = vclz %v2692
        %v2694 = vsub.s32 %v2693, 2
        %vm2695 = vcmp.gt.s32.totalorder 0, %v2694
        %v2696 = vsel %vm2695, 0, %v2694
        %v2697 = vsub.s32 32, %v2696
        %v2698 = vshll.u32 %v2689, %v2696
        %v2699 = vshrl.u32 %v2681, %v2697
        %v2700 = vor.u32 %v2698, %v2699
        %v2701 = vsub.s32 4294967266, %v2696
        %v2702 = vadd.s32 %v2701, 127
        %v2703 = vshll.u32 %v2702, 23
        %v2704 = vor.u32 4788187, %v2703
        %v2705 = vand.u32 2147483647, %v2704
        %v2707 = vcvt.s32.f32 %v2700
        %v2708 = vmul.f32 %v2707, %v2705
        %v2709 = vxor.u32 %v2708, 2147483648
        %v2710 = vsel %vm2589, %v2709, %v2708
        %v2711 = vsub.s32 4, %v2687
        %v2712 = vsel %vm2589, %v2711, %v2687
        %v2713 = vsel %vm2588, %v275, %v2710
        %v2714 = vsel %vm2588, 0, %v2712
        %v2715 = vmul.f32 %v2713, %v2713
        %v2716 = vmul.f32 %v2715, -0.001358992
        %v2717 = vadd.f32 %v2716, 0.041655596
        %v2718 = vmul.f32 %v2715, %v2717
        %v2719 = vadd.f32 %v2718, -0.4999988
        %v2720 = vmul.f32 %v2715, %v2719
        %v2721 = vadd.f32 1.0, %v2720
        %v2722 = vmul.f32 %v2713, %v2713
        %v2723 = vmul.f32 %v2722, -0.00019511016
        %v2724 = vadd.f32 %v2723, 0.008332121
        %v2725 = vmul.f32 %v2722, %v2724
        %v2726 = vadd.f32 %v2725, -0.16666654
        %v2727 = vmul.f32 %v2722, %v2726
        %v2728 = vadd.f32 %v2727, 1.0
        %v2729 = vmul.f32 %v2728, %v2713
        %vm2730 = vweird.f32 %v275
        %v2731 = vand.u32 %v2714, 3
        %vm2732 = vcmp.lt.s32.totalorder %v2731, 2
        %vm2733 = vcmp.eq.s32.totalorder %v2731, 0
        %v2734 = vxor.u32 %v2729, 2147483648
        %v2735 = vsel %vm2733, %v2721, %v2734
        %vm2736 = vcmp.eq.s32.totalorder %v2731, 2
        %v2737 = vxor.u32 %v2721, 2147483648
        %v2738 = vsel %vm2736, %v2737, %v2729
        %v2739 = vsel %vm2732, %v2735, %v2738
        %v2740 = vsel %vm2730, nan, %v2739
        %v2741 = vand.u32 2147483647, %v276
        %vm2742 = vcmp.le.f32.partialorder %v2741, 0.7853982
        %vm2743 = vcmp.lt.s32.totalorder %v276, 0
        %v2744 = vand.u32 %v276, 2139095040
        %v2745 = vshrl.u32 %v2744, 23
        %v2746 = vsub.s32 %v2745, 127
        %v2747 = vand.u32 2147483647, %v276
        %v2748 = vand.u32 %v2747, 8388607
        %v2749 = vor.u32 %v2748, 8388608
        %v2750 = vsub.s32 0, %v2749
        %v2751 = vadd.s32 %v2746, 1
        %vm2752 = vcmp.gt.s32.totalorder %v2751, 0
        %v2753 = vsel %vm2752, %v2751, 0
        %v2754 = vshrl.u32 %v2753, 5
        %v2755 = vand.u32 %v2753, 31
        %v2756 = vsub.s32 32, %v2755
        %v2757 = vshrl.u32 683565275, %v2756
        %v2758 = vshll.u32 683565275, %v2755
        %v2759 = vshrl.u32 2475754826, %v2756
        %v2760 = vor.u32 %v2758, %v2759
        %v2761 = vshll.u32 2475754826, %v2755
        %v2762 = vshrl.u32 2131351028, %v2756
        %v2763 = vor.u32 %v2761, %v2762
        %v2764 = vshll.u32 2131351028, %v2755
        %v2765 = vshrl.u32 2102212464, %v2756
        %v2766 = vor.u32 %v2764, %v2765
        %v2767 = vshll.u32 2102212464, %v2755
        %v2768 = vshrl.u32 920167782, %v2756
        %v2769 = vor.u32 %v2767, %v2768
        %v2770 = vshll.u32 920167782, %v2755
        %v2771 = vshrl.u32 1326507024, %v2756
        %v2772 = vor.u32 %v2770, %v2771
        %vm2773 = vcmp.lt.s32.totalorder %v2754, 1
        %vm2774 = vcmp.lt.s32.totalorder %v2754, 2
        %vm2775 = vcmp.lt.s32.totalorder %v2754, 3
        %vm2776 = vcmp.lt.s32.totalorder %v2754, 4
        %v2777 = vsel %vm2773, %v2757, %v2760
        %v2778 = vsel %vm2776, %v2766, 2102212464
        %v2779 = vsel %vm2775, %v2763, %v2778
        %v2780 = vsel %vm2774, %v2777, %v2779
        %v2781 = vsel %vm2773, %v2760, %v2763
        %v2782 = vsel %vm2776, %v2769, 920167782
        %v2783 = vsel %vm2775, %v2766, %v2782
        %v2784 = vsel %vm2774, %v2781, %v2783
        %v2785 = vsel %vm2773, %v2763, %v2766
        %v2786 = vsel %vm2776, %v2772, 1326507024
        %v2787 = vsel %vm2775, %v2769, %v2786
        %v2788 = vsel %vm2774, %v2785, %v2787
        %v2789 = vshll.u32 %v2749, 8
        %v2790 = vand.u32 %v2789, 65535
        %v2791 = vshrl.u32 %v2789, 16
        %v2792 = vand.u32 %v2788, 65535
        %v2793 = vshrl.u32 %v2788, 16
        %v2794 = vmul.u32 %v2790, %v2792
        %v2795 = vmul.u32 %v2790, %v2793
        %v2796 = vmul.u32 %v2791, %v2792
        %v2797 = vmul.u32 %v2791, %v2793
        %v2798 = vshll.u32 %v2795, 16
        %v2799 = vshrl.u32 %v2795, 16
        %v2800 = vshll.u32 %v2796, 16
        %v2801 = vshrl.u32 %v2796, 16
        %vm2802 = vc.u32 %v2794, %v2798
        %v2803 = vsel %vm2802, 1, 0
        %v2804 = vadd.s32 %v2794, %v2798
        %v2805 = vadd.s32 %v2797, %v2803
        %vm2806 = vc.u32 %v2804, %v2800
        %v2807 = vsel %vm2806, 1, 0
        %v2808 = vadd.s32 %v2804, %v2800
        %v2809 = vadd.s32 %v2805, %v2807
        %v2810 = vadd.s32 %v2809, %v2799
        %v2811 = vadd.s32 %v2810, %v2801
        %v2812 = vand.u32 %v2789, 65535
        %v2813 = vshrl.u32 %v2789, 16
        %v2814 = vand.u32 %v2784, 65535
        %v2815 = vshrl.u32 %v2784, 16
        %v2816 = vmul.u32 %v2812, %v2814
        %v2817 = vmul.u32 %v2812, %v2815
        %v2818 = vmul.u32 %v2813, %v2814
        %v2819 = vmul.u32 %v2813, %v2815
        %v2820 = vshll.u32 %v2817, 16
        %v2821 = vshrl.u32 %v2817, 16
        %v2822 = vshll.u32 %v2818, 16
        %v2823 = vshrl.u32 %v2818, 16
        %vm2824 = vc.u32 %v2816, %v2820
        %v2825 = vsel %vm2824, 1, 0
        %v2826 = vadd.s32 %v2816, %v2820
        %v2827 = vadd.s32 %v2819, %v2825
        %vm2828 = vc.u32 %v2826, %v2822
        %v2829 = vsel %vm2828, 1, 0
        %v2830 = vadd.s32 %v2826, %v2822
        %v2831 = vadd.s32 %v2827, %v2829
        %v2832 = vadd.s32 %v2831, %v2821
        %v2833 = vadd.s32 %v2832, %v2823
        %v2834 = vmul.u32 %v2789, %v2780
        %v2835 = vadd.s32 %v2811, %v2830
        %vm2836 = vc.u32 %v2811, %v2830
        %v2837 = vadd.s32 %v2833, 1
        %v2838 = vsel %vm2836, %v2837, %v2833
        %v2839 = vadd.s32 %v2834, %v2838
        %v2840 = vadd.s32 %v2839, 536870912
        %v2841 = vshrl.u32 %v2840, 30
        %v2842 = vshll.u32 %v2841, 30
        %v2843 = vsub.s32 %v2839, %v2842
        %vm2844 = vcmp.lt.s32.totalorder %v2843, 0
        %v2845 = vsub.s32 0, %v2843
        %v2846 = vsel %vm2844, %v2845, %v2843
        %v2847 = vclz %v2846
        %v2848 = vsub.s32 %v2847, 2
        %vm2849 = vcmp.gt.s32.totalorder 0, %v2848
        %v2850 = vsel %vm2849, 0, %v2848
        %v2851 = vsub.s32 32, %v2850
        %v2852 = vshll.u32 %v2843, %v2850
        %v2853 = vshrl.u32 %v2835, %v2851
        %v2854 = vor.u32 %v2852, %v2853
        %v2855 = vsub.s32 4294967266, %v2850
        %v2856 = vadd.s32 %v2855, 127
        %v2857 = vshll.u32 %v2856, 23
        %v2858 = vor.u32 4788187, %v2857
        %v2859 = vand.u32 2147483647, %v2858
        %v2861 = vcvt.s32.f32 %v2854
        %v2862 = vmul.f32 %v2861, %v2859
        %v2863 = vxor.u32 %v2862, 2147483648
        %v2864 = vsel %vm2743, %v2863, %v2862
        %v2865 = vsub.s32 4, %v2841
        %v2866 = vsel %vm2743, %v2865, %v2841
        %v2867 = vsel %vm2742, %v276, %v2864
        %v2868 = vsel %vm2742, 0, %v2866
        %v2869 = vmul.f32 %v2867, %v2867
        %v2870 = vmul.f32 %v2869, -0.001358992
        %v2871 = vadd.f32 %v2870, 0.041655596
        %v2872 = vmul.f32 %v2869, %v2871
        %v2873 = vadd.f32 %v2872, -0.4999988
        %v2874 = vmul.f32 %v2869, %v2873
        %v2875 = vadd.f32 1.0, %v2874
        %v2876 = vmul.f32 %v2867, %v2867
        %v2877 = vmul.f32 %v2876, -0.00019511016
        %v2878 = vadd.f32 %v2877, 0.008332121
        %v2879 = vmul.f32 %v2876, %v2878
        %v2880 = vadd.f32 %v2879, -0.16666654
        %v2881 = vmul.f32 %v2876, %v2880
        %v2882 = vadd.f32 %v2881, 1.0
        %v2883 = vmul.f32 %v2882, %v2867
        %vm2884 = vweird.f32 %v276
        %v2885 = vand.u32 %v2868, 3
        %vm2886 = vcmp.lt.s32.totalorder %v2885, 2
        %vm2887 = vcmp.eq.s32.totalorder %v2885, 0
        %v2888 = vxor.u32 %v2883, 2147483648
        %v2889 = vsel %vm2887, %v2875, %v2888
        %vm2890 = vcmp.eq.s32.totalorder %v2885, 2
        %v2891 = vxor.u32 %v2875, 2147483648
        %v2892 = vsel %vm2890, %v2891, %v2883
        %v2893 = vsel %vm2886, %v2889, %v2892
        %v2894 = vsel %vm2884, nan, %v2893
        %v2895 = vmul.f32 %v243, %v430
        %v2896 = vmul.f32 %v244, %v584
        %v2897 = vmul.f32 %v245, %v738
        %v2898 = vmul.f32 %v246, %v892
        %v2899 = vmul.f32 %v247, %v1046
        %v2900 = vmul.f32 %v248, %v1200
        %v2901 = vmul.f32 %v249, %v1354
        %v2902 = vmul.f32 %v250, %v1508
        %v2903 = vmul.f32 %v251, %v1662
        %v2904 = vmul.f32 %v252, %v1816
        %v2905 = vmul.f32 %v253, %v1970
        %v2906 = vmul.f32 %v254, %v2124
        %v2907 = vmul.f32 %v255, %v2278
        %v2908 = vmul.f32 %v256, %v2432
        %v2909 = vmul.f32 %v257, %v2586
        %v2910 = vmul.f32 %v258, %v2740
        %v2911 = vmul.f32 %v259, %v2894
        %v2912 = vand.u32 2147483647, %v260
        %vm2913 = vcmp.le.f32.partialorder %v2912, 0.7853982
        %vm2914 = vcmp.lt.s32.totalorder %v260, 0
        %v2915 = vand.u32 %v260, 2139095040
        %v2916 = vshrl.u32 %v2915, 23
        %v2917 = vsub.s32 %v2916, 127
        %v2918 = vand.u32 2147483647, %v260
        %v2919 = vand.u32 %v2918, 8388607
        %v2920 = vor.u32 %v2919, 8388608
        %v2921 = vsub.s32 0, %v2920
        %v2922 = vadd.s32 %v2917, 1
        %vm2923 = vcmp.gt.s32.totalorder %v2922, 0
        %v2924 = vsel %vm2923, %v2922, 0
        %v2925 = vshrl.u32 %v2924, 5
        %v2926 = vand.u32 %v2924, 31
        %v2927 = vsub.s32 32, %v2926
        %v2928 = vshrl.u32 683565275, %v2927
        %v2929 = vshll.u32 683565275, %v2926
        %v2930 = vshrl.u32 2475754826, %v2927
        %v2931 = vor.u32 %v2929, %v2930
        %v2932 = vshll.u32 2475754826, %v2926
        %v2933 = vshrl.u32 2131351028, %v2927
        %v2934 = vor.u32 %v2932, %v2933
        %v2935 = vshll.u32 2131351028, %v2926
        %v2936 = vshrl.u32 2102212464, %v2927
        %v2937 = vor.u32 %v2935, %v2936
        %v2938 = vshll.u32 2102212464, %v2926
        %v2939 = vshrl.u32 920167782, %v2927
        %v2940 = vor.u32 %v2938, %v2939
        %v2941 = vshll.u32 920167782, %v2926
        %v2942 = vshrl.u32 1326507024, %v2927
        %v2943 = vor.u32 %v2941, %v2942
        %vm2944 = vcmp.lt.s32.totalorder %v2925, 1
        %vm2945 = vcmp.lt.s32.totalorder %v2925, 2
        %vm2946 = vcmp.lt.s32.totalorder %v2925, 3
        %vm2947 = vcmp.lt.s32.totalorder %v2925, 4
        %v2948 = vsel %vm2944, %v2928, %v2931
        %v2949 = vsel %vm2947, %v2937, 2102212464
        %v2950 = vsel %vm2946, %v2934, %v2949
        %v2951 = vsel %vm2945, %v2948, %v2950
        %v2952 = vsel %vm2944, %v2931, %v2934
        %v2953 = vsel %vm2947, %v2940, 920167782
        %v2954 = vsel %vm2946, %v2937, %v2953
        %v2955 = vsel %vm2945, %v2952, %v2954
        %v2956 = vsel %vm2944, %v2934, %v2937
        %v2957 = vsel %vm2947, %v2943, 1326507024
        %v2958 = vsel %vm2946, %v2940, %v2957
        %v2959 = vsel %vm2945, %v2956, %v2958
        %v2960 = vshll.u32 %v2920, 8
        %v2961 = vand.u32 %v2960, 65535
        %v2962 = vshrl.u32 %v2960, 16
        %v2963 = vand.u32 %v2959, 65535
        %v2964 = vshrl.u32 %v2959, 16
        %v2965 = vmul.u32 %v2961, %v2963
        %v2966 = vmul.u32 %v2961, %v2964
        %v2967 = vmul.u32 %v2962, %v2963
        %v2968 = vmul.u32 %v2962, %v2964
        %v2969 = vshll.u32 %v2966, 16
        %v2970 = vshrl.u32 %v2966, 16
        %v2971 = vshll.u32 %v2967, 16
        %v2972 = vshrl.u32 %v2967, 16
        %vm2973 = vc.u32 %v2965, %v2969
        %v2974 = vsel %vm2973, 1, 0
        %v2975 = vadd.s32 %v2965, %v2969
        %v2976 = vadd.s32 %v2968, %v2974
        %vm2977 = vc.u32 %v2975, %v2971
        %v2978 = vsel %vm2977, 1, 0
        %v2979 = vadd.s32 %v2975, %v2971
        %v2980 = vadd.s32 %v2976, %v2978
        %v2981 = vadd.s32 %v2980, %v2970
        %v2982 = vadd.s32 %v2981, %v2972
        %v2983 = vand.u32 %v2960, 65535
        %v2984 = vshrl.u32 %v2960, 16
        %v2985 = vand.u32 %v2955, 65535
        %v2986 = vshrl.u32 %v2955, 16
        %v2987 = vmul.u32 %v2983, %v2985
        %v2988 = vmul.u32 %v2983, %v2986
        %v2989 = vmul.u32 %v2984, %v2985
        %v2990 = vmul.u32 %v2984, %v2986
        %v2991 = vshll.u32 %v2988, 16
        %v2992 = vshrl.u32 %v2988, 16
        %v2993 = vshll.u32 %v2989, 16
        %v2994 = vshrl.u32 %v2989, 16
        %vm2995 = vc.u32 %v2987, %v2991
        %v2996 = vsel %vm2995, 1, 0
        %v2997 = vadd.s32 %v2987, %v2991
        %v2998 = vadd.s32 %v2990, %v2996
        %vm2999 = vc.u32 %v2997, %v2993
        %v3000 = vsel %vm2999, 1, 0
        %v3001 = vadd.s32 %v2997, %v2993
        %v3002 = vadd.s32 %v2998, %v3000
        %v3003 = vadd.s32 %v3002, %v2992
        %v3004 = vadd.s32 %v3003, %v2994
        %v3005 = vmul.u32 %v2960, %v2951
        %v3006 = vadd.s32 %v2982, %v3001
        %vm3007 = vc.u32 %v2982, %v3001
        %v3008 = vadd.s32 %v3004, 1
        %v3009 = vsel %vm3007, %v3008, %v3004
        %v3010 = vadd.s32 %v3005, %v3009
        %v3011 = vadd.s32 %v3010, 536870912
        %v3012 = vshrl.u32 %v3011, 30
        %v3013 = vshll.u32 %v3012, 30
        %v3014 = vsub.s32 %v3010, %v3013
        %vm3015 = vcmp.lt.s32.totalorder %v3014, 0
        %v3016 = vsub.s32 0, %v3014
        %v3017 = vsel %vm3015, %v3016, %v3014
        %v3018 = vclz %v3017
        %v3019 = vsub.s32 %v3018, 2
        %vm3020 = vcmp.gt.s32.totalorder 0, %v3019
        %v3021 = vsel %vm3020, 0, %v3019
        %v3022 = vsub.s32 32, %v3021
        %v3023 = vshll.u32 %v3014, %v3021
        %v3024 = vshrl.u32 %v3006, %v3022
        %v3025 = vor.u32 %v3023, %v3024
        %v3026 = vsub.s32 4294967266, %v3021
        %v3027 = vadd.s32 %v3026, 127
        %v3028 = vshll.u32 %v3027, 23
        %v3029 = vor.u32 4788187, %v3028
        %v3030 = vand.u32 2147483647, %v3029
        %v3032 = vcvt.s32.f32 %v3025
        %v3033 = vmul.f32 %v3032, %v3030
        %v3034 = vxor.u32 %v3033, 2147483648
        %v3035 = vsel %vm2914, %v3034, %v3033
        %v3036 = vsub.s32 4, %v3012
        %v3037 = vsel %vm2914, %v3036, %v3012
        %v3038 = vsel %vm2913, %v260, %v3035
        %v3039 = vsel %vm2913, 0, %v3037
        %v3040 = vmul.f32 %v3038, %v3038
        %v3041 = vmul.f32 %v3040, -0.001358992
        %v3042 = vadd.f32 %v3041, 0.041655596
        %v3043 = vmul.f32 %v3040, %v3042
        %v3044 = vadd.f32 %v3043, -0.4999988
        %v3045 = vmul.f32 %v3040, %v3044
        %v3046 = vadd.f32 1.0, %v3045
        %v3047 = vmul.f32 %v3038, %v3038
        %v3048 = vmul.f32 %v3047, -0.00019511016
        %v3049 = vadd.f32 %v3048, 0.008332121
        %v3050 = vmul.f32 %v3047, %v3049
        %v3051 = vadd.f32 %v3050, -0.16666654
        %v3052 = vmul.f32 %v3047, %v3051
        %v3053 = vadd.f32 %v3052, 1.0
        %v3054 = vmul.f32 %v3053, %v3038
        %vm3055 = vweird.f32 %v260
        %v3056 = vadd.s32 %v3039, 3
        %v3057 = vand.u32 %v3056, 3
        %vm3058 = vcmp.lt.s32.totalorder %v3057, 2
        %vm3059 = vcmp.eq.s32.totalorder %v3057, 0
        %v3060 = vxor.u32 %v3054, 2147483648
        %v3061 = vsel %vm3059, %v3046, %v3060
        %vm3062 = vcmp.eq.s32.totalorder %v3057, 2
        %v3063 = vxor.u32 %v3046, 2147483648
        %v3064 = vsel %vm3062, %v3063, %v3054
        %v3065 = vsel %vm3058, %v3061, %v3064
        %v3066 = vsel %vm3055, nan, %v3065
        %v3067 = vand.u32 2147483647, %v261
        %vm3068 = vcmp.le.f32.partialorder %v3067, 0.7853982
        %vm3069 = vcmp.lt.s32.totalorder %v261, 0
        %v3070 = vand.u32 %v261, 2139095040
        %v3071 = vshrl.u32 %v3070, 23
        %v3072 = vsub.s32 %v3071, 127
        %v3073 = vand.u32 2147483647, %v261
        %v3074 = vand.u32 %v3073, 8388607
        %v3075 = vor.u32 %v3074, 8388608
        %v3076 = vsub.s32 0, %v3075
        %v3077 = vadd.s32 %v3072, 1
        %vm3078 = vcmp.gt.s32.totalorder %v3077, 0
        %v3079 = vsel %vm3078, %v3077, 0
        %v3080 = vshrl.u32 %v3079, 5
        %v3081 = vand.u32 %v3079, 31
        %v3082 = vsub.s32 32, %v3081
        %v3083 = vshrl.u32 683565275, %v3082
        %v3084 = vshll.u32 683565275, %v3081
        %v3085 = vshrl.u32 2475754826, %v3082
        %v3086 = vor.u32 %v3084, %v3085
        %v3087 = vshll.u32 2475754826, %v3081
        %v3088 = vshrl.u32 2131351028, %v3082
        %v3089 = vor.u32 %v3087, %v3088
        %v3090 = vshll.u32 2131351028, %v3081
        %v3091 = vshrl.u32 2102212464, %v3082
        %v3092 = vor.u32 %v3090, %v3091
        %v3093 = vshll.u32 2102212464, %v3081
        %v3094 = vshrl.u32 920167782, %v3082
        %v3095 = vor.u32 %v3093, %v3094
        %v3096 = vshll.u32 920167782, %v3081
        %v3097 = vshrl.u32 1326507024, %v3082
        %v3098 = vor.u32 %v3096, %v3097
        %vm3099 = vcmp.lt.s32.totalorder %v3080, 1
        %vm3100 = vcmp.lt.s32.totalorder %v3080, 2
        %vm3101 = vcmp.lt.s32.totalorder %v3080, 3
        %vm3102 = vcmp.lt.s32.totalorder %v3080, 4
        %v3103 = vsel %vm3099, %v3083, %v3086
        %v3104 = vsel %vm3102, %v3092, 2102212464
        %v3105 = vsel %vm3101, %v3089, %v3104
        %v3106 = vsel %vm3100, %v3103, %v3105
        %v3107 = vsel %vm3099, %v3086, %v3089
        %v3108 = vsel %vm3102, %v3095, 920167782
        %v3109 = vsel %vm3101, %v3092, %v3108
        %v3110 = vsel %vm3100, %v3107, %v3109
        %v3111 = vsel %vm3099, %v3089, %v3092
        %v3112 = vsel %vm3102, %v3098, 1326507024
        %v3113 = vsel %vm3101, %v3095, %v3112
        %v3114 = vsel %vm3100, %v3111, %v3113
        %v3115 = vshll.u32 %v3075, 8
        %v3116 = vand.u32 %v3115, 65535
        %v3117 = vshrl.u32 %v3115, 16
        %v3118 = vand.u32 %v3114, 65535
        %v3119 = vshrl.u32 %v3114, 16
        %v3120 = vmul.u32 %v3116, %v3118
        %v3121 = vmul.u32 %v3116, %v3119
        %v3122 = vmul.u32 %v3117, %v3118
        %v3123 = vmul.u32 %v3117, %v3119
        %v3124 = vshll.u32 %v3121, 16
        %v3125 = vshrl.u32 %v3121, 16
        %v3126 = vshll.u32 %v3122, 16
        %v3127 = vshrl.u32 %v3122, 16
        %vm3128 = vc.u32 %v3120, %v3124
        %v3129 = vsel %vm3128, 1, 0
        %v3130 = vadd.s32 %v3120, %v3124
        %v3131 = vadd.s32 %v3123, %v3129
        %vm3132 = vc.u32 %v3130, %v3126
        %v3133 = vsel %vm3132, 1, 0
        %v3134 = vadd.s32 %v3130, %v3126
        %v3135 = vadd.s32 %v3131, %v3133
        %v3136 = vadd.s32 %v3135, %v3125
        %v3137 = vadd.s32 %v3136, %v3127
        %v3138 = vand.u32 %v3115, 65535
        %v3139 = vshrl.u32 %v3115, 16
        %v3140 = vand.u32 %v3110, 65535
        %v3141 = vshrl.u32 %v3110, 16
        %v3142 = vmul.u32 %v3138, %v3140
        %v3143 = vmul.u32 %v3138, %v3141
        %v3144 = vmul.u32 %v3139, %v3140
        %v3145 = vmul.u32 %v3139, %v3141
        %v3146 = vshll.u32 %v3143, 16
        %v3147 = vshrl.u32 %v3143, 16
        %v3148 = vshll.u32 %v3144, 16
        %v3149 = vshrl.u32 %v3144, 16
        %vm3150 = vc.u32 %v3142, %v3146
        %v3151 = vsel %vm3150, 1, 0
        %v3152 = vadd.s32 %v3142, %v3146
        %v3153 = vadd.s32 %v3145, %v3151
        %vm3154 = vc.u32 %v3152, %v3148
        %v3155 = vsel %vm3154, 1, 0
        %v3156 = vadd.s32 %v3152, %v3148
        %v3157 = vadd.s32 %v3153, %v3155
        %v3158 = vadd.s32 %v3157, %v3147
        %v3159 = vadd.s32 %v3158, %v3149
        %v3160 = vmul.u32 %v3115, %v3106
        %v3161 = vadd.s32 %v3137, %v3156
        %vm3162 = vc.u32 %v3137, %v3156
        %v3163 = vadd.s32 %v3159, 1
        %v3164 = vsel %vm3162, %v3163, %v3159
        %v3165 = vadd.s32 %v3160, %v3164
        %v3166 = vadd.s32 %v3165, 536870912
        %v3167 = vshrl.u32 %v3166, 30
        %v3168 = vshll.u32 %v3167, 30
        %v3169 = vsub.s32 %v3165, %v3168
        %vm3170 = vcmp.lt.s32.totalorder %v3169, 0
        %v3171 = vsub.s32 0, %v3169
        %v3172 = vsel %vm3170, %v3171, %v3169
        %v3173 = vclz %v3172
        %v3174 = vsub.s32 %v3173, 2
        %vm3175 = vcmp.gt.s32.totalorder 0, %v3174
        %v3176 = vsel %vm3175, 0, %v3174
        %v3177 = vsub.s32 32, %v3176
        %v3178 = vshll.u32 %v3169, %v3176
        %v3179 = vshrl.u32 %v3161, %v3177
        %v3180 = vor.u32 %v3178, %v3179
        %v3181 = vsub.s32 4294967266, %v3176
        %v3182 = vadd.s32 %v3181, 127
        %v3183 = vshll.u32 %v3182, 23
        %v3184 = vor.u32 4788187, %v3183
        %v3185 = vand.u32 2147483647, %v3184
        %v3187 = vcvt.s32.f32 %v3180
        %v3188 = vmul.f32 %v3187, %v3185
        %v3189 = vxor.u32 %v3188, 2147483648
        %v3190 = vsel %vm3069, %v3189, %v3188
        %v3191 = vsub.s32 4, %v3167
        %v3192 = vsel %vm3069, %v3191, %v3167
        %v3193 = vsel %vm3068, %v261, %v3190
        %v3194 = vsel %vm3068, 0, %v3192
        %v3195 = vmul.f32 %v3193, %v3193
        %v3196 = vmul.f32 %v3195, -0.001358992
        %v3197 = vadd.f32 %v3196, 0.041655596
        %v3198 = vmul.f32 %v3195, %v3197
        %v3199 = vadd.f32 %v3198, -0.4999988
        %v3200 = vmul.f32 %v3195, %v3199
        %v3201 = vadd.f32 1.0, %v3200
        %v3202 = vmul.f32 %v3193, %v3193
        %v3203 = vmul.f32 %v3202, -0.00019511016
        %v3204 = vadd.f32 %v3203, 0.008332121
        %v3205 = vmul.f32 %v3202, %v3204
        %v3206 = vadd.f32 %v3205, -0.16666654
        %v3207 = vmul.f32 %v3202, %v3206
        %v3208 = vadd.f32 %v3207, 1.0
        %v3209 = vmul.f32 %v3208, %v3193
        %vm3210 = vweird.f32 %v261
        %v3211 = vadd.s32 %v3194, 3
        %v3212 = vand.u32 %v3211, 3
        %vm3213 = vcmp.lt.s32.totalorder %v3212, 2
        %vm3214 = vcmp.eq.s32.totalorder %v3212, 0
        %v3215 = vxor.u32 %v3209, 2147483648
        %v3216 = vsel %vm3214, %v3201, %v3215
        %vm3217 = vcmp.eq.s32.totalorder %v3212, 2
        %v3218 = vxor.u32 %v3201, 2147483648
        %v3219 = vsel %vm3217, %v3218, %v3209
        %v3220 = vsel %vm3213, %v3216, %v3219
        %v3221 = vsel %vm3210, nan, %v3220
        %v3222 = vand.u32 2147483647, %v262
        %vm3223 = vcmp.le.f32.partialorder %v3222, 0.7853982
        %vm3224 = vcmp.lt.s32.totalorder %v262, 0
        %v3225 = vand.u32 %v262, 2139095040
        %v3226 = vshrl.u32 %v3225, 23
        %v3227 = vsub.s32 %v3226, 127
        %v3228 = vand.u32 2147483647, %v262
        %v3229 = vand.u32 %v3228, 8388607
        %v3230 = vor.u32 %v3229, 8388608
        %v3231 = vsub.s32 0, %v3230
        %v3232 = vadd.s32 %v3227, 1
        %vm3233 = vcmp.gt.s32.totalorder %v3232, 0
        %v3234 = vsel %vm3233, %v3232, 0
        %v3235 = vshrl.u32 %v3234, 5
        %v3236 = vand.u32 %v3234, 31
        %v3237 = vsub.s32 32, %v3236
        %v3238 = vshrl.u32 683565275, %v3237
        %v3239 = vshll.u32 683565275, %v3236
        %v3240 = vshrl.u32 2475754826, %v3237
        %v3241 = vor.u32 %v3239, %v3240
        %v3242 = vshll.u32 2475754826, %v3236
        %v3243 = vshrl.u32 2131351028, %v3237
        %v3244 = vor.u32 %v3242, %v3243
        %v3245 = vshll.u32 2131351028, %v3236
        %v3246 = vshrl.u32 2102212464, %v3237
        %v3247 = vor.u32 %v3245, %v3246
        %v3248 = vshll.u32 2102212464, %v3236
        %v3249 = vshrl.u32 920167782, %v3237
        %v3250 = vor.u32 %v3248, %v3249
        %v3251 = vshll.u32 920167782, %v3236
        %v3252 = vshrl.u32 1326507024, %v3237
        %v3253 = vor.u32 %v3251, %v3252
        %vm3254 = vcmp.lt.s32.totalorder %v3235, 1
        %vm3255 = vcmp.lt.s32.totalorder %v3235, 2
        %vm3256 = vcmp.lt.s32.totalorder %v3235, 3
        %vm3257 = vcmp.lt.s32.totalorder %v3235, 4
        %v3258 = vsel %vm3254, %v3238, %v3241
        %v3259 = vsel %vm3257, %v3247, 2102212464
        %v3260 = vsel %vm3256, %v3244, %v3259
        %v3261 = vsel %vm3255, %v3258, %v3260
        %v3262 = vsel %vm3254, %v3241, %v3244
        %v3263 = vsel %vm3257, %v3250, 920167782
        %v3264 = vsel %vm3256, %v3247, %v3263
        %v3265 = vsel %vm3255, %v3262, %v3264
        %v3266 = vsel %vm3254, %v3244, %v3247
        %v3267 = vsel %vm3257, %v3253, 1326507024
        %v3268 = vsel %vm3256, %v3250, %v3267
        %v3269 = vsel %vm3255, %v3266, %v3268
        %v3270 = vshll.u32 %v3230, 8
        %v3271 = vand.u32 %v3270, 65535
        %v3272 = vshrl.u32 %v3270, 16
        %v3273 = vand.u32 %v3269, 65535
        %v3274 = vshrl.u32 %v3269, 16
        %v3275 = vmul.u32 %v3271, %v3273
        %v3276 = vmul.u32 %v3271, %v3274
        %v3277 = vmul.u32 %v3272, %v3273
        %v3278 = vmul.u32 %v3272, %v3274
        %v3279 = vshll.u32 %v3276, 16
        %v3280 = vshrl.u32 %v3276, 16
        %v3281 = vshll.u32 %v3277, 16
        %v3282 = vshrl.u32 %v3277, 16
        %vm3283 = vc.u32 %v3275, %v3279
        %v3284 = vsel %vm3283, 1, 0
        %v3285 = vadd.s32 %v3275, %v3279
        %v3286 = vadd.s32 %v3278, %v3284
        %vm3287 = vc.u32 %v3285, %v3281
        %v3288 = vsel %vm3287, 1, 0
        %v3289 = vadd.s32 %v3285, %v3281
        %v3290 = vadd.s32 %v3286, %v3288
        %v3291 = vadd.s32 %v3290, %v3280
        %v3292 = vadd.s32 %v3291, %v3282
        %v3293 = vand.u32 %v3270, 65535
        %v3294 = vshrl.u32 %v3270, 16
        %v3295 = vand.u32 %v3265, 65535
        %v3296 = vshrl.u32 %v3265, 16
        %v3297 = vmul.u32 %v3293, %v3295
        %v3298 = vmul.u32 %v3293, %v3296
        %v3299 = vmul.u32 %v3294, %v3295
        %v3300 = vmul.u32 %v3294, %v3296
        %v3301 = vshll.u32 %v3298, 16
        %v3302 = vshrl.u32 %v3298, 16
        %v3303 = vshll.u32 %v3299, 16
        %v3304 = vshrl.u32 %v3299, 16
        %vm3305 = vc.u32 %v3297, %v3301
        %v3306 = vsel %vm3305, 1, 0
        %v3307 = vadd.s32 %v3297, %v3301
        %v3308 = vadd.s32 %v3300, %v3306
        %vm3309 = vc.u32 %v3307, %v3303
        %v3310 = vsel %vm3309, 1, 0
        %v3311 = vadd.s32 %v3307, %v3303
        %v3312 = vadd.s32 %v3308, %v3310
        %v3313 = vadd.s32 %v3312, %v3302
        %v3314 = vadd.s32 %v3313, %v3304
        %v3315 = vmul.u32 %v3270, %v3261
        %v3316 = vadd.s32 %v3292, %v3311
        %vm3317 = vc.u32 %v3292, %v3311
        %v3318 = vadd.s32 %v3314, 1
        %v3319 = vsel %vm3317, %v3318, %v3314
        %v3320 = vadd.s32 %v3315, %v3319
        %v3321 = vadd.s32 %v3320, 536870912
        %v3322 = vshrl.u32 %v3321, 30
        %v3323 = vshll.u32 %v3322, 30
        %v3324 = vsub.s32 %v3320, %v3323
        %vm3325 = vcmp.lt.s32.totalorder %v3324, 0
        %v3326 = vsub.s32 0, %v3324
        %v3327 = vsel %vm3325, %v3326, %v3324
        %v3328 = vclz %v3327
        %v3329 = vsub.s32 %v3328, 2
        %vm3330 = vcmp.gt.s32.totalorder 0, %v3329
        %v3331 = vsel %vm3330, 0, %v3329
        %v3332 = vsub.s32 32, %v3331
        %v3333 = vshll.u32 %v3324, %v3331
        %v3334 = vshrl.u32 %v3316, %v3332
        %v3335 = vor.u32 %v3333, %v3334
        %v3336 = vsub.s32 4294967266, %v3331
        %v3337 = vadd.s32 %v3336, 127
        %v3338 = vshll.u32 %v3337, 23
        %v3339 = vor.u32 4788187, %v3338
        %v3340 = vand.u32 2147483647, %v3339
        %v3342 = vcvt.s32.f32 %v3335
        %v3343 = vmul.f32 %v3342, %v3340
        %v3344 = vxor.u32 %v3343, 2147483648
        %v3345 = vsel %vm3224, %v3344, %v3343
        %v3346 = vsub.s32 4, %v3322
        %v3347 = vsel %vm3224, %v3346, %v3322
        %v3348 = vsel %vm3223, %v262, %v3345
        %v3349 = vsel %vm3223, 0, %v3347
        %v3350 = vmul.f32 %v3348, %v3348
        %v3351 = vmul.f32 %v3350, -0.001358992
        %v3352 = vadd.f32 %v3351, 0.041655596
        %v3353 = vmul.f32 %v3350, %v3352
        %v3354 = vadd.f32 %v3353, -0.4999988
        %v3355 = vmul.f32 %v3350, %v3354
        %v3356 = vadd.f32 1.0, %v3355
        %v3357 = vmul.f32 %v3348, %v3348
        %v3358 = vmul.f32 %v3357, -0.00019511016
        %v3359 = vadd.f32 %v3358, 0.008332121
        %v3360 = vmul.f32 %v3357, %v3359
        %v3361 = vadd.f32 %v3360, -0.16666654
        %v3362 = vmul.f32 %v3357, %v3361
        %v3363 = vadd.f32 %v3362, 1.0
        %v3364 = vmul.f32 %v3363, %v3348
        %vm3365 = vweird.f32 %v262
        %v3366 = vadd.s32 %v3349, 3
        %v3367 = vand.u32 %v3366, 3
        %vm3368 = vcmp.lt.s32.totalorder %v3367, 2
        %vm3369 = vcmp.eq.s32.totalorder %v3367, 0
        %v3370 = vxor.u32 %v3364, 2147483648
        %v3371 = vsel %vm3369, %v3356, %v3370
        %vm3372 = vcmp.eq.s32.totalorder %v3367, 2
        %v3373 = vxor.u32 %v3356, 2147483648
        %v3374 = vsel %vm3372, %v3373, %v3364
        %v3375 = vsel %vm3368, %v3371, %v3374
        %v3376 = vsel %vm3365, nan, %v3375
        %v3377 = vand.u32 2147483647, %v263
        %vm3378 = vcmp.le.f32.partialorder %v3377, 0.7853982
        %vm3379 = vcmp.lt.s32.totalorder %v263, 0
        %v3380 = vand.u32 %v263, 2139095040
        %v3381 = vshrl.u32 %v3380, 23
        %v3382 = vsub.s32 %v3381, 127
        %v3383 = vand.u32 2147483647, %v263
        %v3384 = vand.u32 %v3383, 8388607
        %v3385 = vor.u32 %v3384, 8388608
        %v3386 = vsub.s32 0, %v3385
        %v3387 = vadd.s32 %v3382, 1
        %vm3388 = vcmp.gt.s32.totalorder %v3387, 0
        %v3389 = vsel %vm3388, %v3387, 0
        %v3390 = vshrl.u32 %v3389, 5
        %v3391 = vand.u32 %v3389, 31
        %v3392 = vsub.s32 32, %v3391
        %v3393 = vshrl.u32 683565275, %v3392
        %v3394 = vshll.u32 683565275, %v3391
        %v3395 = vshrl.u32 2475754826, %v3392
        %v3396 = vor.u32 %v3394, %v3395
        %v3397 = vshll.u32 2475754826, %v3391
        %v3398 = vshrl.u32 2131351028, %v3392
        %v3399 = vor.u32 %v3397, %v3398
        %v3400 = vshll.u32 2131351028, %v3391
        %v3401 = vshrl.u32 2102212464, %v3392
        %v3402 = vor.u32 %v3400, %v3401
        %v3403 = vshll.u32 2102212464, %v3391
        %v3404 = vshrl.u32 920167782, %v3392
        %v3405 = vor.u32 %v3403, %v3404
        %v3406 = vshll.u32 920167782, %v3391
        %v3407 = vshrl.u32 1326507024, %v3392
        %v3408 = vor.u32 %v3406, %v3407
        %vm3409 = vcmp.lt.s32.totalorder %v3390, 1
        %vm3410 = vcmp.lt.s32.totalorder %v3390, 2
        %vm3411 = vcmp.lt.s32.totalorder %v3390, 3
        %vm3412 = vcmp.lt.s32.totalorder %v3390, 4
        %v3413 = vsel %vm3409, %v3393, %v3396
        %v3414 = vsel %vm3412, %v3402, 2102212464
        %v3415 = vsel %vm3411, %v3399, %v3414
        %v3416 = vsel %vm3410, %v3413, %v3415
        %v3417 = vsel %vm3409, %v3396, %v3399
        %v3418 = vsel %vm3412, %v3405, 920167782
        %v3419 = vsel %vm3411, %v3402, %v3418
        %v3420 = vsel %vm3410, %v3417, %v3419
        %v3421 = vsel %vm3409, %v3399, %v3402
        %v3422 = vsel %vm3412, %v3408, 1326507024
        %v3423 = vsel %vm3411, %v3405, %v3422
        %v3424 = vsel %vm3410, %v3421, %v3423
        %v3425 = vshll.u32 %v3385, 8
        %v3426 = vand.u32 %v3425, 65535
        %v3427 = vshrl.u32 %v3425, 16
        %v3428 = vand.u32 %v3424, 65535
        %v3429 = vshrl.u32 %v3424, 16
        %v3430 = vmul.u32 %v3426, %v3428
        %v3431 = vmul.u32 %v3426, %v3429
        %v3432 = vmul.u32 %v3427, %v3428
        %v3433 = vmul.u32 %v3427, %v3429
        %v3434 = vshll.u32 %v3431, 16
        %v3435 = vshrl.u32 %v3431, 16
        %v3436 = vshll.u32 %v3432, 16
        %v3437 = vshrl.u32 %v3432, 16
        %vm3438 = vc.u32 %v3430, %v3434
        %v3439 = vsel %vm3438, 1, 0
        %v3440 = vadd.s32 %v3430, %v3434
        %v3441 = vadd.s32 %v3433, %v3439
        %vm3442 = vc.u32 %v3440, %v3436
        %v3443 = vsel %vm3442, 1, 0
        %v3444 = vadd.s32 %v3440, %v3436
        %v3445 = vadd.s32 %v3441, %v3443
        %v3446 = vadd.s32 %v3445, %v3435
        %v3447 = vadd.s32 %v3446, %v3437
        %v3448 = vand.u32 %v3425, 65535
        %v3449 = vshrl.u32 %v3425, 16
        %v3450 = vand.u32 %v3420, 65535
        %v3451 = vshrl.u32 %v3420, 16
        %v3452 = vmul.u32 %v3448, %v3450
        %v3453 = vmul.u32 %v3448, %v3451
        %v3454 = vmul.u32 %v3449, %v3450
        %v3455 = vmul.u32 %v3449, %v3451
        %v3456 = vshll.u32 %v3453, 16
        %v3457 = vshrl.u32 %v3453, 16
        %v3458 = vshll.u32 %v3454, 16
        %v3459 = vshrl.u32 %v3454, 16
        %vm3460 = vc.u32 %v3452, %v3456
        %v3461 = vsel %vm3460, 1, 0
        %v3462 = vadd.s32 %v3452, %v3456
        %v3463 = vadd.s32 %v3455, %v3461
        %vm3464 = vc.u32 %v3462, %v3458
        %v3465 = vsel %vm3464, 1, 0
        %v3466 = vadd.s32 %v3462, %v3458
        %v3467 = vadd.s32 %v3463, %v3465
        %v3468 = vadd.s32 %v3467, %v3457
        %v3469 = vadd.s32 %v3468, %v3459
        %v3470 = vmul.u32 %v3425, %v3416
        %v3471 = vadd.s32 %v3447, %v3466
        %vm3472 = vc.u32 %v3447, %v3466
        %v3473 = vadd.s32 %v3469, 1
        %v3474 = vsel %vm3472, %v3473, %v3469
        %v3475 = vadd.s32 %v3470, %v3474
        %v3476 = vadd.s32 %v3475, 536870912
        %v3477 = vshrl.u32 %v3476, 30
        %v3478 = vshll.u32 %v3477, 30
        %v3479 = vsub.s32 %v3475, %v3478
        %vm3480 = vcmp.lt.s32.totalorder %v3479, 0
        %v3481 = vsub.s32 0, %v3479
        %v3482 = vsel %vm3480, %v3481, %v3479
        %v3483 = vclz %v3482
        %v3484 = vsub.s32 %v3483, 2
        %vm3485 = vcmp.gt.s32.totalorder 0, %v3484
        %v3486 = vsel %vm3485, 0, %v3484
        %v3487 = vsub.s32 32, %v3486
        %v3488 = vshll.u32 %v3479, %v3486
        %v3489 = vshrl.u32 %v3471, %v3487
        %v3490 = vor.u32 %v3488, %v3489
        %v3491 = vsub.s32 4294967266, %v3486
        %v3492 = vadd.s32 %v3491, 127
        %v3493 = vshll.u32 %v3492, 23
        %v3494 = vor.u32 4788187, %v3493
        %v3495 = vand.u32 2147483647, %v3494
        %v3497 = vcvt.s32.f32 %v3490
        %v3498 = vmul.f32 %v3497, %v3495
        %v3499 = vxor.u32 %v3498, 2147483648
        %v3500 = vsel %vm3379, %v3499, %v3498
        %v3501 = vsub.s32 4, %v3477
        %v3502 = vsel %vm3379, %v3501, %v3477
        %v3503 = vsel %vm3378, %v263, %v3500
        %v3504 = vsel %vm3378, 0, %v3502
        %v3505 = vmul.f32 %v3503, %v3503
        %v3506 = vmul.f32 %v3505, -0.001358992
        %v3507 = vadd.f32 %v3506, 0.041655596
        %v3508 = vmul.f32 %v3505, %v3507
        %v3509 = vadd.f32 %v3508, -0.4999988
        %v3510 = vmul.f32 %v3505, %v3509
        %v3511 = vadd.f32 1.0, %v3510
        %v3512 = vmul.f32 %v3503, %v3503
        %v3513 = vmul.f32 %v3512, -0.00019511016
        %v3514 = vadd.f32 %v3513, 0.008332121
        %v3515 = vmul.f32 %v3512, %v3514
        %v3516 = vadd.f32 %v3515, -0.16666654
        %v3517 = vmul.f32 %v3512, %v3516
        %v3518 = vadd.f32 %v3517, 1.0
        %v3519 = vmul.f32 %v3518, %v3503
        %vm3520 = vweird.f32 %v263
        %v3521 = vadd.s32 %v3504, 3
        %v3522 = vand.u32 %v3521, 3
        %vm3523 = vcmp.lt.s32.totalorder %v3522, 2
        %vm3524 = vcmp.eq.s32.totalorder %v3522, 0
        %v3525 = vxor.u32 %v3519, 2147483648
        %v3526 = vsel %vm3524, %v3511, %v3525
        %vm3527 = vcmp.eq.s32.totalorder %v3522, 2
        %v3528 = vxor.u32 %v3511, 2147483648
        %v3529 = vsel %vm3527, %v3528, %v3519
        %v3530 = vsel %vm3523, %v3526, %v3529
        %v3531 = vsel %vm3520, nan, %v3530
        %v3532 = vand.u32 2147483647, %v264
        %vm3533 = vcmp.le.f32.partialorder %v3532, 0.7853982
        %vm3534 = vcmp.lt.s32.totalorder %v264, 0
        %v3535 = vand.u32 %v264, 2139095040
        %v3536 = vshrl.u32 %v3535, 23
        %v3537 = vsub.s32 %v3536, 127
        %v3538 = vand.u32 2147483647, %v264
        %v3539 = vand.u32 %v3538, 8388607
        %v3540 = vor.u32 %v3539, 8388608
        %v3541 = vsub.s32 0, %v3540
        %v3542 = vadd.s32 %v3537, 1
        %vm3543 = vcmp.gt.s32.totalorder %v3542, 0
        %v3544 = vsel %vm3543, %v3542, 0
        %v3545 = vshrl.u32 %v3544, 5
        %v3546 = vand.u32 %v3544, 31
        %v3547 = vsub.s32 32, %v3546
        %v3548 = vshrl.u32 683565275, %v3547
        %v3549 = vshll.u32 683565275, %v3546
        %v3550 = vshrl.u32 2475754826, %v3547
        %v3551 = vor.u32 %v3549, %v3550
        %v3552 = vshll.u32 2475754826, %v3546
        %v3553 = vshrl.u32 2131351028, %v3547
        %v3554 = vor.u32 %v3552, %v3553
        %v3555 = vshll.u32 2131351028, %v3546
        %v3556 = vshrl.u32 2102212464, %v3547
        %v3557 = vor.u32 %v3555, %v3556
        %v3558 = vshll.u32 2102212464, %v3546
        %v3559 = vshrl.u32 920167782, %v3547
        %v3560 = vor.u32 %v3558, %v3559
        %v3561 = vshll.u32 920167782, %v3546
        %v3562 = vshrl.u32 1326507024, %v3547
        %v3563 = vor.u32 %v3561, %v3562
        %vm3564 = vcmp.lt.s32.totalorder %v3545, 1
        %vm3565 = vcmp.lt.s32.totalorder %v3545, 2
        %vm3566 = vcmp.lt.s32.totalorder %v3545, 3
        %vm3567 = vcmp.lt.s32.totalorder %v3545, 4
        %v3568 = vsel %vm3564, %v3548, %v3551
        %v3569 = vsel %vm3567, %v3557, 2102212464
        %v3570 = vsel %vm3566, %v3554, %v3569
        %v3571 = vsel %vm3565, %v3568, %v3570
        %v3572 = vsel %vm3564, %v3551, %v3554
        %v3573 = vsel %vm3567, %v3560, 920167782
        %v3574 = vsel %vm3566, %v3557, %v3573
        %v3575 = vsel %vm3565, %v3572, %v3574
        %v3576 = vsel %vm3564, %v3554, %v3557
        %v3577 = vsel %vm3567, %v3563, 1326507024
        %v3578 = vsel %vm3566, %v3560, %v3577
        %v3579 = vsel %vm3565, %v3576, %v3578
        %v3580 = vshll.u32 %v3540, 8
        %v3581 = vand.u32 %v3580, 65535
        %v3582 = vshrl.u32 %v3580, 16
        %v3583 = vand.u32 %v3579, 65535
        %v3584 = vshrl.u32 %v3579, 16
        %v3585 = vmul.u32 %v3581, %v3583
        %v3586 = vmul.u32 %v3581, %v3584
        %v3587 = vmul.u32 %v3582, %v3583
        %v3588 = vmul.u32 %v3582, %v3584
        %v3589 = vshll.u32 %v3586, 16
        %v3590 = vshrl.u32 %v3586, 16
        %v3591 = vshll.u32 %v3587, 16
        %v3592 = vshrl.u32 %v3587, 16
        %vm3593 = vc.u32 %v3585, %v3589
        %v3594 = vsel %vm3593, 1, 0
        %v3595 = vadd.s32 %v3585, %v3589
        %v3596 = vadd.s32 %v3588, %v3594
        %vm3597 = vc.u32 %v3595, %v3591
        %v3598 = vsel %vm3597, 1, 0
        %v3599 = vadd.s32 %v3595, %v3591
        %v3600 = vadd.s32 %v3596, %v3598
        %v3601 = vadd.s32 %v3600, %v3590
        %v3602 = vadd.s32 %v3601, %v3592
        %v3603 = vand.u32 %v3580, 65535
        %v3604 = vshrl.u32 %v3580, 16
        %v3605 = vand.u32 %v3575, 65535
        %v3606 = vshrl.u32 %v3575, 16
        %v3607 = vmul.u32 %v3603, %v3605
        %v3608 = vmul.u32 %v3603, %v3606
        %v3609 = vmul.u32 %v3604, %v3605
        %v3610 = vmul.u32 %v3604, %v3606
        %v3611 = vshll.u32 %v3608, 16
        %v3612 = vshrl.u32 %v3608, 16
        %v3613 = vshll.u32 %v3609, 16
        %v3614 = vshrl.u32 %v3609, 16
        %vm3615 = vc.u32 %v3607, %v3611
        %v3616 = vsel %vm3615, 1, 0
        %v3617 = vadd.s32 %v3607, %v3611
        %v3618 = vadd.s32 %v3610, %v3616
        %vm3619 = vc.u32 %v3617, %v3613
        %v3620 = vsel %vm3619, 1, 0
        %v3621 = vadd.s32 %v3617, %v3613
        %v3622 = vadd.s32 %v3618, %v3620
        %v3623 = vadd.s32 %v3622, %v3612
        %v3624 = vadd.s32 %v3623, %v3614
        %v3625 = vmul.u32 %v3580, %v3571
        %v3626 = vadd.s32 %v3602, %v3621
        %vm3627 = vc.u32 %v3602, %v3621
        %v3628 = vadd.s32 %v3624, 1
        %v3629 = vsel %vm3627, %v3628, %v3624
        %v3630 = vadd.s32 %v3625, %v3629
        %v3631 = vadd.s32 %v3630, 536870912
        %v3632 = vshrl.u32 %v3631, 30
        %v3633 = vshll.u32 %v3632, 30
        %v3634 = vsub.s32 %v3630, %v3633
        %vm3635 = vcmp.lt.s32.totalorder %v3634, 0
        %v3636 = vsub.s32 0, %v3634
        %v3637 = vsel %vm3635, %v3636, %v3634
        %v3638 = vclz %v3637
        %v3639 = vsub.s32 %v3638, 2
        %vm3640 = vcmp.gt.s32.totalorder 0, %v3639
        %v3641 = vsel %vm3640, 0, %v3639
        %v3642 = vsub.s32 32, %v3641
        %v3643 = vshll.u32 %v3634, %v3641
        %v3644 = vshrl.u32 %v3626, %v3642
        %v3645 = vor.u32 %v3643, %v3644
        %v3646 = vsub.s32 4294967266, %v3641
        %v3647 = vadd.s32 %v3646, 127
        %v3648 = vshll.u32 %v3647, 23
        %v3649 = vor.u32 4788187, %v3648
        %v3650 = vand.u32 2147483647, %v3649
        %v3652 = vcvt.s32.f32 %v3645
        %v3653 = vmul.f32 %v3652, %v3650
        %v3654 = vxor.u32 %v3653, 2147483648
        %v3655 = vsel %vm3534, %v3654, %v3653
        %v3656 = vsub.s32 4, %v3632
        %v3657 = vsel %vm3534, %v3656, %v3632
        %v3658 = vsel %vm3533, %v264, %v3655
        %v3659 = vsel %vm3533, 0, %v3657
        %v3660 = vmul.f32 %v3658, %v3658
        %v3661 = vmul.f32 %v3660, -0.001358992
        %v3662 = vadd.f32 %v3661, 0.041655596
        %v3663 = vmul.f32 %v3660, %v3662
        %v3664 = vadd.f32 %v3663, -0.4999988
        %v3665 = vmul.f32 %v3660, %v3664
        %v3666 = vadd.f32 1.0, %v3665
        %v3667 = vmul.f32 %v3658, %v3658
        %v3668 = vmul.f32 %v3667, -0.00019511016
        %v3669 = vadd.f32 %v3668, 0.008332121
        %v3670 = vmul.f32 %v3667, %v3669
        %v3671 = vadd.f32 %v3670, -0.16666654
        %v3672 = vmul.f32 %v3667, %v3671
        %v3673 = vadd.f32 %v3672, 1.0
        %v3674 = vmul.f32 %v3673, %v3658
        %vm3675 = vweird.f32 %v264
        %v3676 = vadd.s32 %v3659, 3
        %v3677 = vand.u32 %v3676, 3
        %vm3678 = vcmp.lt.s32.totalorder %v3677, 2
        %vm3679 = vcmp.eq.s32.totalorder %v3677, 0
        %v3680 = vxor.u32 %v3674, 2147483648
        %v3681 = vsel %vm3679, %v3666, %v3680
        %vm3682 = vcmp.eq.s32.totalorder %v3677, 2
        %v3683 = vxor.u32 %v3666, 2147483648
        %v3684 = vsel %vm3682, %v3683, %v3674
        %v3685 = vsel %vm3678, %v3681, %v3684
        %v3686 = vsel %vm3675, nan, %v3685
        %v3687 = vand.u32 2147483647, %v265
        %vm3688 = vcmp.le.f32.partialorder %v3687, 0.7853982
        %vm3689 = vcmp.lt.s32.totalorder %v265, 0
        %v3690 = vand.u32 %v265, 2139095040
        %v3691 = vshrl.u32 %v3690, 23
        %v3692 = vsub.s32 %v3691, 127
        %v3693 = vand.u32 2147483647, %v265
        %v3694 = vand.u32 %v3693, 8388607
        %v3695 = vor.u32 %v3694, 8388608
        %v3696 = vsub.s32 0, %v3695
        %v3697 = vadd.s32 %v3692, 1
        %vm3698 = vcmp.gt.s32.totalorder %v3697, 0
        %v3699 = vsel %vm3698, %v3697, 0
        %v3700 = vshrl.u32 %v3699, 5
        %v3701 = vand.u32 %v3699, 31
        %v3702 = vsub.s32 32, %v3701
        %v3703 = vshrl.u32 683565275, %v3702
        %v3704 = vshll.u32 683565275, %v3701
        %v3705 = vshrl.u32 2475754826, %v3702
        %v3706 = vor.u32 %v3704, %v3705
        %v3707 = vshll.u32 2475754826, %v3701
        %v3708 = vshrl.u32 2131351028, %v3702
        %v3709 = vor.u32 %v3707, %v3708
        %v3710 = vshll.u32 2131351028, %v3701
        %v3711 = vshrl.u32 2102212464, %v3702
        %v3712 = vor.u32 %v3710, %v3711
        %v3713 = vshll.u32 2102212464, %v3701
        %v3714 = vshrl.u32 920167782, %v3702
        %v3715 = vor.u32 %v3713, %v3714
        %v3716 = vshll.u32 920167782, %v3701
        %v3717 = vshrl.u32 1326507024, %v3702
        %v3718 = vor.u32 %v3716, %v3717
        %vm3719 = vcmp.lt.s32.totalorder %v3700, 1
        %vm3720 = vcmp.lt.s32.totalorder %v3700, 2
        %vm3721 = vcmp.lt.s32.totalorder %v3700, 3
        %vm3722 = vcmp.lt.s32.totalorder %v3700, 4
        %v3723 = vsel %vm3719, %v3703, %v3706
        %v3724 = vsel %vm3722, %v3712, 2102212464
        %v3725 = vsel %vm3721, %v3709, %v3724
        %v3726 = vsel %vm3720, %v3723, %v3725
        %v3727 = vsel %vm3719, %v3706, %v3709
        %v3728 = vsel %vm3722, %v3715, 920167782
        %v3729 = vsel %vm3721, %v3712, %v3728
        %v3730 = vsel %vm3720, %v3727, %v3729
        %v3731 = vsel %vm3719, %v3709, %v3712
        %v3732 = vsel %vm3722, %v3718, 1326507024
        %v3733 = vsel %vm3721, %v3715, %v3732
        %v3734 = vsel %vm3720, %v3731, %v3733
        %v3735 = vshll.u32 %v3695, 8
        %v3736 = vand.u32 %v3735, 65535
        %v3737 = vshrl.u32 %v3735, 16
        %v3738 = vand.u32 %v3734, 65535
        %v3739 = vshrl.u32 %v3734, 16
        %v3740 = vmul.u32 %v3736, %v3738
        %v3741 = vmul.u32 %v3736, %v3739
        %v3742 = vmul.u32 %v3737, %v3738
        %v3743 = vmul.u32 %v3737, %v3739
        %v3744 = vshll.u32 %v3741, 16
        %v3745 = vshrl.u32 %v3741, 16
        %v3746 = vshll.u32 %v3742, 16
        %v3747 = vshrl.u32 %v3742, 16
        %vm3748 = vc.u32 %v3740, %v3744
        %v3749 = vsel %vm3748, 1, 0
        %v3750 = vadd.s32 %v3740, %v3744
        %v3751 = vadd.s32 %v3743, %v3749
        %vm3752 = vc.u32 %v3750, %v3746
        %v3753 = vsel %vm3752, 1, 0
        %v3754 = vadd.s32 %v3750, %v3746
        %v3755 = vadd.s32 %v3751, %v3753
        %v3756 = vadd.s32 %v3755, %v3745
        %v3757 = vadd.s32 %v3756, %v3747
        %v3758 = vand.u32 %v3735, 65535
        %v3759 = vshrl.u32 %v3735, 16
        %v3760 = vand.u32 %v3730, 65535
        %v3761 = vshrl.u32 %v3730, 16
        %v3762 = vmul.u32 %v3758, %v3760
        %v3763 = vmul.u32 %v3758, %v3761
        %v3764 = vmul.u32 %v3759, %v3760
        %v3765 = vmul.u32 %v3759, %v3761
        %v3766 = vshll.u32 %v3763, 16
        %v3767 = vshrl.u32 %v3763, 16
        %v3768 = vshll.u32 %v3764, 16
        %v3769 = vshrl.u32 %v3764, 16
        %vm3770 = vc.u32 %v3762, %v3766
        %v3771 = vsel %vm3770, 1, 0
        %v3772 = vadd.s32 %v3762, %v3766
        %v3773 = vadd.s32 %v3765, %v3771
        %vm3774 = vc.u32 %v3772, %v3768
        %v3775 = vsel %vm3774, 1, 0
        %v3776 = vadd.s32 %v3772, %v3768
        %v3777 = vadd.s32 %v3773, %v3775
        %v3778 = vadd.s32 %v3777, %v3767
        %v3779 = vadd.s32 %v3778, %v3769
        %v3780 = vmul.u32 %v3735, %v3726
        %v3781 = vadd.s32 %v3757, %v3776
        %vm3782 = vc.u32 %v3757, %v3776
        %v3783 = vadd.s32 %v3779, 1
        %v3784 = vsel %vm3782, %v3783, %v3779
        %v3785 = vadd.s32 %v3780, %v3784
        %v3786 = vadd.s32 %v3785, 536870912
        %v3787 = vshrl.u32 %v3786, 30
        %v3788 = vshll.u32 %v3787, 30
        %v3789 = vsub.s32 %v3785, %v3788
        %vm3790 = vcmp.lt.s32.totalorder %v3789, 0
        %v3791 = vsub.s32 0, %v3789
        %v3792 = vsel %vm3790, %v3791, %v3789
        %v3793 = vclz %v3792
        %v3794 = vsub.s32 %v3793, 2
        %vm3795 = vcmp.gt.s32.totalorder 0, %v3794
        %v3796 = vsel %vm3795, 0, %v3794
        %v3797 = vsub.s32 32, %v3796
        %v3798 = vshll.u32 %v3789, %v3796
        %v3799 = vshrl.u32 %v3781, %v3797
        %v3800 = vor.u32 %v3798, %v3799
        %v3801 = vsub.s32 4294967266, %v3796
        %v3802 = vadd.s32 %v3801, 127
        %v3803 = vshll.u32 %v3802, 23
        %v3804 = vor.u32 4788187, %v3803
        %v3805 = vand.u32 2147483647, %v3804
        %v3807 = vcvt.s32.f32 %v3800
        %v3808 = vmul.f32 %v3807, %v3805
        %v3809 = vxor.u32 %v3808, 2147483648
        %v3810 = vsel %vm3689, %v3809, %v3808
        %v3811 = vsub.s32 4, %v3787
        %v3812 = vsel %vm3689, %v3811, %v3787
        %v3813 = vsel %vm3688, %v265, %v3810
        %v3814 = vsel %vm3688, 0, %v3812
        %v3815 = vmul.f32 %v3813, %v3813
        %v3816 = vmul.f32 %v3815, -0.001358992
        %v3817 = vadd.f32 %v3816, 0.041655596
        %v3818 = vmul.f32 %v3815, %v3817
        %v3819 = vadd.f32 %v3818, -0.4999988
        %v3820 = vmul.f32 %v3815, %v3819
        %v3821 = vadd.f32 1.0, %v3820
        %v3822 = vmul.f32 %v3813, %v3813
        %v3823 = vmul.f32 %v3822, -0.00019511016
        %v3824 = vadd.f32 %v3823, 0.008332121
        %v3825 = vmul.f32 %v3822, %v3824
        %v3826 = vadd.f32 %v3825, -0.16666654
        %v3827 = vmul.f32 %v3822, %v3826
        %v3828 = vadd.f32 %v3827, 1.0
        %v3829 = vmul.f32 %v3828, %v3813
        %vm3830 = vweird.f32 %v265
        %v3831 = vadd.s32 %v3814, 3
        %v3832 = vand.u32 %v3831, 3
        %vm3833 = vcmp.lt.s32.totalorder %v3832, 2
        %vm3834 = vcmp.eq.s32.totalorder %v3832, 0
        %v3835 = vxor.u32 %v3829, 2147483648
        %v3836 = vsel %vm3834, %v3821, %v3835
        %vm3837 = vcmp.eq.s32.totalorder %v3832, 2
        %v3838 = vxor.u32 %v3821, 2147483648
        %v3839 = vsel %vm3837, %v3838, %v3829
        %v3840 = vsel %vm3833, %v3836, %v3839
        %v3841 = vsel %vm3830, nan, %v3840
        %v3842 = vand.u32 2147483647, %v266
        %vm3843 = vcmp.le.f32.partialorder %v3842, 0.7853982
        %vm3844 = vcmp.lt.s32.totalorder %v266, 0
        %v3845 = vand.u32 %v266, 2139095040
        %v3846 = vshrl.u32 %v3845, 23
        %v3847 = vsub.s32 %v3846, 127
        %v3848 = vand.u32 2147483647, %v266
        %v3849 = vand.u32 %v3848, 8388607
        %v3850 = vor.u32 %v3849, 8388608
        %v3851 = vsub.s32 0, %v3850
        %v3852 = vadd.s32 %v3847, 1
        %vm3853 = vcmp.gt.s32.totalorder %v3852, 0
        %v3854 = vsel %vm3853, %v3852, 0
        %v3855 = vshrl.u32 %v3854, 5
        %v3856 = vand.u32 %v3854, 31
        %v3857 = vsub.s32 32, %v3856
        %v3858 = vshrl.u32 683565275, %v3857
        %v3859 = vshll.u32 683565275, %v3856
        %v3860 = vshrl.u32 2475754826, %v3857
        %v3861 = vor.u32 %v3859, %v3860
        %v3862 = vshll.u32 2475754826, %v3856
        %v3863 = vshrl.u32 2131351028, %v3857
        %v3864 = vor.u32 %v3862, %v3863
        %v3865 = vshll.u32 2131351028, %v3856
        %v3866 = vshrl.u32 2102212464, %v3857
        %v3867 = vor.u32 %v3865, %v3866
        %v3868 = vshll.u32 2102212464, %v3856
        %v3869 = vshrl.u32 920167782, %v3857
        %v3870 = vor.u32 %v3868, %v3869
        %v3871 = vshll.u32 920167782, %v3856
        %v3872 = vshrl.u32 1326507024, %v3857
        %v3873 = vor.u32 %v3871, %v3872
        %vm3874 = vcmp.lt.s32.totalorder %v3855, 1
        %vm3875 = vcmp.lt.s32.totalorder %v3855, 2
        %vm3876 = vcmp.lt.s32.totalorder %v3855, 3
        %vm3877 = vcmp.lt.s32.totalorder %v3855, 4
        %v3878 = vsel %vm3874, %v3858, %v3861
        %v3879 = vsel %vm3877, %v3867, 2102212464
        %v3880 = vsel %vm3876, %v3864, %v3879
        %v3881 = vsel %vm3875, %v3878, %v3880
        %v3882 = vsel %vm3874, %v3861, %v3864
        %v3883 = vsel %vm3877, %v3870, 920167782
        %v3884 = vsel %vm3876, %v3867, %v3883
        %v3885 = vsel %vm3875, %v3882, %v3884
        %v3886 = vsel %vm3874, %v3864, %v3867
        %v3887 = vsel %vm3877, %v3873, 1326507024
        %v3888 = vsel %vm3876, %v3870, %v3887
        %v3889 = vsel %vm3875, %v3886, %v3888
        %v3890 = vshll.u32 %v3850, 8
        %v3891 = vand.u32 %v3890, 65535
        %v3892 = vshrl.u32 %v3890, 16
        %v3893 = vand.u32 %v3889, 65535
        %v3894 = vshrl.u32 %v3889, 16
        %v3895 = vmul.u32 %v3891, %v3893
        %v3896 = vmul.u32 %v3891, %v3894
        %v3897 = vmul.u32 %v3892, %v3893
        %v3898 = vmul.u32 %v3892, %v3894
        %v3899 = vshll.u32 %v3896, 16
        %v3900 = vshrl.u32 %v3896, 16
        %v3901 = vshll.u32 %v3897, 16
        %v3902 = vshrl.u32 %v3897, 16
        %vm3903 = vc.u32 %v3895, %v3899
        %v3904 = vsel %vm3903, 1, 0
        %v3905 = vadd.s32 %v3895, %v3899
        %v3906 = vadd.s32 %v3898, %v3904
        %vm3907 = vc.u32 %v3905, %v3901
        %v3908 = vsel %vm3907, 1, 0
        %v3909 = vadd.s32 %v3905, %v3901
        %v3910 = vadd.s32 %v3906, %v3908
        %v3911 = vadd.s32 %v3910, %v3900
        %v3912 = vadd.s32 %v3911, %v3902
        %v3913 = vand.u32 %v3890, 65535
        %v3914 = vshrl.u32 %v3890, 16
        %v3915 = vand.u32 %v3885, 65535
        %v3916 = vshrl.u32 %v3885, 16
        %v3917 = vmul.u32 %v3913, %v3915
        %v3918 = vmul.u32 %v3913, %v3916
        %v3919 = vmul.u32 %v3914, %v3915
        %v3920 = vmul.u32 %v3914, %v3916
        %v3921 = vshll.u32 %v3918, 16
        %v3922 = vshrl.u32 %v3918, 16
        %v3923 = vshll.u32 %v3919, 16
        %v3924 = vshrl.u32 %v3919, 16
        %vm3925 = vc.u32 %v3917, %v3921
        %v3926 = vsel %vm3925, 1, 0
        %v3927 = vadd.s32 %v3917, %v3921
        %v3928 = vadd.s32 %v3920, %v3926
        %vm3929 = vc.u32 %v3927, %v3923
        %v3930 = vsel %vm3929, 1, 0
        %v3931 = vadd.s32 %v3927, %v3923
        %v3932 = vadd.s32 %v3928, %v3930
        %v3933 = vadd.s32 %v3932, %v3922
        %v3934 = vadd.s32 %v3933, %v3924
        %v3935 = vmul.u32 %v3890, %v3881
        %v3936 = vadd.s32 %v3912, %v3931
        %vm3937 = vc.u32 %v3912, %v3931
        %v3938 = vadd.s32 %v3934, 1
        %v3939 = vsel %vm3937, %v3938, %v3934
        %v3940 = vadd.s32 %v3935, %v3939
        %v3941 = vadd.s32 %v3940, 536870912
        %v3942 = vshrl.u32 %v3941, 30
        %v3943 = vshll.u32 %v3942, 30
        %v3944 = vsub.s32 %v3940, %v3943
        %vm3945 = vcmp.lt.s32.totalorder %v3944, 0
        %v3946 = vsub.s32 0, %v3944
        %v3947 = vsel %vm3945, %v3946, %v3944
        %v3948 = vclz %v3947
        %v3949 = vsub.s32 %v3948, 2
        %vm3950 = vcmp.gt.s32.totalorder 0, %v3949
        %v3951 = vsel %vm3950, 0, %v3949
        %v3952 = vsub.s32 32, %v3951
        %v3953 = vshll.u32 %v3944, %v3951
        %v3954 = vshrl.u32 %v3936, %v3952
        %v3955 = vor.u32 %v3953, %v3954
        %v3956 = vsub.s32 4294967266, %v3951
        %v3957 = vadd.s32 %v3956, 127
        %v3958 = vshll.u32 %v3957, 23
        %v3959 = vor.u32 4788187, %v3958
        %v3960 = vand.u32 2147483647, %v3959
        %v3962 = vcvt.s32.f32 %v3955
        %v3963 = vmul.f32 %v3962, %v3960
        %v3964 = vxor.u32 %v3963, 2147483648
        %v3965 = vsel %vm3844, %v3964, %v3963
        %v3966 = vsub.s32 4, %v3942
        %v3967 = vsel %vm3844, %v3966, %v3942
        %v3968 = vsel %vm3843, %v266, %v3965
        %v3969 = vsel %vm3843, 0, %v3967
        %v3970 = vmul.f32 %v3968, %v3968
        %v3971 = vmul.f32 %v3970, -0.001358992
        %v3972 = vadd.f32 %v3971, 0.041655596
        %v3973 = vmul.f32 %v3970, %v3972
        %v3974 = vadd.f32 %v3973, -0.4999988
        %v3975 = vmul.f32 %v3970, %v3974
        %v3976 = vadd.f32 1.0, %v3975
        %v3977 = vmul.f32 %v3968, %v3968
        %v3978 = vmul.f32 %v3977, -0.00019511016
        %v3979 = vadd.f32 %v3978, 0.008332121
        %v3980 = vmul.f32 %v3977, %v3979
        %v3981 = vadd.f32 %v3980, -0.16666654
        %v3982 = vmul.f32 %v3977, %v3981
        %v3983 = vadd.f32 %v3982, 1.0
        %v3984 = vmul.f32 %v3983, %v3968
        %vm3985 = vweird.f32 %v266
        %v3986 = vadd.s32 %v3969, 3
        %v3987 = vand.u32 %v3986, 3
        %vm3988 = vcmp.lt.s32.totalorder %v3987, 2
        %vm3989 = vcmp.eq.s32.totalorder %v3987, 0
        %v3990 = vxor.u32 %v3984, 2147483648
        %v3991 = vsel %vm3989, %v3976, %v3990
        %vm3992 = vcmp.eq.s32.totalorder %v3987, 2
        %v3993 = vxor.u32 %v3976, 2147483648
        %v3994 = vsel %vm3992, %v3993, %v3984
        %v3995 = vsel %vm3988, %v3991, %v3994
        %v3996 = vsel %vm3985, nan, %v3995
        %v3997 = vand.u32 2147483647, %v267
        %vm3998 = vcmp.le.f32.partialorder %v3997, 0.7853982
        %vm3999 = vcmp.lt.s32.totalorder %v267, 0
        %v4000 = vand.u32 %v267, 2139095040
        %v4001 = vshrl.u32 %v4000, 23
        %v4002 = vsub.s32 %v4001, 127
        %v4003 = vand.u32 2147483647, %v267
        %v4004 = vand.u32 %v4003, 8388607
        %v4005 = vor.u32 %v4004, 8388608
        %v4006 = vsub.s32 0, %v4005
        %v4007 = vadd.s32 %v4002, 1
        %vm4008 = vcmp.gt.s32.totalorder %v4007, 0
        %v4009 = vsel %vm4008, %v4007, 0
        %v4010 = vshrl.u32 %v4009, 5
        %v4011 = vand.u32 %v4009, 31
        %v4012 = vsub.s32 32, %v4011
        %v4013 = vshrl.u32 683565275, %v4012
        %v4014 = vshll.u32 683565275, %v4011
        %v4015 = vshrl.u32 2475754826, %v4012
        %v4016 = vor.u32 %v4014, %v4015
        %v4017 = vshll.u32 2475754826, %v4011
        %v4018 = vshrl.u32 2131351028, %v4012
        %v4019 = vor.u32 %v4017, %v4018
        %v4020 = vshll.u32 2131351028, %v4011
        %v4021 = vshrl.u32 2102212464, %v4012
        %v4022 = vor.u32 %v4020, %v4021
        %v4023 = vshll.u32 2102212464, %v4011
        %v4024 = vshrl.u32 920167782, %v4012
        %v4025 = vor.u32 %v4023, %v4024
        %v4026 = vshll.u32 920167782, %v4011
        %v4027 = vshrl.u32 1326507024, %v4012
        %v4028 = vor.u32 %v4026, %v4027
        %vm4029 = vcmp.lt.s32.totalorder %v4010, 1
        %vm4030 = vcmp.lt.s32.totalorder %v4010, 2
        %vm4031 = vcmp.lt.s32.totalorder %v4010, 3
        %vm4032 = vcmp.lt.s32.totalorder %v4010, 4
        %v4033 = vsel %vm4029, %v4013, %v4016
        %v4034 = vsel %vm4032, %v4022, 2102212464
        %v4035 = vsel %vm4031, %v4019, %v4034
        %v4036 = vsel %vm4030, %v4033, %v4035
        %v4037 = vsel %vm4029, %v4016, %v4019
        %v4038 = vsel %vm4032, %v4025, 920167782
        %v4039 = vsel %vm4031, %v4022, %v4038
        %v4040 = vsel %vm4030, %v4037, %v4039
        %v4041 = vsel %vm4029, %v4019, %v4022
        %v4042 = vsel %vm4032, %v4028, 1326507024
        %v4043 = vsel %vm4031, %v4025, %v4042
        %v4044 = vsel %vm4030, %v4041, %v4043
        %v4045 = vshll.u32 %v4005, 8
        %v4046 = vand.u32 %v4045, 65535
        %v4047 = vshrl.u32 %v4045, 16
        %v4048 = vand.u32 %v4044, 65535
        %v4049 = vshrl.u32 %v4044, 16
        %v4050 = vmul.u32 %v4046, %v4048
        %v4051 = vmul.u32 %v4046, %v4049
        %v4052 = vmul.u32 %v4047, %v4048
        %v4053 = vmul.u32 %v4047, %v4049
        %v4054 = vshll.u32 %v4051, 16
        %v4055 = vshrl.u32 %v4051, 16
        %v4056 = vshll.u32 %v4052, 16
        %v4057 = vshrl.u32 %v4052, 16
        %vm4058 = vc.u32 %v4050, %v4054
        %v4059 = vsel %vm4058, 1, 0
        %v4060 = vadd.s32 %v4050, %v4054
        %v4061 = vadd.s32 %v4053, %v4059
        %vm4062 = vc.u32 %v4060, %v4056
        %v4063 = vsel %vm4062, 1, 0
        %v4064 = vadd.s32 %v4060, %v4056
        %v4065 = vadd.s32 %v4061, %v4063
        %v4066 = vadd.s32 %v4065, %v4055
        %v4067 = vadd.s32 %v4066, %v4057
        %v4068 = vand.u32 %v4045, 65535
        %v4069 = vshrl.u32 %v4045, 16
        %v4070 = vand.u32 %v4040, 65535
        %v4071 = vshrl.u32 %v4040, 16
        %v4072 = vmul.u32 %v4068, %v4070
        %v4073 = vmul.u32 %v4068, %v4071
        %v4074 = vmul.u32 %v4069, %v4070
        %v4075 = vmul.u32 %v4069, %v4071
        %v4076 = vshll.u32 %v4073, 16
        %v4077 = vshrl.u32 %v4073, 16
        %v4078 = vshll.u32 %v4074, 16
        %v4079 = vshrl.u32 %v4074, 16
        %vm4080 = vc.u32 %v4072, %v4076
        %v4081 = vsel %vm4080, 1, 0
        %v4082 = vadd.s32 %v4072, %v4076
        %v4083 = vadd.s32 %v4075, %v4081
        %vm4084 = vc.u32 %v4082, %v4078
        %v4085 = vsel %vm4084, 1, 0
        %v4086 = vadd.s32 %v4082, %v4078
        %v4087 = vadd.s32 %v4083, %v4085
        %v4088 = vadd.s32 %v4087, %v4077
        %v4089 = vadd.s32 %v4088, %v4079
        %v4090 = vmul.u32 %v4045, %v4036
        %v4091 = vadd.s32 %v4067, %v4086
        %vm4092 = vc.u32 %v4067, %v4086
        %v4093 = vadd.s32 %v4089, 1
        %v4094 = vsel %vm4092, %v4093, %v4089
        %v4095 = vadd.s32 %v4090, %v4094
        %v4096 = vadd.s32 %v4095, 536870912
        %v4097 = vshrl.u32 %v4096, 30
        %v4098 = vshll.u32 %v4097, 30
        %v4099 = vsub.s32 %v4095, %v4098
        %vm4100 = vcmp.lt.s32.totalorder %v4099, 0
        %v4101 = vsub.s32 0, %v4099
        %v4102 = vsel %vm4100, %v4101, %v4099
        %v4103 = vclz %v4102
        %v4104 = vsub.s32 %v4103, 2
        %vm4105 = vcmp.gt.s32.totalorder 0, %v4104
        %v4106 = vsel %vm4105, 0, %v4104
        %v4107 = vsub.s32 32, %v4106
        %v4108 = vshll.u32 %v4099, %v4106
        %v4109 = vshrl.u32 %v4091, %v4107
        %v4110 = vor.u32 %v4108, %v4109
        %v4111 = vsub.s32 4294967266, %v4106
        %v4112 = vadd.s32 %v4111, 127
        %v4113 = vshll.u32 %v4112, 23
        %v4114 = vor.u32 4788187, %v4113
        %v4115 = vand.u32 2147483647, %v4114
        %v4117 = vcvt.s32.f32 %v4110
        %v4118 = vmul.f32 %v4117, %v4115
        %v4119 = vxor.u32 %v4118, 2147483648
        %v4120 = vsel %vm3999, %v4119, %v4118
        %v4121 = vsub.s32 4, %v4097
        %v4122 = vsel %vm3999, %v4121, %v4097
        %v4123 = vsel %vm3998, %v267, %v4120
        %v4124 = vsel %vm3998, 0, %v4122
        %v4125 = vmul.f32 %v4123, %v4123
        %v4126 = vmul.f32 %v4125, -0.001358992
        %v4127 = vadd.f32 %v4126, 0.041655596
        %v4128 = vmul.f32 %v4125, %v4127
        %v4129 = vadd.f32 %v4128, -0.4999988
        %v4130 = vmul.f32 %v4125, %v4129
        %v4131 = vadd.f32 1.0, %v4130
        %v4132 = vmul.f32 %v4123, %v4123
        %v4133 = vmul.f32 %v4132, -0.00019511016
        %v4134 = vadd.f32 %v4133, 0.008332121
        %v4135 = vmul.f32 %v4132, %v4134
        %v4136 = vadd.f32 %v4135, -0.16666654
        %v4137 = vmul.f32 %v4132, %v4136
        %v4138 = vadd.f32 %v4137, 1.0
        %v4139 = vmul.f32 %v4138, %v4123
        %vm4140 = vweird.f32 %v267
        %v4141 = vadd.s32 %v4124, 3
        %v4142 = vand.u32 %v4141, 3
        %vm4143 = vcmp.lt.s32.totalorder %v4142, 2
        %vm4144 = vcmp.eq.s32.totalorder %v4142, 0
        %v4145 = vxor.u32 %v4139, 2147483648
        %v4146 = vsel %vm4144, %v4131, %v4145
        %vm4147 = vcmp.eq.s32.totalorder %v4142, 2
        %v4148 = vxor.u32 %v4131, 2147483648
        %v4149 = vsel %vm4147, %v4148, %v4139
        %v4150 = vsel %vm4143, %v4146, %v4149
        %v4151 = vsel %vm4140, nan, %v4150
        %v4152 = vand.u32 2147483647, %v268
        %vm4153 = vcmp.le.f32.partialorder %v4152, 0.7853982
        %vm4154 = vcmp.lt.s32.totalorder %v268, 0
        %v4155 = vand.u32 %v268, 2139095040
        %v4156 = vshrl.u32 %v4155, 23
        %v4157 = vsub.s32 %v4156, 127
        %v4158 = vand.u32 2147483647, %v268
        %v4159 = vand.u32 %v4158, 8388607
        %v4160 = vor.u32 %v4159, 8388608
        %v4161 = vsub.s32 0, %v4160
        %v4162 = vadd.s32 %v4157, 1
        %vm4163 = vcmp.gt.s32.totalorder %v4162, 0
        %v4164 = vsel %vm4163, %v4162, 0
        %v4165 = vshrl.u32 %v4164, 5
        %v4166 = vand.u32 %v4164, 31
        %v4167 = vsub.s32 32, %v4166
        %v4168 = vshrl.u32 683565275, %v4167
        %v4169 = vshll.u32 683565275, %v4166
        %v4170 = vshrl.u32 2475754826, %v4167
        %v4171 = vor.u32 %v4169, %v4170
        %v4172 = vshll.u32 2475754826, %v4166
        %v4173 = vshrl.u32 2131351028, %v4167
        %v4174 = vor.u32 %v4172, %v4173
        %v4175 = vshll.u32 2131351028, %v4166
        %v4176 = vshrl.u32 2102212464, %v4167
        %v4177 = vor.u32 %v4175, %v4176
        %v4178 = vshll.u32 2102212464, %v4166
        %v4179 = vshrl.u32 920167782, %v4167
        %v4180 = vor.u32 %v4178, %v4179
        %v4181 = vshll.u32 920167782, %v4166
        %v4182 = vshrl.u32 1326507024, %v4167
        %v4183 = vor.u32 %v4181, %v4182
        %vm4184 = vcmp.lt.s32.totalorder %v4165, 1
        %vm4185 = vcmp.lt.s32.totalorder %v4165, 2
        %vm4186 = vcmp.lt.s32.totalorder %v4165, 3
        %vm4187 = vcmp.lt.s32.totalorder %v4165, 4
        %v4188 = vsel %vm4184, %v4168, %v4171
        %v4189 = vsel %vm4187, %v4177, 2102212464
        %v4190 = vsel %vm4186, %v4174, %v4189
        %v4191 = vsel %vm4185, %v4188, %v4190
        %v4192 = vsel %vm4184, %v4171, %v4174
        %v4193 = vsel %vm4187, %v4180, 920167782
        %v4194 = vsel %vm4186, %v4177, %v4193
        %v4195 = vsel %vm4185, %v4192, %v4194
        %v4196 = vsel %vm4184, %v4174, %v4177
        %v4197 = vsel %vm4187, %v4183, 1326507024
        %v4198 = vsel %vm4186, %v4180, %v4197
        %v4199 = vsel %vm4185, %v4196, %v4198
        %v4200 = vshll.u32 %v4160, 8
        %v4201 = vand.u32 %v4200, 65535
        %v4202 = vshrl.u32 %v4200, 16
        %v4203 = vand.u32 %v4199, 65535
        %v4204 = vshrl.u32 %v4199, 16
        %v4205 = vmul.u32 %v4201, %v4203
        %v4206 = vmul.u32 %v4201, %v4204
        %v4207 = vmul.u32 %v4202, %v4203
        %v4208 = vmul.u32 %v4202, %v4204
        %v4209 = vshll.u32 %v4206, 16
        %v4210 = vshrl.u32 %v4206, 16
        %v4211 = vshll.u32 %v4207, 16
        %v4212 = vshrl.u32 %v4207, 16
        %vm4213 = vc.u32 %v4205, %v4209
        %v4214 = vsel %vm4213, 1, 0
        %v4215 = vadd.s32 %v4205, %v4209
        %v4216 = vadd.s32 %v4208, %v4214
        %vm4217 = vc.u32 %v4215, %v4211
        %v4218 = vsel %vm4217, 1, 0
        %v4219 = vadd.s32 %v4215, %v4211
        %v4220 = vadd.s32 %v4216, %v4218
        %v4221 = vadd.s32 %v4220, %v4210
        %v4222 = vadd.s32 %v4221, %v4212
        %v4223 = vand.u32 %v4200, 65535
        %v4224 = vshrl.u32 %v4200, 16
        %v4225 = vand.u32 %v4195, 65535
        %v4226 = vshrl.u32 %v4195, 16
        %v4227 = vmul.u32 %v4223, %v4225
        %v4228 = vmul.u32 %v4223, %v4226
        %v4229 = vmul.u32 %v4224, %v4225
        %v4230 = vmul.u32 %v4224, %v4226
        %v4231 = vshll.u32 %v4228, 16
        %v4232 = vshrl.u32 %v4228, 16
        %v4233 = vshll.u32 %v4229, 16
        %v4234 = vshrl.u32 %v4229, 16
        %vm4235 = vc.u32 %v4227, %v4231
        %v4236 = vsel %vm4235, 1, 0
        %v4237 = vadd.s32 %v4227, %v4231
        %v4238 = vadd.s32 %v4230, %v4236
        %vm4239 = vc.u32 %v4237, %v4233
        %v4240 = vsel %vm4239, 1, 0
        %v4241 = vadd.s32 %v4237, %v4233
        %v4242 = vadd.s32 %v4238, %v4240
        %v4243 = vadd.s32 %v4242, %v4232
        %v4244 = vadd.s32 %v4243, %v4234
        %v4245 = vmul.u32 %v4200, %v4191
        %v4246 = vadd.s32 %v4222, %v4241
        %vm4247 = vc.u32 %v4222, %v4241
        %v4248 = vadd.s32 %v4244, 1
        %v4249 = vsel %vm4247, %v4248, %v4244
        %v4250 = vadd.s32 %v4245, %v4249
        %v4251 = vadd.s32 %v4250, 536870912
        %v4252 = vshrl.u32 %v4251, 30
        %v4253 = vshll.u32 %v4252, 30
        %v4254 = vsub.s32 %v4250, %v4253
        %vm4255 = vcmp.lt.s32.totalorder %v4254, 0
        %v4256 = vsub.s32 0, %v4254
        %v4257 = vsel %vm4255, %v4256, %v4254
        %v4258 = vclz %v4257
        %v4259 = vsub.s32 %v4258, 2
        %vm4260 = vcmp.gt.s32.totalorder 0, %v4259
        %v4261 = vsel %vm4260, 0, %v4259
        %v4262 = vsub.s32 32, %v4261
        %v4263 = vshll.u32 %v4254, %v4261
        %v4264 = vshrl.u32 %v4246, %v4262
        %v4265 = vor.u32 %v4263, %v4264
        %v4266 = vsub.s32 4294967266, %v4261
        %v4267 = vadd.s32 %v4266, 127
        %v4268 = vshll.u32 %v4267, 23
        %v4269 = vor.u32 4788187, %v4268
        %v4270 = vand.u32 2147483647, %v4269
        %v4272 = vcvt.s32.f32 %v4265
        %v4273 = vmul.f32 %v4272, %v4270
        %v4274 = vxor.u32 %v4273, 2147483648
        %v4275 = vsel %vm4154, %v4274, %v4273
        %v4276 = vsub.s32 4, %v4252
        %v4277 = vsel %vm4154, %v4276, %v4252
        %v4278 = vsel %vm4153, %v268, %v4275
        %v4279 = vsel %vm4153, 0, %v4277
        %v4280 = vmul.f32 %v4278, %v4278
        %v4281 = vmul.f32 %v4280, -0.001358992
        %v4282 = vadd.f32 %v4281, 0.041655596
        %v4283 = vmul.f32 %v4280, %v4282
        %v4284 = vadd.f32 %v4283, -0.4999988
        %v4285 = vmul.f32 %v4280, %v4284
        %v4286 = vadd.f32 1.0, %v4285
        %v4287 = vmul.f32 %v4278, %v4278
        %v4288 = vmul.f32 %v4287, -0.00019511016
        %v4289 = vadd.f32 %v4288, 0.008332121
        %v4290 = vmul.f32 %v4287, %v4289
        %v4291 = vadd.f32 %v4290, -0.16666654
        %v4292 = vmul.f32 %v4287, %v4291
        %v4293 = vadd.f32 %v4292, 1.0
        %v4294 = vmul.f32 %v4293, %v4278
        %vm4295 = vweird.f32 %v268
        %v4296 = vadd.s32 %v4279, 3
        %v4297 = vand.u32 %v4296, 3
        %vm4298 = vcmp.lt.s32.totalorder %v4297, 2
        %vm4299 = vcmp.eq.s32.totalorder %v4297, 0
        %v4300 = vxor.u32 %v4294, 2147483648
        %v4301 = vsel %vm4299, %v4286, %v4300
        %vm4302 = vcmp.eq.s32.totalorder %v4297, 2
        %v4303 = vxor.u32 %v4286, 2147483648
        %v4304 = vsel %vm4302, %v4303, %v4294
        %v4305 = vsel %vm4298, %v4301, %v4304
        %v4306 = vsel %vm4295, nan, %v4305
        %v4307 = vand.u32 2147483647, %v269
        %vm4308 = vcmp.le.f32.partialorder %v4307, 0.7853982
        %vm4309 = vcmp.lt.s32.totalorder %v269, 0
        %v4310 = vand.u32 %v269, 2139095040
        %v4311 = vshrl.u32 %v4310, 23
        %v4312 = vsub.s32 %v4311, 127
        %v4313 = vand.u32 2147483647, %v269
        %v4314 = vand.u32 %v4313, 8388607
        %v4315 = vor.u32 %v4314, 8388608
        %v4316 = vsub.s32 0, %v4315
        %v4317 = vadd.s32 %v4312, 1
        %vm4318 = vcmp.gt.s32.totalorder %v4317, 0
        %v4319 = vsel %vm4318, %v4317, 0
        %v4320 = vshrl.u32 %v4319, 5
        %v4321 = vand.u32 %v4319, 31
        %v4322 = vsub.s32 32, %v4321
        %v4323 = vshrl.u32 683565275, %v4322
        %v4324 = vshll.u32 683565275, %v4321
        %v4325 = vshrl.u32 2475754826, %v4322
        %v4326 = vor.u32 %v4324, %v4325
        %v4327 = vshll.u32 2475754826, %v4321
        %v4328 = vshrl.u32 2131351028, %v4322
        %v4329 = vor.u32 %v4327, %v4328
        %v4330 = vshll.u32 2131351028, %v4321
        %v4331 = vshrl.u32 2102212464, %v4322
        %v4332 = vor.u32 %v4330, %v4331
        %v4333 = vshll.u32 2102212464, %v4321
        %v4334 = vshrl.u32 920167782, %v4322
        %v4335 = vor.u32 %v4333, %v4334
        %v4336 = vshll.u32 920167782, %v4321
        %v4337 = vshrl.u32 1326507024, %v4322
        %v4338 = vor.u32 %v4336, %v4337
        %vm4339 = vcmp.lt.s32.totalorder %v4320, 1
        %vm4340 = vcmp.lt.s32.totalorder %v4320, 2
        %vm4341 = vcmp.lt.s32.totalorder %v4320, 3
        %vm4342 = vcmp.lt.s32.totalorder %v4320, 4
        %v4343 = vsel %vm4339, %v4323, %v4326
        %v4344 = vsel %vm4342, %v4332, 2102212464
        %v4345 = vsel %vm4341, %v4329, %v4344
        %v4346 = vsel %vm4340, %v4343, %v4345
        %v4347 = vsel %vm4339, %v4326, %v4329
        %v4348 = vsel %vm4342, %v4335, 920167782
        %v4349 = vsel %vm4341, %v4332, %v4348
        %v4350 = vsel %vm4340, %v4347, %v4349
        %v4351 = vsel %vm4339, %v4329, %v4332
        %v4352 = vsel %vm4342, %v4338, 1326507024
        %v4353 = vsel %vm4341, %v4335, %v4352
        %v4354 = vsel %vm4340, %v4351, %v4353
        %v4355 = vshll.u32 %v4315, 8
        %v4356 = vand.u32 %v4355, 65535
        %v4357 = vshrl.u32 %v4355, 16
        %v4358 = vand.u32 %v4354, 65535
        %v4359 = vshrl.u32 %v4354, 16
        %v4360 = vmul.u32 %v4356, %v4358
        %v4361 = vmul.u32 %v4356, %v4359
        %v4362 = vmul.u32 %v4357, %v4358
        %v4363 = vmul.u32 %v4357, %v4359
        %v4364 = vshll.u32 %v4361, 16
        %v4365 = vshrl.u32 %v4361, 16
        %v4366 = vshll.u32 %v4362, 16
        %v4367 = vshrl.u32 %v4362, 16
        %vm4368 = vc.u32 %v4360, %v4364
        %v4369 = vsel %vm4368, 1, 0
        %v4370 = vadd.s32 %v4360, %v4364
        %v4371 = vadd.s32 %v4363, %v4369
        %vm4372 = vc.u32 %v4370, %v4366
        %v4373 = vsel %vm4372, 1, 0
        %v4374 = vadd.s32 %v4370, %v4366
        %v4375 = vadd.s32 %v4371, %v4373
        %v4376 = vadd.s32 %v4375, %v4365
        %v4377 = vadd.s32 %v4376, %v4367
        %v4378 = vand.u32 %v4355, 65535
        %v4379 = vshrl.u32 %v4355, 16
        %v4380 = vand.u32 %v4350, 65535
        %v4381 = vshrl.u32 %v4350, 16
        %v4382 = vmul.u32 %v4378, %v4380
        %v4383 = vmul.u32 %v4378, %v4381
        %v4384 = vmul.u32 %v4379, %v4380
        %v4385 = vmul.u32 %v4379, %v4381
        %v4386 = vshll.u32 %v4383, 16
        %v4387 = vshrl.u32 %v4383, 16
        %v4388 = vshll.u32 %v4384, 16
        %v4389 = vshrl.u32 %v4384, 16
        %vm4390 = vc.u32 %v4382, %v4386
        %v4391 = vsel %vm4390, 1, 0
        %v4392 = vadd.s32 %v4382, %v4386
        %v4393 = vadd.s32 %v4385, %v4391
        %vm4394 = vc.u32 %v4392, %v4388
        %v4395 = vsel %vm4394, 1, 0
        %v4396 = vadd.s32 %v4392, %v4388
        %v4397 = vadd.s32 %v4393, %v4395
        %v4398 = vadd.s32 %v4397, %v4387
        %v4399 = vadd.s32 %v4398, %v4389
        %v4400 = vmul.u32 %v4355, %v4346
        %v4401 = vadd.s32 %v4377, %v4396
        %vm4402 = vc.u32 %v4377, %v4396
        %v4403 = vadd.s32 %v4399, 1
        %v4404 = vsel %vm4402, %v4403, %v4399
        %v4405 = vadd.s32 %v4400, %v4404
        %v4406 = vadd.s32 %v4405, 536870912
        %v4407 = vshrl.u32 %v4406, 30
        %v4408 = vshll.u32 %v4407, 30
        %v4409 = vsub.s32 %v4405, %v4408
        %vm4410 = vcmp.lt.s32.totalorder %v4409, 0
        %v4411 = vsub.s32 0, %v4409
        %v4412 = vsel %vm4410, %v4411, %v4409
        %v4413 = vclz %v4412
        %v4414 = vsub.s32 %v4413, 2
        %vm4415 = vcmp.gt.s32.totalorder 0, %v4414
        %v4416 = vsel %vm4415, 0, %v4414
        %v4417 = vsub.s32 32, %v4416
        %v4418 = vshll.u32 %v4409, %v4416
        %v4419 = vshrl.u32 %v4401, %v4417
        %v4420 = vor.u32 %v4418, %v4419
        %v4421 = vsub.s32 4294967266, %v4416
        %v4422 = vadd.s32 %v4421, 127
        %v4423 = vshll.u32 %v4422, 23
        %v4424 = vor.u32 4788187, %v4423
        %v4425 = vand.u32 2147483647, %v4424
        %v4427 = vcvt.s32.f32 %v4420
        %v4428 = vmul.f32 %v4427, %v4425
        %v4429 = vxor.u32 %v4428, 2147483648
        %v4430 = vsel %vm4309, %v4429, %v4428
        %v4431 = vsub.s32 4, %v4407
        %v4432 = vsel %vm4309, %v4431, %v4407
        %v4433 = vsel %vm4308, %v269, %v4430
        %v4434 = vsel %vm4308, 0, %v4432
        %v4435 = vmul.f32 %v4433, %v4433
        %v4436 = vmul.f32 %v4435, -0.001358992
        %v4437 = vadd.f32 %v4436, 0.041655596
        %v4438 = vmul.f32 %v4435, %v4437
        %v4439 = vadd.f32 %v4438, -0.4999988
        %v4440 = vmul.f32 %v4435, %v4439
        %v4441 = vadd.f32 1.0, %v4440
        %v4442 = vmul.f32 %v4433, %v4433
        %v4443 = vmul.f32 %v4442, -0.00019511016
        %v4444 = vadd.f32 %v4443, 0.008332121
        %v4445 = vmul.f32 %v4442, %v4444
        %v4446 = vadd.f32 %v4445, -0.16666654
        %v4447 = vmul.f32 %v4442, %v4446
        %v4448 = vadd.f32 %v4447, 1.0
        %v4449 = vmul.f32 %v4448, %v4433
        %vm4450 = vweird.f32 %v269
        %v4451 = vadd.s32 %v4434, 3
        %v4452 = vand.u32 %v4451, 3
        %vm4453 = vcmp.lt.s32.totalorder %v4452, 2
        %vm4454 = vcmp.eq.s32.totalorder %v4452, 0
        %v4455 = vxor.u32 %v4449, 2147483648
        %v4456 = vsel %vm4454, %v4441, %v4455
        %vm4457 = vcmp.eq.s32.totalorder %v4452, 2
        %v4458 = vxor.u32 %v4441, 2147483648
        %v4459 = vsel %vm4457, %v4458, %v4449
        %v4460 = vsel %vm4453, %v4456, %v4459
        %v4461 = vsel %vm4450, nan, %v4460
        %v4462 = vand.u32 2147483647, %v270
        %vm4463 = vcmp.le.f32.partialorder %v4462, 0.7853982
        %vm4464 = vcmp.lt.s32.totalorder %v270, 0
        %v4465 = vand.u32 %v270, 2139095040
        %v4466 = vshrl.u32 %v4465, 23
        %v4467 = vsub.s32 %v4466, 127
        %v4468 = vand.u32 2147483647, %v270
        %v4469 = vand.u32 %v4468, 8388607
        %v4470 = vor.u32 %v4469, 8388608
        %v4471 = vsub.s32 0, %v4470
        %v4472 = vadd.s32 %v4467, 1
        %vm4473 = vcmp.gt.s32.totalorder %v4472, 0
        %v4474 = vsel %vm4473, %v4472, 0
        %v4475 = vshrl.u32 %v4474, 5
        %v4476 = vand.u32 %v4474, 31
        %v4477 = vsub.s32 32, %v4476
        %v4478 = vshrl.u32 683565275, %v4477
        %v4479 = vshll.u32 683565275, %v4476
        %v4480 = vshrl.u32 2475754826, %v4477
        %v4481 = vor.u32 %v4479, %v4480
        %v4482 = vshll.u32 2475754826, %v4476
        %v4483 = vshrl.u32 2131351028, %v4477
        %v4484 = vor.u32 %v4482, %v4483
        %v4485 = vshll.u32 2131351028, %v4476
        %v4486 = vshrl.u32 2102212464, %v4477
        %v4487 = vor.u32 %v4485, %v4486
        %v4488 = vshll.u32 2102212464, %v4476
        %v4489 = vshrl.u32 920167782, %v4477
        %v4490 = vor.u32 %v4488, %v4489
        %v4491 = vshll.u32 920167782, %v4476
        %v4492 = vshrl.u32 1326507024, %v4477
        %v4493 = vor.u32 %v4491, %v4492
        %vm4494 = vcmp.lt.s32.totalorder %v4475, 1
        %vm4495 = vcmp.lt.s32.totalorder %v4475, 2
        %vm4496 = vcmp.lt.s32.totalorder %v4475, 3
        %vm4497 = vcmp.lt.s32.totalorder %v4475, 4
        %v4498 = vsel %vm4494, %v4478, %v4481
        %v4499 = vsel %vm4497, %v4487, 2102212464
        %v4500 = vsel %vm4496, %v4484, %v4499
        %v4501 = vsel %vm4495, %v4498, %v4500
        %v4502 = vsel %vm4494, %v4481, %v4484
        %v4503 = vsel %vm4497, %v4490, 920167782
        %v4504 = vsel %vm4496, %v4487, %v4503
        %v4505 = vsel %vm4495, %v4502, %v4504
        %v4506 = vsel %vm4494, %v4484, %v4487
        %v4507 = vsel %vm4497, %v4493, 1326507024
        %v4508 = vsel %vm4496, %v4490, %v4507
        %v4509 = vsel %vm4495, %v4506, %v4508
        %v4510 = vshll.u32 %v4470, 8
        %v4511 = vand.u32 %v4510, 65535
        %v4512 = vshrl.u32 %v4510, 16
        %v4513 = vand.u32 %v4509, 65535
        %v4514 = vshrl.u32 %v4509, 16
        %v4515 = vmul.u32 %v4511, %v4513
        %v4516 = vmul.u32 %v4511, %v4514
        %v4517 = vmul.u32 %v4512, %v4513
        %v4518 = vmul.u32 %v4512, %v4514
        %v4519 = vshll.u32 %v4516, 16
        %v4520 = vshrl.u32 %v4516, 16
        %v4521 = vshll.u32 %v4517, 16
        %v4522 = vshrl.u32 %v4517, 16
        %vm4523 = vc.u32 %v4515, %v4519
        %v4524 = vsel %vm4523, 1, 0
        %v4525 = vadd.s32 %v4515, %v4519
        %v4526 = vadd.s32 %v4518, %v4524
        %vm4527 = vc.u32 %v4525, %v4521
        %v4528 = vsel %vm4527, 1, 0
        %v4529 = vadd.s32 %v4525, %v4521
        %v4530 = vadd.s32 %v4526, %v4528
        %v4531 = vadd.s32 %v4530, %v4520
        %v4532 = vadd.s32 %v4531, %v4522
        %v4533 = vand.u32 %v4510, 65535
        %v4534 = vshrl.u32 %v4510, 16
        %v4535 = vand.u32 %v4505, 65535
        %v4536 = vshrl.u32 %v4505, 16
        %v4537 = vmul.u32 %v4533, %v4535
        %v4538 = vmul.u32 %v4533, %v4536
        %v4539 = vmul.u32 %v4534, %v4535
        %v4540 = vmul.u32 %v4534, %v4536
        %v4541 = vshll.u32 %v4538, 16
        %v4542 = vshrl.u32 %v4538, 16
        %v4543 = vshll.u32 %v4539, 16
        %v4544 = vshrl.u32 %v4539, 16
        %vm4545 = vc.u32 %v4537, %v4541
        %v4546 = vsel %vm4545, 1, 0
        %v4547 = vadd.s32 %v4537, %v4541
        %v4548 = vadd.s32 %v4540, %v4546
        %vm4549 = vc.u32 %v4547, %v4543
        %v4550 = vsel %vm4549, 1, 0
        %v4551 = vadd.s32 %v4547, %v4543
        %v4552 = vadd.s32 %v4548, %v4550
        %v4553 = vadd.s32 %v4552, %v4542
        %v4554 = vadd.s32 %v4553, %v4544
        %v4555 = vmul.u32 %v4510, %v4501
        %v4556 = vadd.s32 %v4532, %v4551
        %vm4557 = vc.u32 %v4532, %v4551
        %v4558 = vadd.s32 %v4554, 1
        %v4559 = vsel %vm4557, %v4558, %v4554
        %v4560 = vadd.s32 %v4555, %v4559
        %v4561 = vadd.s32 %v4560, 536870912
        %v4562 = vshrl.u32 %v4561, 30
        %v4563 = vshll.u32 %v4562, 30
        %v4564 = vsub.s32 %v4560, %v4563
        %vm4565 = vcmp.lt.s32.totalorder %v4564, 0
        %v4566 = vsub.s32 0, %v4564
        %v4567 = vsel %vm4565, %v4566, %v4564
        %v4568 = vclz %v4567
        %v4569 = vsub.s32 %v4568, 2
        %vm4570 = vcmp.gt.s32.totalorder 0, %v4569
        %v4571 = vsel %vm4570, 0, %v4569
        %v4572 = vsub.s32 32, %v4571
        %v4573 = vshll.u32 %v4564, %v4571
        %v4574 = vshrl.u32 %v4556, %v4572
        %v4575 = vor.u32 %v4573, %v4574
        %v4576 = vsub.s32 4294967266, %v4571
        %v4577 = vadd.s32 %v4576, 127
        %v4578 = vshll.u32 %v4577, 23
        %v4579 = vor.u32 4788187, %v4578
        %v4580 = vand.u32 2147483647, %v4579
        %v4582 = vcvt.s32.f32 %v4575
        %v4583 = vmul.f32 %v4582, %v4580
        %v4584 = vxor.u32 %v4583, 2147483648
        %v4585 = vsel %vm4464, %v4584, %v4583
        %v4586 = vsub.s32 4, %v4562
        %v4587 = vsel %vm4464, %v4586, %v4562
        %v4588 = vsel %vm4463, %v270, %v4585
        %v4589 = vsel %vm4463, 0, %v4587
        %v4590 = vmul.f32 %v4588, %v4588
        %v4591 = vmul.f32 %v4590, -0.001358992
        %v4592 = vadd.f32 %v4591, 0.041655596
        %v4593 = vmul.f32 %v4590, %v4592
        %v4594 = vadd.f32 %v4593, -0.4999988
        %v4595 = vmul.f32 %v4590, %v4594
        %v4596 = vadd.f32 1.0, %v4595
        %v4597 = vmul.f32 %v4588, %v4588
        %v4598 = vmul.f32 %v4597, -0.00019511016
        %v4599 = vadd.f32 %v4598, 0.008332121
        %v4600 = vmul.f32 %v4597, %v4599
        %v4601 = vadd.f32 %v4600, -0.16666654
        %v4602 = vmul.f32 %v4597, %v4601
        %v4603 = vadd.f32 %v4602, 1.0
        %v4604 = vmul.f32 %v4603, %v4588
        %vm4605 = vweird.f32 %v270
        %v4606 = vadd.s32 %v4589, 3
        %v4607 = vand.u32 %v4606, 3
        %vm4608 = vcmp.lt.s32.totalorder %v4607, 2
        %vm4609 = vcmp.eq.s32.totalorder %v4607, 0
        %v4610 = vxor.u32 %v4604, 2147483648
        %v4611 = vsel %vm4609, %v4596, %v4610
        %vm4612 = vcmp.eq.s32.totalorder %v4607, 2
        %v4613 = vxor.u32 %v4596, 2147483648
        %v4614 = vsel %vm4612, %v4613, %v4604
        %v4615 = vsel %vm4608, %v4611, %v4614
        %v4616 = vsel %vm4605, nan, %v4615
        %v4617 = vand.u32 2147483647, %v271
        %vm4618 = vcmp.le.f32.partialorder %v4617, 0.7853982
        %vm4619 = vcmp.lt.s32.totalorder %v271, 0
        %v4620 = vand.u32 %v271, 2139095040
        %v4621 = vshrl.u32 %v4620, 23
        %v4622 = vsub.s32 %v4621, 127
        %v4623 = vand.u32 2147483647, %v271
        %v4624 = vand.u32 %v4623, 8388607
        %v4625 = vor.u32 %v4624, 8388608
        %v4626 = vsub.s32 0, %v4625
        %v4627 = vadd.s32 %v4622, 1
        %vm4628 = vcmp.gt.s32.totalorder %v4627, 0
        %v4629 = vsel %vm4628, %v4627, 0
        %v4630 = vshrl.u32 %v4629, 5
        %v4631 = vand.u32 %v4629, 31
        %v4632 = vsub.s32 32, %v4631
        %v4633 = vshrl.u32 683565275, %v4632
        %v4634 = vshll.u32 683565275, %v4631
        %v4635 = vshrl.u32 2475754826, %v4632
        %v4636 = vor.u32 %v4634, %v4635
        %v4637 = vshll.u32 2475754826, %v4631
        %v4638 = vshrl.u32 2131351028, %v4632
        %v4639 = vor.u32 %v4637, %v4638
        %v4640 = vshll.u32 2131351028, %v4631
        %v4641 = vshrl.u32 2102212464, %v4632
        %v4642 = vor.u32 %v4640, %v4641
        %v4643 = vshll.u32 2102212464, %v4631
        %v4644 = vshrl.u32 920167782, %v4632
        %v4645 = vor.u32 %v4643, %v4644
        %v4646 = vshll.u32 920167782, %v4631
        %v4647 = vshrl.u32 1326507024, %v4632
        %v4648 = vor.u32 %v4646, %v4647
        %vm4649 = vcmp.lt.s32.totalorder %v4630, 1
        %vm4650 = vcmp.lt.s32.totalorder %v4630, 2
        %vm4651 = vcmp.lt.s32.totalorder %v4630, 3
        %vm4652 = vcmp.lt.s32.totalorder %v4630, 4
        %v4653 = vsel %vm4649, %v4633, %v4636
        %v4654 = vsel %vm4652, %v4642, 2102212464
        %v4655 = vsel %vm4651, %v4639, %v4654
        %v4656 = vsel %vm4650, %v4653, %v4655
        %v4657 = vsel %vm4649, %v4636, %v4639
        %v4658 = vsel %vm4652, %v4645, 920167782
        %v4659 = vsel %vm4651, %v4642, %v4658
        %v4660 = vsel %vm4650, %v4657, %v4659
        %v4661 = vsel %vm4649, %v4639, %v4642
        %v4662 = vsel %vm4652, %v4648, 1326507024
        %v4663 = vsel %vm4651, %v4645, %v4662
        %v4664 = vsel %vm4650, %v4661, %v4663
        %v4665 = vshll.u32 %v4625, 8
        %v4666 = vand.u32 %v4665, 65535
        %v4667 = vshrl.u32 %v4665, 16
        %v4668 = vand.u32 %v4664, 65535
        %v4669 = vshrl.u32 %v4664, 16
        %v4670 = vmul.u32 %v4666, %v4668
        %v4671 = vmul.u32 %v4666, %v4669
        %v4672 = vmul.u32 %v4667, %v4668
        %v4673 = vmul.u32 %v4667, %v4669
        %v4674 = vshll.u32 %v4671, 16
        %v4675 = vshrl.u32 %v4671, 16
        %v4676 = vshll.u32 %v4672, 16
        %v4677 = vshrl.u32 %v4672, 16
        %vm4678 = vc.u32 %v4670, %v4674
        %v4679 = vsel %vm4678, 1, 0
        %v4680 = vadd.s32 %v4670, %v4674
        %v4681 = vadd.s32 %v4673, %v4679
        %vm4682 = vc.u32 %v4680, %v4676
        %v4683 = vsel %vm4682, 1, 0
        %v4684 = vadd.s32 %v4680, %v4676
        %v4685 = vadd.s32 %v4681, %v4683
        %v4686 = vadd.s32 %v4685, %v4675
        %v4687 = vadd.s32 %v4686, %v4677
        %v4688 = vand.u32 %v4665, 65535
        %v4689 = vshrl.u32 %v4665, 16
        %v4690 = vand.u32 %v4660, 65535
        %v4691 = vshrl.u32 %v4660, 16
        %v4692 = vmul.u32 %v4688, %v4690
        %v4693 = vmul.u32 %v4688, %v4691
        %v4694 = vmul.u32 %v4689, %v4690
        %v4695 = vmul.u32 %v4689, %v4691
        %v4696 = vshll.u32 %v4693, 16
        %v4697 = vshrl.u32 %v4693, 16
        %v4698 = vshll.u32 %v4694, 16
        %v4699 = vshrl.u32 %v4694, 16
        %vm4700 = vc.u32 %v4692, %v4696
        %v4701 = vsel %vm4700, 1, 0
        %v4702 = vadd.s32 %v4692, %v4696
        %v4703 = vadd.s32 %v4695, %v4701
        %vm4704 = vc.u32 %v4702, %v4698
        %v4705 = vsel %vm4704, 1, 0
        %v4706 = vadd.s32 %v4702, %v4698
        %v4707 = vadd.s32 %v4703, %v4705
        %v4708 = vadd.s32 %v4707, %v4697
        %v4709 = vadd.s32 %v4708, %v4699
        %v4710 = vmul.u32 %v4665, %v4656
        %v4711 = vadd.s32 %v4687, %v4706
        %vm4712 = vc.u32 %v4687, %v4706
        %v4713 = vadd.s32 %v4709, 1
        %v4714 = vsel %vm4712, %v4713, %v4709
        %v4715 = vadd.s32 %v4710, %v4714
        %v4716 = vadd.s32 %v4715, 536870912
        %v4717 = vshrl.u32 %v4716, 30
        %v4718 = vshll.u32 %v4717, 30
        %v4719 = vsub.s32 %v4715, %v4718
        %vm4720 = vcmp.lt.s32.totalorder %v4719, 0
        %v4721 = vsub.s32 0, %v4719
        %v4722 = vsel %vm4720, %v4721, %v4719
        %v4723 = vclz %v4722
        %v4724 = vsub.s32 %v4723, 2
        %vm4725 = vcmp.gt.s32.totalorder 0, %v4724
        %v4726 = vsel %vm4725, 0, %v4724
        %v4727 = vsub.s32 32, %v4726
        %v4728 = vshll.u32 %v4719, %v4726
        %v4729 = vshrl.u32 %v4711, %v4727
        %v4730 = vor.u32 %v4728, %v4729
        %v4731 = vsub.s32 4294967266, %v4726
        %v4732 = vadd.s32 %v4731, 127
        %v4733 = vshll.u32 %v4732, 23
        %v4734 = vor.u32 4788187, %v4733
        %v4735 = vand.u32 2147483647, %v4734
        %v4737 = vcvt.s32.f32 %v4730
        %v4738 = vmul.f32 %v4737, %v4735
        %v4739 = vxor.u32 %v4738, 2147483648
        %v4740 = vsel %vm4619, %v4739, %v4738
        %v4741 = vsub.s32 4, %v4717
        %v4742 = vsel %vm4619, %v4741, %v4717
        %v4743 = vsel %vm4618, %v271, %v4740
        %v4744 = vsel %vm4618, 0, %v4742
        %v4745 = vmul.f32 %v4743, %v4743
        %v4746 = vmul.f32 %v4745, -0.001358992
        %v4747 = vadd.f32 %v4746, 0.041655596
        %v4748 = vmul.f32 %v4745, %v4747
        %v4749 = vadd.f32 %v4748, -0.4999988
        %v4750 = vmul.f32 %v4745, %v4749
        %v4751 = vadd.f32 1.0, %v4750
        %v4752 = vmul.f32 %v4743, %v4743
        %v4753 = vmul.f32 %v4752, -0.00019511016
        %v4754 = vadd.f32 %v4753, 0.008332121
        %v4755 = vmul.f32 %v4752, %v4754
        %v4756 = vadd.f32 %v4755, -0.16666654
        %v4757 = vmul.f32 %v4752, %v4756
        %v4758 = vadd.f32 %v4757, 1.0
        %v4759 = vmul.f32 %v4758, %v4743
        %vm4760 = vweird.f32 %v271
        %v4761 = vadd.s32 %v4744, 3
        %v4762 = vand.u32 %v4761, 3
        %vm4763 = vcmp.lt.s32.totalorder %v4762, 2
        %vm4764 = vcmp.eq.s32.totalorder %v4762, 0
        %v4765 = vxor.u32 %v4759, 2147483648
        %v4766 = vsel %vm4764, %v4751, %v4765
        %vm4767 = vcmp.eq.s32.totalorder %v4762, 2
        %v4768 = vxor.u32 %v4751, 2147483648
        %v4769 = vsel %vm4767, %v4768, %v4759
        %v4770 = vsel %vm4763, %v4766, %v4769
        %v4771 = vsel %vm4760, nan, %v4770
        %v4772 = vand.u32 2147483647, %v272
        %vm4773 = vcmp.le.f32.partialorder %v4772, 0.7853982
        %vm4774 = vcmp.lt.s32.totalorder %v272, 0
        %v4775 = vand.u32 %v272, 2139095040
        %v4776 = vshrl.u32 %v4775, 23
        %v4777 = vsub.s32 %v4776, 127
        %v4778 = vand.u32 2147483647, %v272
        %v4779 = vand.u32 %v4778, 8388607
        %v4780 = vor.u32 %v4779, 8388608
        %v4781 = vsub.s32 0, %v4780
        %v4782 = vadd.s32 %v4777, 1
        %vm4783 = vcmp.gt.s32.totalorder %v4782, 0
        %v4784 = vsel %vm4783, %v4782, 0
        %v4785 = vshrl.u32 %v4784, 5
        %v4786 = vand.u32 %v4784, 31
        %v4787 = vsub.s32 32, %v4786
        %v4788 = vshrl.u32 683565275, %v4787
        %v4789 = vshll.u32 683565275, %v4786
        %v4790 = vshrl.u32 2475754826, %v4787
        %v4791 = vor.u32 %v4789, %v4790
        %v4792 = vshll.u32 2475754826, %v4786
        %v4793 = vshrl.u32 2131351028, %v4787
        %v4794 = vor.u32 %v4792, %v4793
        %v4795 = vshll.u32 2131351028, %v4786
        %v4796 = vshrl.u32 2102212464, %v4787
        %v4797 = vor.u32 %v4795, %v4796
        %v4798 = vshll.u32 2102212464, %v4786
        %v4799 = vshrl.u32 920167782, %v4787
        %v4800 = vor.u32 %v4798, %v4799
        %v4801 = vshll.u32 920167782, %v4786
        %v4802 = vshrl.u32 1326507024, %v4787
        %v4803 = vor.u32 %v4801, %v4802
        %vm4804 = vcmp.lt.s32.totalorder %v4785, 1
        %vm4805 = vcmp.lt.s32.totalorder %v4785, 2
        %vm4806 = vcmp.lt.s32.totalorder %v4785, 3
        %vm4807 = vcmp.lt.s32.totalorder %v4785, 4
        %v4808 = vsel %vm4804, %v4788, %v4791
        %v4809 = vsel %vm4807, %v4797, 2102212464
        %v4810 = vsel %vm4806, %v4794, %v4809
        %v4811 = vsel %vm4805, %v4808, %v4810
        %v4812 = vsel %vm4804, %v4791, %v4794
        %v4813 = vsel %vm4807, %v4800, 920167782
        %v4814 = vsel %vm4806, %v4797, %v4813
        %v4815 = vsel %vm4805, %v4812, %v4814
        %v4816 = vsel %vm4804, %v4794, %v4797
        %v4817 = vsel %vm4807, %v4803, 1326507024
        %v4818 = vsel %vm4806, %v4800, %v4817
        %v4819 = vsel %vm4805, %v4816, %v4818
        %v4820 = vshll.u32 %v4780, 8
        %v4821 = vand.u32 %v4820, 65535
        %v4822 = vshrl.u32 %v4820, 16
        %v4823 = vand.u32 %v4819, 65535
        %v4824 = vshrl.u32 %v4819, 16
        %v4825 = vmul.u32 %v4821, %v4823
        %v4826 = vmul.u32 %v4821, %v4824
        %v4827 = vmul.u32 %v4822, %v4823
        %v4828 = vmul.u32 %v4822, %v4824
        %v4829 = vshll.u32 %v4826, 16
        %v4830 = vshrl.u32 %v4826, 16
        %v4831 = vshll.u32 %v4827, 16
        %v4832 = vshrl.u32 %v4827, 16
        %vm4833 = vc.u32 %v4825, %v4829
        %v4834 = vsel %vm4833, 1, 0
        %v4835 = vadd.s32 %v4825, %v4829
        %v4836 = vadd.s32 %v4828, %v4834
        %vm4837 = vc.u32 %v4835, %v4831
        %v4838 = vsel %vm4837, 1, 0
        %v4839 = vadd.s32 %v4835, %v4831
        %v4840 = vadd.s32 %v4836, %v4838
        %v4841 = vadd.s32 %v4840, %v4830
        %v4842 = vadd.s32 %v4841, %v4832
        %v4843 = vand.u32 %v4820, 65535
        %v4844 = vshrl.u32 %v4820, 16
        %v4845 = vand.u32 %v4815, 65535
        %v4846 = vshrl.u32 %v4815, 16
        %v4847 = vmul.u32 %v4843, %v4845
        %v4848 = vmul.u32 %v4843, %v4846
        %v4849 = vmul.u32 %v4844, %v4845
        %v4850 = vmul.u32 %v4844, %v4846
        %v4851 = vshll.u32 %v4848, 16
        %v4852 = vshrl.u32 %v4848, 16
        %v4853 = vshll.u32 %v4849, 16
        %v4854 = vshrl.u32 %v4849, 16
        %vm4855 = vc.u32 %v4847, %v4851
        %v4856 = vsel %vm4855, 1, 0
        %v4857 = vadd.s32 %v4847, %v4851
        %v4858 = vadd.s32 %v4850, %v4856
        %vm4859 = vc.u32 %v4857, %v4853
        %v4860 = vsel %vm4859, 1, 0
        %v4861 = vadd.s32 %v4857, %v4853
        %v4862 = vadd.s32 %v4858, %v4860
        %v4863 = vadd.s32 %v4862, %v4852
        %v4864 = vadd.s32 %v4863, %v4854
        %v4865 = vmul.u32 %v4820, %v4811
        %v4866 = vadd.s32 %v4842, %v4861
        %vm4867 = vc.u32 %v4842, %v4861
        %v4868 = vadd.s32 %v4864, 1
        %v4869 = vsel %vm4867, %v4868, %v4864
        %v4870 = vadd.s32 %v4865, %v4869
        %v4871 = vadd.s32 %v4870, 536870912
        %v4872 = vshrl.u32 %v4871, 30
        %v4873 = vshll.u32 %v4872, 30
        %v4874 = vsub.s32 %v4870, %v4873
        %vm4875 = vcmp.lt.s32.totalorder %v4874, 0
        %v4876 = vsub.s32 0, %v4874
        %v4877 = vsel %vm4875, %v4876, %v4874
        %v4878 = vclz %v4877
        %v4879 = vsub.s32 %v4878, 2
        %vm4880 = vcmp.gt.s32.totalorder 0, %v4879
        %v4881 = vsel %vm4880, 0, %v4879
        %v4882 = vsub.s32 32, %v4881
        %v4883 = vshll.u32 %v4874, %v4881
        %v4884 = vshrl.u32 %v4866, %v4882
        %v4885 = vor.u32 %v4883, %v4884
        %v4886 = vsub.s32 4294967266, %v4881
        %v4887 = vadd.s32 %v4886, 127
        %v4888 = vshll.u32 %v4887, 23
        %v4889 = vor.u32 4788187, %v4888
        %v4890 = vand.u32 2147483647, %v4889
        %v4892 = vcvt.s32.f32 %v4885
        %v4893 = vmul.f32 %v4892, %v4890
        %v4894 = vxor.u32 %v4893, 2147483648
        %v4895 = vsel %vm4774, %v4894, %v4893
        %v4896 = vsub.s32 4, %v4872
        %v4897 = vsel %vm4774, %v4896, %v4872
        %v4898 = vsel %vm4773, %v272, %v4895
        %v4899 = vsel %vm4773, 0, %v4897
        %v4900 = vmul.f32 %v4898, %v4898
        %v4901 = vmul.f32 %v4900, -0.001358992
        %v4902 = vadd.f32 %v4901, 0.041655596
        %v4903 = vmul.f32 %v4900, %v4902
        %v4904 = vadd.f32 %v4903, -0.4999988
        %v4905 = vmul.f32 %v4900, %v4904
        %v4906 = vadd.f32 1.0, %v4905
        %v4907 = vmul.f32 %v4898, %v4898
        %v4908 = vmul.f32 %v4907, -0.00019511016
        %v4909 = vadd.f32 %v4908, 0.008332121
        %v4910 = vmul.f32 %v4907, %v4909
        %v4911 = vadd.f32 %v4910, -0.16666654
        %v4912 = vmul.f32 %v4907, %v4911
        %v4913 = vadd.f32 %v4912, 1.0
        %v4914 = vmul.f32 %v4913, %v4898
        %vm4915 = vweird.f32 %v272
        %v4916 = vadd.s32 %v4899, 3
        %v4917 = vand.u32 %v4916, 3
        %vm4918 = vcmp.lt.s32.totalorder %v4917, 2
        %vm4919 = vcmp.eq.s32.totalorder %v4917, 0
        %v4920 = vxor.u32 %v4914, 2147483648
        %v4921 = vsel %vm4919, %v4906, %v4920
        %vm4922 = vcmp.eq.s32.totalorder %v4917, 2
        %v4923 = vxor.u32 %v4906, 2147483648
        %v4924 = vsel %vm4922, %v4923, %v4914
        %v4925 = vsel %vm4918, %v4921, %v4924
        %v4926 = vsel %vm4915, nan, %v4925
        %v4927 = vand.u32 2147483647, %v273
        %vm4928 = vcmp.le.f32.partialorder %v4927, 0.7853982
        %vm4929 = vcmp.lt.s32.totalorder %v273, 0
        %v4930 = vand.u32 %v273, 2139095040
        %v4931 = vshrl.u32 %v4930, 23
        %v4932 = vsub.s32 %v4931, 127
        %v4933 = vand.u32 2147483647, %v273
        %v4934 = vand.u32 %v4933, 8388607
        %v4935 = vor.u32 %v4934, 8388608
        %v4936 = vsub.s32 0, %v4935
        %v4937 = vadd.s32 %v4932, 1
        %vm4938 = vcmp.gt.s32.totalorder %v4937, 0
        %v4939 = vsel %vm4938, %v4937, 0
        %v4940 = vshrl.u32 %v4939, 5
        %v4941 = vand.u32 %v4939, 31
        %v4942 = vsub.s32 32, %v4941
        %v4943 = vshrl.u32 683565275, %v4942
        %v4944 = vshll.u32 683565275, %v4941
        %v4945 = vshrl.u32 2475754826, %v4942
        %v4946 = vor.u32 %v4944, %v4945
        %v4947 = vshll.u32 2475754826, %v4941
        %v4948 = vshrl.u32 2131351028, %v4942
        %v4949 = vor.u32 %v4947, %v4948
        %v4950 = vshll.u32 2131351028, %v4941
        %v4951 = vshrl.u32 2102212464, %v4942
        %v4952 = vor.u32 %v4950, %v4951
        %v4953 = vshll.u32 2102212464, %v4941
        %v4954 = vshrl.u32 920167782, %v4942
        %v4955 = vor.u32 %v4953, %v4954
        %v4956 = vshll.u32 920167782, %v4941
        %v4957 = vshrl.u32 1326507024, %v4942
        %v4958 = vor.u32 %v4956, %v4957
        %vm4959 = vcmp.lt.s32.totalorder %v4940, 1
        %vm4960 = vcmp.lt.s32.totalorder %v4940, 2
        %vm4961 = vcmp.lt.s32.totalorder %v4940, 3
        %vm4962 = vcmp.lt.s32.totalorder %v4940, 4
        %v4963 = vsel %vm4959, %v4943, %v4946
        %v4964 = vsel %vm4962, %v4952, 2102212464
        %v4965 = vsel %vm4961, %v4949, %v4964
        %v4966 = vsel %vm4960, %v4963, %v4965
        %v4967 = vsel %vm4959, %v4946, %v4949
        %v4968 = vsel %vm4962, %v4955, 920167782
        %v4969 = vsel %vm4961, %v4952, %v4968
        %v4970 = vsel %vm4960, %v4967, %v4969
        %v4971 = vsel %vm4959, %v4949, %v4952
        %v4972 = vsel %vm4962, %v4958, 1326507024
        %v4973 = vsel %vm4961, %v4955, %v4972
        %v4974 = vsel %vm4960, %v4971, %v4973
        %v4975 = vshll.u32 %v4935, 8
        %v4976 = vand.u32 %v4975, 65535
        %v4977 = vshrl.u32 %v4975, 16
        %v4978 = vand.u32 %v4974, 65535
        %v4979 = vshrl.u32 %v4974, 16
        %v4980 = vmul.u32 %v4976, %v4978
        %v4981 = vmul.u32 %v4976, %v4979
        %v4982 = vmul.u32 %v4977, %v4978
        %v4983 = vmul.u32 %v4977, %v4979
        %v4984 = vshll.u32 %v4981, 16
        %v4985 = vshrl.u32 %v4981, 16
        %v4986 = vshll.u32 %v4982, 16
        %v4987 = vshrl.u32 %v4982, 16
        %vm4988 = vc.u32 %v4980, %v4984
        %v4989 = vsel %vm4988, 1, 0
        %v4990 = vadd.s32 %v4980, %v4984
        %v4991 = vadd.s32 %v4983, %v4989
        %vm4992 = vc.u32 %v4990, %v4986
        %v4993 = vsel %vm4992, 1, 0
        %v4994 = vadd.s32 %v4990, %v4986
        %v4995 = vadd.s32 %v4991, %v4993
        %v4996 = vadd.s32 %v4995, %v4985
        %v4997 = vadd.s32 %v4996, %v4987
        %v4998 = vand.u32 %v4975, 65535
        %v4999 = vshrl.u32 %v4975, 16
        %v5000 = vand.u32 %v4970, 65535
        %v5001 = vshrl.u32 %v4970, 16
        %v5002 = vmul.u32 %v4998, %v5000
        %v5003 = vmul.u32 %v4998, %v5001
        %v5004 = vmul.u32 %v4999, %v5000
        %v5005 = vmul.u32 %v4999, %v5001
        %v5006 = vshll.u32 %v5003, 16
        %v5007 = vshrl.u32 %v5003, 16
        %v5008 = vshll.u32 %v5004, 16
        %v5009 = vshrl.u32 %v5004, 16
        %vm5010 = vc.u32 %v5002, %v5006
        %v5011 = vsel %vm5010, 1, 0
        %v5012 = vadd.s32 %v5002, %v5006
        %v5013 = vadd.s32 %v5005, %v5011
        %vm5014 = vc.u32 %v5012, %v5008
        %v5015 = vsel %vm5014, 1, 0
        %v5016 = vadd.s32 %v5012, %v5008
        %v5017 = vadd.s32 %v5013, %v5015
        %v5018 = vadd.s32 %v5017, %v5007
        %v5019 = vadd.s32 %v5018, %v5009
        %v5020 = vmul.u32 %v4975, %v4966
        %v5021 = vadd.s32 %v4997, %v5016
        %vm5022 = vc.u32 %v4997, %v5016
        %v5023 = vadd.s32 %v5019, 1
        %v5024 = vsel %vm5022, %v5023, %v5019
        %v5025 = vadd.s32 %v5020, %v5024
        %v5026 = vadd.s32 %v5025, 536870912
        %v5027 = vshrl.u32 %v5026, 30
        %v5028 = vshll.u32 %v5027, 30
        %v5029 = vsub.s32 %v5025, %v5028
        %vm5030 = vcmp.lt.s32.totalorder %v5029, 0
        %v5031 = vsub.s32 0, %v5029
        %v5032 = vsel %vm5030, %v5031, %v5029
        %v5033 = vclz %v5032
        %v5034 = vsub.s32 %v5033, 2
        %vm5035 = vcmp.gt.s32.totalorder 0, %v5034
        %v5036 = vsel %vm5035, 0, %v5034
        %v5037 = vsub.s32 32, %v5036
        %v5038 = vshll.u32 %v5029, %v5036
        %v5039 = vshrl.u32 %v5021, %v5037
        %v5040 = vor.u32 %v5038, %v5039
        %v5041 = vsub.s32 4294967266, %v5036
        %v5042 = vadd.s32 %v5041, 127
        %v5043 = vshll.u32 %v5042, 23
        %v5044 = vor.u32 4788187, %v5043
        %v5045 = vand.u32 2147483647, %v5044
        %v5047 = vcvt.s32.f32 %v5040
        %v5048 = vmul.f32 %v5047, %v5045
        %v5049 = vxor.u32 %v5048, 2147483648
        %v5050 = vsel %vm4929, %v5049, %v5048
        %v5051 = vsub.s32 4, %v5027
        %v5052 = vsel %vm4929, %v5051, %v5027
        %v5053 = vsel %vm4928, %v273, %v5050
        %v5054 = vsel %vm4928, 0, %v5052
        %v5055 = vmul.f32 %v5053, %v5053
        %v5056 = vmul.f32 %v5055, -0.001358992
        %v5057 = vadd.f32 %v5056, 0.041655596
        %v5058 = vmul.f32 %v5055, %v5057
        %v5059 = vadd.f32 %v5058, -0.4999988
        %v5060 = vmul.f32 %v5055, %v5059
        %v5061 = vadd.f32 1.0, %v5060
        %v5062 = vmul.f32 %v5053, %v5053
        %v5063 = vmul.f32 %v5062, -0.00019511016
        %v5064 = vadd.f32 %v5063, 0.008332121
        %v5065 = vmul.f32 %v5062, %v5064
        %v5066 = vadd.f32 %v5065, -0.16666654
        %v5067 = vmul.f32 %v5062, %v5066
        %v5068 = vadd.f32 %v5067, 1.0
        %v5069 = vmul.f32 %v5068, %v5053
        %vm5070 = vweird.f32 %v273
        %v5071 = vadd.s32 %v5054, 3
        %v5072 = vand.u32 %v5071, 3
        %vm5073 = vcmp.lt.s32.totalorder %v5072, 2
        %vm5074 = vcmp.eq.s32.totalorder %v5072, 0
        %v5075 = vxor.u32 %v5069, 2147483648
        %v5076 = vsel %vm5074, %v5061, %v5075
        %vm5077 = vcmp.eq.s32.totalorder %v5072, 2
        %v5078 = vxor.u32 %v5061, 2147483648
        %v5079 = vsel %vm5077, %v5078, %v5069
        %v5080 = vsel %vm5073, %v5076, %v5079
        %v5081 = vsel %vm5070, nan, %v5080
        %v5082 = vand.u32 2147483647, %v274
        %vm5083 = vcmp.le.f32.partialorder %v5082, 0.7853982
        %vm5084 = vcmp.lt.s32.totalorder %v274, 0
        %v5085 = vand.u32 %v274, 2139095040
        %v5086 = vshrl.u32 %v5085, 23
        %v5087 = vsub.s32 %v5086, 127
        %v5088 = vand.u32 2147483647, %v274
        %v5089 = vand.u32 %v5088, 8388607
        %v5090 = vor.u32 %v5089, 8388608
        %v5091 = vsub.s32 0, %v5090
        %v5092 = vadd.s32 %v5087, 1
        %vm5093 = vcmp.gt.s32.totalorder %v5092, 0
        %v5094 = vsel %vm5093, %v5092, 0
        %v5095 = vshrl.u32 %v5094, 5
        %v5096 = vand.u32 %v5094, 31
        %v5097 = vsub.s32 32, %v5096
        %v5098 = vshrl.u32 683565275, %v5097
        %v5099 = vshll.u32 683565275, %v5096
        %v5100 = vshrl.u32 2475754826, %v5097
        %v5101 = vor.u32 %v5099, %v5100
        %v5102 = vshll.u32 2475754826, %v5096
        %v5103 = vshrl.u32 2131351028, %v5097
        %v5104 = vor.u32 %v5102, %v5103
        %v5105 = vshll.u32 2131351028, %v5096
        %v5106 = vshrl.u32 2102212464, %v5097
        %v5107 = vor.u32 %v5105, %v5106
        %v5108 = vshll.u32 2102212464, %v5096
        %v5109 = vshrl.u32 920167782, %v5097
        %v5110 = vor.u32 %v5108, %v5109
        %v5111 = vshll.u32 920167782, %v5096
        %v5112 = vshrl.u32 1326507024, %v5097
        %v5113 = vor.u32 %v5111, %v5112
        %vm5114 = vcmp.lt.s32.totalorder %v5095, 1
        %vm5115 = vcmp.lt.s32.totalorder %v5095, 2
        %vm5116 = vcmp.lt.s32.totalorder %v5095, 3
        %vm5117 = vcmp.lt.s32.totalorder %v5095, 4
        %v5118 = vsel %vm5114, %v5098, %v5101
        %v5119 = vsel %vm5117, %v5107, 2102212464
        %v5120 = vsel %vm5116, %v5104, %v5119
        %v5121 = vsel %vm5115, %v5118, %v5120
        %v5122 = vsel %vm5114, %v5101, %v5104
        %v5123 = vsel %vm5117, %v5110, 920167782
        %v5124 = vsel %vm5116, %v5107, %v5123
        %v5125 = vsel %vm5115, %v5122, %v5124
        %v5126 = vsel %vm5114, %v5104, %v5107
        %v5127 = vsel %vm5117, %v5113, 1326507024
        %v5128 = vsel %vm5116, %v5110, %v5127
        %v5129 = vsel %vm5115, %v5126, %v5128
        %v5130 = vshll.u32 %v5090, 8
        %v5131 = vand.u32 %v5130, 65535
        %v5132 = vshrl.u32 %v5130, 16
        %v5133 = vand.u32 %v5129, 65535
        %v5134 = vshrl.u32 %v5129, 16
        %v5135 = vmul.u32 %v5131, %v5133
        %v5136 = vmul.u32 %v5131, %v5134
        %v5137 = vmul.u32 %v5132, %v5133
        %v5138 = vmul.u32 %v5132, %v5134
        %v5139 = vshll.u32 %v5136, 16
        %v5140 = vshrl.u32 %v5136, 16
        %v5141 = vshll.u32 %v5137, 16
        %v5142 = vshrl.u32 %v5137, 16
        %vm5143 = vc.u32 %v5135, %v5139
        %v5144 = vsel %vm5143, 1, 0
        %v5145 = vadd.s32 %v5135, %v5139
        %v5146 = vadd.s32 %v5138, %v5144
        %vm5147 = vc.u32 %v5145, %v5141
        %v5148 = vsel %vm5147, 1, 0
        %v5149 = vadd.s32 %v5145, %v5141
        %v5150 = vadd.s32 %v5146, %v5148
        %v5151 = vadd.s32 %v5150, %v5140
        %v5152 = vadd.s32 %v5151, %v5142
        %v5153 = vand.u32 %v5130, 65535
        %v5154 = vshrl.u32 %v5130, 16
        %v5155 = vand.u32 %v5125, 65535
        %v5156 = vshrl.u32 %v5125, 16
        %v5157 = vmul.u32 %v5153, %v5155
        %v5158 = vmul.u32 %v5153, %v5156
        %v5159 = vmul.u32 %v5154, %v5155
        %v5160 = vmul.u32 %v5154, %v5156
        %v5161 = vshll.u32 %v5158, 16
        %v5162 = vshrl.u32 %v5158, 16
        %v5163 = vshll.u32 %v5159, 16
        %v5164 = vshrl.u32 %v5159, 16
        %vm5165 = vc.u32 %v5157, %v5161
        %v5166 = vsel %vm5165, 1, 0
        %v5167 = vadd.s32 %v5157, %v5161
        %v5168 = vadd.s32 %v5160, %v5166
        %vm5169 = vc.u32 %v5167, %v5163
        %v5170 = vsel %vm5169, 1, 0
        %v5171 = vadd.s32 %v5167, %v5163
        %v5172 = vadd.s32 %v5168, %v5170
        %v5173 = vadd.s32 %v5172, %v5162
        %v5174 = vadd.s32 %v5173, %v5164
        %v5175 = vmul.u32 %v5130, %v5121
        %v5176 = vadd.s32 %v5152, %v5171
        %vm5177 = vc.u32 %v5152, %v5171
        %v5178 = vadd.s32 %v5174, 1
        %v5179 = vsel %vm5177, %v5178, %v5174
        %v5180 = vadd.s32 %v5175, %v5179
        %v5181 = vadd.s32 %v5180, 536870912
        %v5182 = vshrl.u32 %v5181, 30
        %v5183 = vshll.u32 %v5182, 30
        %v5184 = vsub.s32 %v5180, %v5183
        %vm5185 = vcmp.lt.s32.totalorder %v5184, 0
        %v5186 = vsub.s32 0, %v5184
        %v5187 = vsel %vm5185, %v5186, %v5184
        %v5188 = vclz %v5187
        %v5189 = vsub.s32 %v5188, 2
        %vm5190 = vcmp.gt.s32.totalorder 0, %v5189
        %v5191 = vsel %vm5190, 0, %v5189
        %v5192 = vsub.s32 32, %v5191
        %v5193 = vshll.u32 %v5184, %v5191
        %v5194 = vshrl.u32 %v5176, %v5192
        %v5195 = vor.u32 %v5193, %v5194
        %v5196 = vsub.s32 4294967266, %v5191
        %v5197 = vadd.s32 %v5196, 127
        %v5198 = vshll.u32 %v5197, 23
        %v5199 = vor.u32 4788187, %v5198
        %v5200 = vand.u32 2147483647, %v5199
        %v5202 = vcvt.s32.f32 %v5195
        %v5203 = vmul.f32 %v5202, %v5200
        %v5204 = vxor.u32 %v5203, 2147483648
        %v5205 = vsel %vm5084, %v5204, %v5203
        %v5206 = vsub.s32 4, %v5182
        %v5207 = vsel %vm5084, %v5206, %v5182
        %v5208 = vsel %vm5083, %v274, %v5205
        %v5209 = vsel %vm5083, 0, %v5207
        %v5210 = vmul.f32 %v5208, %v5208
        %v5211 = vmul.f32 %v5210, -0.001358992
        %v5212 = vadd.f32 %v5211, 0.041655596
        %v5213 = vmul.f32 %v5210, %v5212
        %v5214 = vadd.f32 %v5213, -0.4999988
        %v5215 = vmul.f32 %v5210, %v5214
        %v5216 = vadd.f32 1.0, %v5215
        %v5217 = vmul.f32 %v5208, %v5208
        %v5218 = vmul.f32 %v5217, -0.00019511016
        %v5219 = vadd.f32 %v5218, 0.008332121
        %v5220 = vmul.f32 %v5217, %v5219
        %v5221 = vadd.f32 %v5220, -0.16666654
        %v5222 = vmul.f32 %v5217, %v5221
        %v5223 = vadd.f32 %v5222, 1.0
        %v5224 = vmul.f32 %v5223, %v5208
        %vm5225 = vweird.f32 %v274
        %v5226 = vadd.s32 %v5209, 3
        %v5227 = vand.u32 %v5226, 3
        %vm5228 = vcmp.lt.s32.totalorder %v5227, 2
        %vm5229 = vcmp.eq.s32.totalorder %v5227, 0
        %v5230 = vxor.u32 %v5224, 2147483648
        %v5231 = vsel %vm5229, %v5216, %v5230
        %vm5232 = vcmp.eq.s32.totalorder %v5227, 2
        %v5233 = vxor.u32 %v5216, 2147483648
        %v5234 = vsel %vm5232, %v5233, %v5224
        %v5235 = vsel %vm5228, %v5231, %v5234
        %v5236 = vsel %vm5225, nan, %v5235
        %v5237 = vand.u32 2147483647, %v275
        %vm5238 = vcmp.le.f32.partialorder %v5237, 0.7853982
        %vm5239 = vcmp.lt.s32.totalorder %v275, 0
        %v5240 = vand.u32 %v275, 2139095040
        %v5241 = vshrl.u32 %v5240, 23
        %v5242 = vsub.s32 %v5241, 127
        %v5243 = vand.u32 2147483647, %v275
        %v5244 = vand.u32 %v5243, 8388607
        %v5245 = vor.u32 %v5244, 8388608
        %v5246 = vsub.s32 0, %v5245
        %v5247 = vadd.s32 %v5242, 1
        %vm5248 = vcmp.gt.s32.totalorder %v5247, 0
        %v5249 = vsel %vm5248, %v5247, 0
        %v5250 = vshrl.u32 %v5249, 5
        %v5251 = vand.u32 %v5249, 31
        %v5252 = vsub.s32 32, %v5251
        %v5253 = vshrl.u32 683565275, %v5252
        %v5254 = vshll.u32 683565275, %v5251
        %v5255 = vshrl.u32 2475754826, %v5252
        %v5256 = vor.u32 %v5254, %v5255
        %v5257 = vshll.u32 2475754826, %v5251
        %v5258 = vshrl.u32 2131351028, %v5252
        %v5259 = vor.u32 %v5257, %v5258
        %v5260 = vshll.u32 2131351028, %v5251
        %v5261 = vshrl.u32 2102212464, %v5252
        %v5262 = vor.u32 %v5260, %v5261
        %v5263 = vshll.u32 2102212464, %v5251
        %v5264 = vshrl.u32 920167782, %v5252
        %v5265 = vor.u32 %v5263, %v5264
        %v5266 = vshll.u32 920167782, %v5251
        %v5267 = vshrl.u32 1326507024, %v5252
        %v5268 = vor.u32 %v5266, %v5267
        %vm5269 = vcmp.lt.s32.totalorder %v5250, 1
        %vm5270 = vcmp.lt.s32.totalorder %v5250, 2
        %vm5271 = vcmp.lt.s32.totalorder %v5250, 3
        %vm5272 = vcmp.lt.s32.totalorder %v5250, 4
        %v5273 = vsel %vm5269, %v5253, %v5256
        %v5274 = vsel %vm5272, %v5262, 2102212464
        %v5275 = vsel %vm5271, %v5259, %v5274
        %v5276 = vsel %vm5270, %v5273, %v5275
        %v5277 = vsel %vm5269, %v5256, %v5259
        %v5278 = vsel %vm5272, %v5265, 920167782
        %v5279 = vsel %vm5271, %v5262, %v5278
        %v5280 = vsel %vm5270, %v5277, %v5279
        %v5281 = vsel %vm5269, %v5259, %v5262
        %v5282 = vsel %vm5272, %v5268, 1326507024
        %v5283 = vsel %vm5271, %v5265, %v5282
        %v5284 = vsel %vm5270, %v5281, %v5283
        %v5285 = vshll.u32 %v5245, 8
        %v5286 = vand.u32 %v5285, 65535
        %v5287 = vshrl.u32 %v5285, 16
        %v5288 = vand.u32 %v5284, 65535
        %v5289 = vshrl.u32 %v5284, 16
        %v5290 = vmul.u32 %v5286, %v5288
        %v5291 = vmul.u32 %v5286, %v5289
        %v5292 = vmul.u32 %v5287, %v5288
        %v5293 = vmul.u32 %v5287, %v5289
        %v5294 = vshll.u32 %v5291, 16
        %v5295 = vshrl.u32 %v5291, 16
        %v5296 = vshll.u32 %v5292, 16
        %v5297 = vshrl.u32 %v5292, 16
        %vm5298 = vc.u32 %v5290, %v5294
        %v5299 = vsel %vm5298, 1, 0
        %v5300 = vadd.s32 %v5290, %v5294
        %v5301 = vadd.s32 %v5293, %v5299
        %vm5302 = vc.u32 %v5300, %v5296
        %v5303 = vsel %vm5302, 1, 0
        %v5304 = vadd.s32 %v5300, %v5296
        %v5305 = vadd.s32 %v5301, %v5303
        %v5306 = vadd.s32 %v5305, %v5295
        %v5307 = vadd.s32 %v5306, %v5297
        %v5308 = vand.u32 %v5285, 65535
        %v5309 = vshrl.u32 %v5285, 16
        %v5310 = vand.u32 %v5280, 65535
        %v5311 = vshrl.u32 %v5280, 16
        %v5312 = vmul.u32 %v5308, %v5310
        %v5313 = vmul.u32 %v5308, %v5311
        %v5314 = vmul.u32 %v5309, %v5310
        %v5315 = vmul.u32 %v5309, %v5311
        %v5316 = vshll.u32 %v5313, 16
        %v5317 = vshrl.u32 %v5313, 16
        %v5318 = vshll.u32 %v5314, 16
        %v5319 = vshrl.u32 %v5314, 16
        %vm5320 = vc.u32 %v5312, %v5316
        %v5321 = vsel %vm5320, 1, 0
        %v5322 = vadd.s32 %v5312, %v5316
        %v5323 = vadd.s32 %v5315, %v5321
        %vm5324 = vc.u32 %v5322, %v5318
        %v5325 = vsel %vm5324, 1, 0
        %v5326 = vadd.s32 %v5322, %v5318
        %v5327 = vadd.s32 %v5323, %v5325
        %v5328 = vadd.s32 %v5327, %v5317
        %v5329 = vadd.s32 %v5328, %v5319
        %v5330 = vmul.u32 %v5285, %v5276
        %v5331 = vadd.s32 %v5307, %v5326
        %vm5332 = vc.u32 %v5307, %v5326
        %v5333 = vadd.s32 %v5329, 1
        %v5334 = vsel %vm5332, %v5333, %v5329
        %v5335 = vadd.s32 %v5330, %v5334
        %v5336 = vadd.s32 %v5335, 536870912
        %v5337 = vshrl.u32 %v5336, 30
        %v5338 = vshll.u32 %v5337, 30
        %v5339 = vsub.s32 %v5335, %v5338
        %vm5340 = vcmp.lt.s32.totalorder %v5339, 0
        %v5341 = vsub.s32 0, %v5339
        %v5342 = vsel %vm5340, %v5341, %v5339
        %v5343 = vclz %v5342
        %v5344 = vsub.s32 %v5343, 2
        %vm5345 = vcmp.gt.s32.totalorder 0, %v5344
        %v5346 = vsel %vm5345, 0, %v5344
        %v5347 = vsub.s32 32, %v5346
        %v5348 = vshll.u32 %v5339, %v5346
        %v5349 = vshrl.u32 %v5331, %v5347
        %v5350 = vor.u32 %v5348, %v5349
        %v5351 = vsub.s32 4294967266, %v5346
        %v5352 = vadd.s32 %v5351, 127
        %v5353 = vshll.u32 %v5352, 23
        %v5354 = vor.u32 4788187, %v5353
        %v5355 = vand.u32 2147483647, %v5354
        %v5357 = vcvt.s32.f32 %v5350
        %v5358 = vmul.f32 %v5357, %v5355
        %v5359 = vxor.u32 %v5358, 2147483648
        %v5360 = vsel %vm5239, %v5359, %v5358
        %v5361 = vsub.s32 4, %v5337
        %v5362 = vsel %vm5239, %v5361, %v5337
        %v5363 = vsel %vm5238, %v275, %v5360
        %v5364 = vsel %vm5238, 0, %v5362
        %v5365 = vmul.f32 %v5363, %v5363
        %v5366 = vmul.f32 %v5365, -0.001358992
        %v5367 = vadd.f32 %v5366, 0.041655596
        %v5368 = vmul.f32 %v5365, %v5367
        %v5369 = vadd.f32 %v5368, -0.4999988
        %v5370 = vmul.f32 %v5365, %v5369
        %v5371 = vadd.f32 1.0, %v5370
        %v5372 = vmul.f32 %v5363, %v5363
        %v5373 = vmul.f32 %v5372, -0.00019511016
        %v5374 = vadd.f32 %v5373, 0.008332121
        %v5375 = vmul.f32 %v5372, %v5374
        %v5376 = vadd.f32 %v5375, -0.16666654
        %v5377 = vmul.f32 %v5372, %v5376
        %v5378 = vadd.f32 %v5377, 1.0
        %v5379 = vmul.f32 %v5378, %v5363
        %vm5380 = vweird.f32 %v275
        %v5381 = vadd.s32 %v5364, 3
        %v5382 = vand.u32 %v5381, 3
        %vm5383 = vcmp.lt.s32.totalorder %v5382, 2
        %vm5384 = vcmp.eq.s32.totalorder %v5382, 0
        %v5385 = vxor.u32 %v5379, 2147483648
        %v5386 = vsel %vm5384, %v5371, %v5385
        %vm5387 = vcmp.eq.s32.totalorder %v5382, 2
        %v5388 = vxor.u32 %v5371, 2147483648
        %v5389 = vsel %vm5387, %v5388, %v5379
        %v5390 = vsel %vm5383, %v5386, %v5389
        %v5391 = vsel %vm5380, nan, %v5390
        %v5392 = vand.u32 2147483647, %v276
        %vm5393 = vcmp.le.f32.partialorder %v5392, 0.7853982
        %vm5394 = vcmp.lt.s32.totalorder %v276, 0
        %v5395 = vand.u32 %v276, 2139095040
        %v5396 = vshrl.u32 %v5395, 23
        %v5397 = vsub.s32 %v5396, 127
        %v5398 = vand.u32 2147483647, %v276
        %v5399 = vand.u32 %v5398, 8388607
        %v5400 = vor.u32 %v5399, 8388608
        %v5401 = vsub.s32 0, %v5400
        %v5402 = vadd.s32 %v5397, 1
        %vm5403 = vcmp.gt.s32.totalorder %v5402, 0
        %v5404 = vsel %vm5403, %v5402, 0
        %v5405 = vshrl.u32 %v5404, 5
        %v5406 = vand.u32 %v5404, 31
        %v5407 = vsub.s32 32, %v5406
        %v5408 = vshrl.u32 683565275, %v5407
        %v5409 = vshll.u32 683565275, %v5406
        %v5410 = vshrl.u32 2475754826, %v5407
        %v5411 = vor.u32 %v5409, %v5410
        %v5412 = vshll.u32 2475754826, %v5406
        %v5413 = vshrl.u32 2131351028, %v5407
        %v5414 = vor.u32 %v5412, %v5413
        %v5415 = vshll.u32 2131351028, %v5406
        %v5416 = vshrl.u32 2102212464, %v5407
        %v5417 = vor.u32 %v5415, %v5416
        %v5418 = vshll.u32 2102212464, %v5406
        %v5419 = vshrl.u32 920167782, %v5407
        %v5420 = vor.u32 %v5418, %v5419
        %v5421 = vshll.u32 920167782, %v5406
        %v5422 = vshrl.u32 1326507024, %v5407
        %v5423 = vor.u32 %v5421, %v5422
        %vm5424 = vcmp.lt.s32.totalorder %v5405, 1
        %vm5425 = vcmp.lt.s32.totalorder %v5405, 2
        %vm5426 = vcmp.lt.s32.totalorder %v5405, 3
        %vm5427 = vcmp.lt.s32.totalorder %v5405, 4
        %v5428 = vsel %vm5424, %v5408, %v5411
        %v5429 = vsel %vm5427, %v5417, 2102212464
        %v5430 = vsel %vm5426, %v5414, %v5429
        %v5431 = vsel %vm5425, %v5428, %v5430
        %v5432 = vsel %vm5424, %v5411, %v5414
        %v5433 = vsel %vm5427, %v5420, 920167782
        %v5434 = vsel %vm5426, %v5417, %v5433
        %v5435 = vsel %vm5425, %v5432, %v5434
        %v5436 = vsel %vm5424, %v5414, %v5417
        %v5437 = vsel %vm5427, %v5423, 1326507024
        %v5438 = vsel %vm5426, %v5420, %v5437
        %v5439 = vsel %vm5425, %v5436, %v5438
        %v5440 = vshll.u32 %v5400, 8
        %v5441 = vand.u32 %v5440, 65535
        %v5442 = vshrl.u32 %v5440, 16
        %v5443 = vand.u32 %v5439, 65535
        %v5444 = vshrl.u32 %v5439, 16
        %v5445 = vmul.u32 %v5441, %v5443
        %v5446 = vmul.u32 %v5441, %v5444
        %v5447 = vmul.u32 %v5442, %v5443
        %v5448 = vmul.u32 %v5442, %v5444
        %v5449 = vshll.u32 %v5446, 16
        %v5450 = vshrl.u32 %v5446, 16
        %v5451 = vshll.u32 %v5447, 16
        %v5452 = vshrl.u32 %v5447, 16
        %vm5453 = vc.u32 %v5445, %v5449
        %v5454 = vsel %vm5453, 1, 0
        %v5455 = vadd.s32 %v5445, %v5449
        %v5456 = vadd.s32 %v5448, %v5454
        %vm5457 = vc.u32 %v5455, %v5451
        %v5458 = vsel %vm5457, 1, 0
        %v5459 = vadd.s32 %v5455, %v5451
        %v5460 = vadd.s32 %v5456, %v5458
        %v5461 = vadd.s32 %v5460, %v5450
        %v5462 = vadd.s32 %v5461, %v5452
        %v5463 = vand.u32 %v5440, 65535
        %v5464 = vshrl.u32 %v5440, 16
        %v5465 = vand.u32 %v5435, 65535
        %v5466 = vshrl.u32 %v5435, 16
        %v5467 = vmul.u32 %v5463, %v5465
        %v5468 = vmul.u32 %v5463, %v5466
        %v5469 = vmul.u32 %v5464, %v5465
        %v5470 = vmul.u32 %v5464, %v5466
        %v5471 = vshll.u32 %v5468, 16
        %v5472 = vshrl.u32 %v5468, 16
        %v5473 = vshll.u32 %v5469, 16
        %v5474 = vshrl.u32 %v5469, 16
        %vm5475 = vc.u32 %v5467, %v5471
        %v5476 = vsel %vm5475, 1, 0
        %v5477 = vadd.s32 %v5467, %v5471
        %v5478 = vadd.s32 %v5470, %v5476
        %vm5479 = vc.u32 %v5477, %v5473
        %v5480 = vsel %vm5479, 1, 0
        %v5481 = vadd.s32 %v5477, %v5473
        %v5482 = vadd.s32 %v5478, %v5480
        %v5483 = vadd.s32 %v5482, %v5472
        %v5484 = vadd.s32 %v5483, %v5474
        %v5485 = vmul.u32 %v5440, %v5431
        %v5486 = vadd.s32 %v5462, %v5481
        %vm5487 = vc.u32 %v5462, %v5481
        %v5488 = vadd.s32 %v5484, 1
        %v5489 = vsel %vm5487, %v5488, %v5484
        %v5490 = vadd.s32 %v5485, %v5489
        %v5491 = vadd.s32 %v5490, 536870912
        %v5492 = vshrl.u32 %v5491, 30
        %v5493 = vshll.u32 %v5492, 30
        %v5494 = vsub.s32 %v5490, %v5493
        %vm5495 = vcmp.lt.s32.totalorder %v5494, 0
        %v5496 = vsub.s32 0, %v5494
        %v5497 = vsel %vm5495, %v5496, %v5494
        %v5498 = vclz %v5497
        %v5499 = vsub.s32 %v5498, 2
        %vm5500 = vcmp.gt.s32.totalorder 0, %v5499
        %v5501 = vsel %vm5500, 0, %v5499
        %v5502 = vsub.s32 32, %v5501
        %v5503 = vshll.u32 %v5494, %v5501
        %v5504 = vshrl.u32 %v5486, %v5502
        %v5505 = vor.u32 %v5503, %v5504
        %v5506 = vsub.s32 4294967266, %v5501
        %v5507 = vadd.s32 %v5506, 127
        %v5508 = vshll.u32 %v5507, 23
        %v5509 = vor.u32 4788187, %v5508
        %v5510 = vand.u32 2147483647, %v5509
        %v5512 = vcvt.s32.f32 %v5505
        %v5513 = vmul.f32 %v5512, %v5510
        %v5514 = vxor.u32 %v5513, 2147483648
        %v5515 = vsel %vm5394, %v5514, %v5513
        %v5516 = vsub.s32 4, %v5492
        %v5517 = vsel %vm5394, %v5516, %v5492
        %v5518 = vsel %vm5393, %v276, %v5515
        %v5519 = vsel %vm5393, 0, %v5517
        %v5520 = vmul.f32 %v5518, %v5518
        %v5521 = vmul.f32 %v5520, -0.001358992
        %v5522 = vadd.f32 %v5521, 0.041655596
        %v5523 = vmul.f32 %v5520, %v5522
        %v5524 = vadd.f32 %v5523, -0.4999988
        %v5525 = vmul.f32 %v5520, %v5524
        %v5526 = vadd.f32 1.0, %v5525
        %v5527 = vmul.f32 %v5518, %v5518
        %v5528 = vmul.f32 %v5527, -0.00019511016
        %v5529 = vadd.f32 %v5528, 0.008332121
        %v5530 = vmul.f32 %v5527, %v5529
        %v5531 = vadd.f32 %v5530, -0.16666654
        %v5532 = vmul.f32 %v5527, %v5531
        %v5533 = vadd.f32 %v5532, 1.0
        %v5534 = vmul.f32 %v5533, %v5518
        %vm5535 = vweird.f32 %v276
        %v5536 = vadd.s32 %v5519, 3
        %v5537 = vand.u32 %v5536, 3
        %vm5538 = vcmp.lt.s32.totalorder %v5537, 2
        %vm5539 = vcmp.eq.s32.totalorder %v5537, 0
        %v5540 = vxor.u32 %v5534, 2147483648
        %v5541 = vsel %vm5539, %v5526, %v5540
        %vm5542 = vcmp.eq.s32.totalorder %v5537, 2
        %v5543 = vxor.u32 %v5526, 2147483648
        %v5544 = vsel %vm5542, %v5543, %v5534
        %v5545 = vsel %vm5538, %v5541, %v5544
        %v5546 = vsel %vm5535, nan, %v5545
        %v5547 = vmul.f32 %v243, %v3066
        %v5548 = vmul.f32 %v244, %v3221
        %v5549 = vmul.f32 %v245, %v3376
        %v5550 = vmul.f32 %v246, %v3531
        %v5551 = vmul.f32 %v247, %v3686
        %v5552 = vmul.f32 %v248, %v3841
        %v5553 = vmul.f32 %v249, %v3996
        %v5554 = vmul.f32 %v250, %v4151
        %v5555 = vmul.f32 %v251, %v4306
        %v5556 = vmul.f32 %v252, %v4461
        %v5557 = vmul.f32 %v253, %v4616
        %v5558 = vmul.f32 %v254, %v4771
        %v5559 = vmul.f32 %v255, %v4926
        %v5560 = vmul.f32 %v256, %v5081
        %v5561 = vmul.f32 %v257, %v5236
        %v5562 = vmul.f32 %v258, %v5391
        %v5563 = vmul.f32 %v259, %v5546
        %v5564 = vld [vmem:[%s2] sm:$0xff]
        %v5565 = vld [vmem:[%s2 + $0x8] sm:$0xff]
        %v5566 = vld [vmem:[%s2 + $0x10] sm:$0xff]
        %v5567 = vld [vmem:[%s2 + $0x18] sm:$0xff]
        %v5568 = vld [vmem:[%s2 + $0x20] sm:$0xff]
        %v5569 = vld [vmem:[%s2 + $0x28] sm:$0xff]
        %v5570 = vld [vmem:[%s2 + $0x30] sm:$0xff]
        %v5571 = vld [vmem:[%s2 + $0x38] sm:$0xff]
        %v5572 = vld [vmem:[%s2 + $0x40] sm:$0xff]
        %v5573 = vld [vmem:[%s2 + $0x48] sm:$0xff]
        %v5574 = vld [vmem:[%s2 + $0x50] sm:$0xff]
        %v5575 = vld [vmem:[%s2 + $0x58] sm:$0xff]
        %v5576 = vld [vmem:[%s2 + $0x60] sm:$0xff]
        %v5577 = vld [vmem:[%s2 + $0x68] sm:$0xff]
        %v5578 = vld [vmem:[%s2 + $0x70] sm:$0xff]
        %v5579 = vld [vmem:[%s2 + $0x78] sm:$0xff]
        %v5580 = vld [vmem:[%s2 + $0x80] sm:$0xff]
        %v5581 = vld [vmem:[%s2 + $0x88] sm:$0xff]
        %v5582 = vld [vmem:[%s2 + $0x90] sm:$0xff]
        %v5583 = vld [vmem:[%s2 + $0x98] sm:$0xff]
        %v5584 = vld [vmem:[%s2 + $0xa0] sm:$0xff]
        %v5585 = vld [vmem:[%s2 + $0xa8] sm:$0xff]
        %v5586 = vld [vmem:[%s2 + $0xb0] sm:$0xff]
        %v5587 = vld [vmem:[%s2 + $0xb8] sm:$0xff]
        %v5588 = vld [vmem:[%s2 + $0xc0] sm:$0xff]
        %v5589 = vld [vmem:[%s2 + $0xc8] sm:$0xff]
        %v5590 = vld [vmem:[%s2 + $0xd0] sm:$0xff]
        %v5591 = vld [vmem:[%s2 + $0xd8] sm:$0xff]
        %v5592 = vld [vmem:[%s2 + $0xe0] sm:$0xff]
        %v5593 = vld [vmem:[%s2 + $0xe8] sm:$0xff]
        %v5594 = vld [vmem:[%s2 + $0xf0] sm:$0xff]
        %v5595 = vld [vmem:[%s2 + $0xf8] sm:$0xff]
        %v5596 = vld [vmem:[%s2 + $0x100] sm:$0x1]
        %v5597 = vld [vmem:[%s2 + $0x108] sm:$0x1]
        %v5598 = vld [vmem:[%s3] sm:$0xff]
        %v5599 = vld [vmem:[%s3 + $0x8] sm:$0xff]
        %v5600 = vld [vmem:[%s3 + $0x10] sm:$0xff]
        %v5601 = vld [vmem:[%s3 + $0x18] sm:$0xff]
        %v5602 = vld [vmem:[%s3 + $0x20] sm:$0xff]
        %v5603 = vld [vmem:[%s3 + $0x28] sm:$0xff]
        %v5604 = vld [vmem:[%s3 + $0x30] sm:$0xff]
        %v5605 = vld [vmem:[%s3 + $0x38] sm:$0xff]
        %v5606 = vld [vmem:[%s3 + $0x40] sm:$0xff]
        %v5607 = vld [vmem:[%s3 + $0x48] sm:$0xff]
        %v5608 = vld [vmem:[%s3 + $0x50] sm:$0xff]
        %v5609 = vld [vmem:[%s3 + $0x58] sm:$0xff]
        %v5610 = vld [vmem:[%s3 + $0x60] sm:$0xff]
        %v5611 = vld [vmem:[%s3 + $0x68] sm:$0xff]
        %v5612 = vld [vmem:[%s3 + $0x70] sm:$0xff]
        %v5613 = vld [vmem:[%s3 + $0x78] sm:$0xff]
        %v5614 = vld [vmem:[%s3 + $0x80] sm:$0xff]
        %v5615 = vld [vmem:[%s3 + $0x88] sm:$0xff]
        %v5616 = vld [vmem:[%s3 + $0x90] sm:$0xff]
        %v5617 = vld [vmem:[%s3 + $0x98] sm:$0xff]
        %v5618 = vld [vmem:[%s3 + $0xa0] sm:$0xff]
        %v5619 = vld [vmem:[%s3 + $0xa8] sm:$0xff]
        %v5620 = vld [vmem:[%s3 + $0xb0] sm:$0xff]
        %v5621 = vld [vmem:[%s3 + $0xb8] sm:$0xff]
        %v5622 = vld [vmem:[%s3 + $0xc0] sm:$0xff]
        %v5623 = vld [vmem:[%s3 + $0xc8] sm:$0xff]
        %v5624 = vld [vmem:[%s3 + $0xd0] sm:$0xff]
        %v5625 = vld [vmem:[%s3 + $0xd8] sm:$0xff]
        %v5626 = vld [vmem:[%s3 + $0xe0] sm:$0xff]
        %v5627 = vld [vmem:[%s3 + $0xe8] sm:$0xff]
        %v5628 = vld [vmem:[%s3 + $0xf0] sm:$0xff]
        %v5629 = vld [vmem:[%s3 + $0xf8] sm:$0xff]
        %v5630 = vld [vmem:[%s3 + $0x100] sm:$0x1]
        %v5631 = vld [vmem:[%s3 + $0x108] sm:$0x1]
        %v5632 = vld [vmem:[%s4] sm:$0xff]
        %5633 = vxpose.xlu0.b32.start [1/16] %v5547, 128
        %5634 = vxpose.xlu0.b32.cont [2/16] %v5548, 128
        %5635 = vxpose.xlu0.b32.cont [3/16] %v5549, 128
        %5636 = vxpose.xlu0.b32.cont [4/16] %v5550, 128
        %5637 = vxpose.xlu0.b32.cont [5/16] %v5551, 128
        %5638 = vxpose.xlu0.b32.cont [6/16] %v5552, 128
        %5639 = vxpose.xlu0.b32.cont [7/16] %v5553, 128
        %5640 = vxpose.xlu0.b32.cont [8/16] %v5554, 128
        %5641 = vxpose.xlu0.b32.cont [9/16] %v5555, 128
        %5642 = vxpose.xlu0.b32.cont [10/16] %v5556, 128
        %5643 = vxpose.xlu0.b32.cont [11/16] %v5557, 128
        %5644 = vxpose.xlu0.b32.cont [12/16] %v5558, 128
        %5645 = vxpose.xlu0.b32.cont [13/16] %v5559, 128
        %5646 = vxpose.xlu0.b32.cont [14/16] %v5560, 128
        %5647 = vxpose.xlu0.b32.cont [15/16] %v5561, 128
        %5648 = vxpose.xlu0.b32.end [16/16] %v5562, 128
        %v5649 = vpop.trf.xlu0
        %v5650 = vpop.trf.xlu0
        %v5651 = vpop.trf.xlu0
        %v5652 = vpop.trf.xlu0
        %v5653 = vpop.trf.xlu0
        %v5654 = vpop.trf.xlu0
        %v5655 = vpop.trf.xlu0
        %v5656 = vpop.trf.xlu0
        %v5657 = vpop.trf.xlu0
        %v5658 = vpop.trf.xlu0
        %v5659 = vpop.trf.xlu0
        %v5660 = vpop.trf.xlu0
        %v5661 = vpop.trf.xlu0
        %v5662 = vpop.trf.xlu0
        %v5663 = vpop.trf.xlu0
        %v5664 = vpop.trf.xlu0
        %5665 = vxpose.xlu0.b32.start [1/16] %v5563, 128
        %5666 = vxpose.xlu0.b32.cont [2/16] 0.0, 128
        %5667 = vxpose.xlu0.b32.cont [3/16] 0.0, 128
        %5668 = vxpose.xlu0.b32.cont [4/16] 0.0, 128
        %5669 = vxpose.xlu0.b32.cont [5/16] 0.0, 128
        %5670 = vxpose.xlu0.b32.cont [6/16] 0.0, 128
        %5671 = vxpose.xlu0.b32.cont [7/16] 0.0, 128
        %5672 = vxpose.xlu0.b32.cont [8/16] 0.0, 128
        %5673 = vxpose.xlu0.b32.cont [9/16] 0.0, 128
        %5674 = vxpose.xlu0.b32.cont [10/16] 0.0, 128
        %5675 = vxpose.xlu0.b32.cont [11/16] 0.0, 128
        %5676 = vxpose.xlu0.b32.cont [12/16] 0.0, 128
        %5677 = vxpose.xlu0.b32.cont [13/16] 0.0, 128
        %5678 = vxpose.xlu0.b32.cont [14/16] 0.0, 128
        %5679 = vxpose.xlu0.b32.cont [15/16] 0.0, 128
        %5680 = vxpose.xlu0.b32.end [16/16] 0.0, 128
        %v5681 = vpop.trf.xlu0
        %v5682 = vpop.trf.xlu0
        %v5683 = vpop.trf.xlu0
        %v5684 = vpop.trf.xlu0
        %v5685 = vpop.trf.xlu0
        %v5686 = vpop.trf.xlu0
        %v5687 = vpop.trf.xlu0
        %v5688 = vpop.trf.xlu0
        %v5689 = vpop.trf.xlu0
        %v5690 = vpop.trf.xlu0
        %v5691 = vpop.trf.xlu0
        %v5692 = vpop.trf.xlu0
        %v5693 = vpop.trf.xlu0
        %v5694 = vpop.trf.xlu0
        %v5695 = vpop.trf.xlu0
        %v5696 = vpop.trf.xlu0
        %vm5697 = vcmask 7168
        %v5699 = vsel %vm5697, %v5681, 0
        %vm5701 = vcmask 1040384
        %v5703 = vsel %vm5701, %v5630, 0
        %v5706 = vsel %vm5701, %v5631, 0
        %5708 = vmatpush.msra.mxu0 %v5628
        %5709 = vmatpush.msra.mxu0 %v5626
        %5710 = vmatpush.msra.mxu0 %v5624
        %5711 = vmatpush.msra.mxu0 %v5622
        %5712 = vmatpush.msra.mxu0 %v5620
        %5713 = vmatpush.msra.mxu0 %v5618
        %5714 = vmatpush.msra.mxu0 %v5616
        %5715 = vmatpush.msra.mxu0 %v5614
        %5716 = vmatpush.msra.mxu0 %v5612
        %5717 = vmatpush.msra.mxu0 %v5610
        %5718 = vmatpush.msra.mxu0 %v5608
        %5719 = vmatpush.msra.mxu0 %v5606
        %5720 = vmatpush.msra.mxu0 %v5604
        %5721 = vmatpush.msra.mxu0 %v5602
        %5722 = vmatpush.msra.mxu0 %v5600
        %5723 = vmatpush.msra.mxu0 %v5598
        %5724 = vmatmul.f32.gmra.mxu0 %v5649
        %v5725 = vpop.f32.mrf.mxu0
        %v5726 = vadd.f32 0.0, %v5725
        %5727 = vdwg.mxu0
        %5728 = vmatpush.msra.mxu0 0.0
        %5729 = vmatpush.msra.mxu0 0.0
        %5730 = vmatpush.msra.mxu0 0.0
        %5731 = vmatpush.msra.mxu0 0.0
        %5732 = vmatpush.msra.mxu0 0.0
        %5733 = vmatpush.msra.mxu0 0.0
        %5734 = vmatpush.msra.mxu0 0.0
        %5735 = vmatpush.msra.mxu0 0.0
        %5736 = vmatpush.msra.mxu0 0.0
        %5737 = vmatpush.msra.mxu0 0.0
        %5738 = vmatpush.msra.mxu0 0.0
        %5739 = vmatpush.msra.mxu0 0.0
        %5740 = vmatpush.msra.mxu0 0.0
        %5741 = vmatpush.msra.mxu0 0.0
        %5742 = vmatpush.msra.mxu0 0.0
        %5743 = vmatpush.msra.mxu0 %v5703
        %5744 = vmatmul.f32.gmra.mxu0 %v5699
        %v5745 = vpop.f32.mrf.mxu0
        %v5746 = vadd.f32 %v5726, %v5745
        %5747 = vdwg.mxu0
        %5748 = vmatpush.msra.mxu0 %v5629
        %5749 = vmatpush.msra.mxu0 %v5627
        %5750 = vmatpush.msra.mxu0 %v5625
        %5751 = vmatpush.msra.mxu0 %v5623
        %5752 = vmatpush.msra.mxu0 %v5621
        %5753 = vmatpush.msra.mxu0 %v5619
        %5754 = vmatpush.msra.mxu0 %v5617
        %5755 = vmatpush.msra.mxu0 %v5615
        %5756 = vmatpush.msra.mxu0 %v5613
        %5757 = vmatpush.msra.mxu0 %v5611
        %5758 = vmatpush.msra.mxu0 %v5609
        %5759 = vmatpush.msra.mxu0 %v5607
        %5760 = vmatpush.msra.mxu0 %v5605
        %5761 = vmatpush.msra.mxu0 %v5603
        %5762 = vmatpush.msra.mxu0 %v5601
        %5763 = vmatpush.msra.mxu0 %v5599
        %5764 = vmatmul.f32.gmra.mxu0 %v5649
        %v5765 = vpop.f32.mrf.mxu0
        %v5766 = vadd.f32 0.0, %v5765
        %5767 = vdwg.mxu0
        %5768 = vmatpush.msra.mxu0 0.0
        %5769 = vmatpush.msra.mxu0 0.0
        %5770 = vmatpush.msra.mxu0 0.0
        %5771 = vmatpush.msra.mxu0 0.0
        %5772 = vmatpush.msra.mxu0 0.0
        %5773 = vmatpush.msra.mxu0 0.0
        %5774 = vmatpush.msra.mxu0 0.0
        %5775 = vmatpush.msra.mxu0 0.0
        %5776 = vmatpush.msra.mxu0 0.0
        %5777 = vmatpush.msra.mxu0 0.0
        %5778 = vmatpush.msra.mxu0 0.0
        %5779 = vmatpush.msra.mxu0 0.0
        %5780 = vmatpush.msra.mxu0 0.0
        %5781 = vmatpush.msra.mxu0 0.0
        %5782 = vmatpush.msra.mxu0 0.0
        %5783 = vmatpush.msra.mxu0 %v5706
        %5784 = vmatmul.f32.gmra.mxu0 %v5699
        %v5785 = vpop.f32.mrf.mxu0
        %v5786 = vadd.f32 %v5766, %v5785
        %5787 = vdwg.mxu0
        %5788 = vxpose.xlu0.b32.start [1/16] %v2895, 128
        %5789 = vxpose.xlu0.b32.cont [2/16] %v2896, 128
        %5790 = vxpose.xlu0.b32.cont [3/16] %v2897, 128
        %5791 = vxpose.xlu0.b32.cont [4/16] %v2898, 128
        %5792 = vxpose.xlu0.b32.cont [5/16] %v2899, 128
        %5793 = vxpose.xlu0.b32.cont [6/16] %v2900, 128
        %5794 = vxpose.xlu0.b32.cont [7/16] %v2901, 128
        %5795 = vxpose.xlu0.b32.cont [8/16] %v2902, 128
        %5796 = vxpose.xlu0.b32.cont [9/16] %v2903, 128
        %5797 = vxpose.xlu0.b32.cont [10/16] %v2904, 128
        %5798 = vxpose.xlu0.b32.cont [11/16] %v2905, 128
        %5799 = vxpose.xlu0.b32.cont [12/16] %v2906, 128
        %5800 = vxpose.xlu0.b32.cont [13/16] %v2907, 128
        %5801 = vxpose.xlu0.b32.cont [14/16] %v2908, 128
        %5802 = vxpose.xlu0.b32.cont [15/16] %v2909, 128
        %5803 = vxpose.xlu0.b32.end [16/16] %v2910, 128
        %v5804 = vpop.trf.xlu0
        %v5805 = vpop.trf.xlu0
        %v5806 = vpop.trf.xlu0
        %v5807 = vpop.trf.xlu0
        %v5808 = vpop.trf.xlu0
        %v5809 = vpop.trf.xlu0
        %v5810 = vpop.trf.xlu0
        %v5811 = vpop.trf.xlu0
        %v5812 = vpop.trf.xlu0
        %v5813 = vpop.trf.xlu0
        %v5814 = vpop.trf.xlu0
        %v5815 = vpop.trf.xlu0
        %v5816 = vpop.trf.xlu0
        %v5817 = vpop.trf.xlu0
        %v5818 = vpop.trf.xlu0
        %v5819 = vpop.trf.xlu0
        %5820 = vxpose.xlu0.b32.start [1/16] %v2911, 128
        %5821 = vxpose.xlu0.b32.cont [2/16] 0.0, 128
        %5822 = vxpose.xlu0.b32.cont [3/16] 0.0, 128
        %5823 = vxpose.xlu0.b32.cont [4/16] 0.0, 128
        %5824 = vxpose.xlu0.b32.cont [5/16] 0.0, 128
        %5825 = vxpose.xlu0.b32.cont [6/16] 0.0, 128
        %5826 = vxpose.xlu0.b32.cont [7/16] 0.0, 128
        %5827 = vxpose.xlu0.b32.cont [8/16] 0.0, 128
        %5828 = vxpose.xlu0.b32.cont [9/16] 0.0, 128
        %5829 = vxpose.xlu0.b32.cont [10/16] 0.0, 128
        %5830 = vxpose.xlu0.b32.cont [11/16] 0.0, 128
        %5831 = vxpose.xlu0.b32.cont [12/16] 0.0, 128
        %5832 = vxpose.xlu0.b32.cont [13/16] 0.0, 128
        %5833 = vxpose.xlu0.b32.cont [14/16] 0.0, 128
        %5834 = vxpose.xlu0.b32.cont [15/16] 0.0, 128
        %5835 = vxpose.xlu0.b32.end [16/16] 0.0, 128
        %v5836 = vpop.trf.xlu0
        %v5837 = vpop.trf.xlu0
        %v5838 = vpop.trf.xlu0
        %v5839 = vpop.trf.xlu0
        %v5840 = vpop.trf.xlu0
        %v5841 = vpop.trf.xlu0
        %v5842 = vpop.trf.xlu0
        %v5843 = vpop.trf.xlu0
        %v5844 = vpop.trf.xlu0
        %v5845 = vpop.trf.xlu0
        %v5846 = vpop.trf.xlu0
        %v5847 = vpop.trf.xlu0
        %v5848 = vpop.trf.xlu0
        %v5849 = vpop.trf.xlu0
        %v5850 = vpop.trf.xlu0
        %v5851 = vpop.trf.xlu0
        %v5853 = vsel %vm5697, %v5836, 0
        %v5856 = vsel %vm5701, %v5596, 0
        %v5859 = vsel %vm5701, %v5597, 0
        %5861 = vmatpush.msra.mxu0 %v5594
        %5862 = vmatpush.msra.mxu0 %v5592
        %5863 = vmatpush.msra.mxu0 %v5590
        %5864 = vmatpush.msra.mxu0 %v5588
        %5865 = vmatpush.msra.mxu0 %v5586
        %5866 = vmatpush.msra.mxu0 %v5584
        %5867 = vmatpush.msra.mxu0 %v5582
        %5868 = vmatpush.msra.mxu0 %v5580
        %5869 = vmatpush.msra.mxu0 %v5578
        %5870 = vmatpush.msra.mxu0 %v5576
        %5871 = vmatpush.msra.mxu0 %v5574
        %5872 = vmatpush.msra.mxu0 %v5572
        %5873 = vmatpush.msra.mxu0 %v5570
        %5874 = vmatpush.msra.mxu0 %v5568
        %5875 = vmatpush.msra.mxu0 %v5566
        %5876 = vmatpush.msra.mxu0 %v5564
        %5877 = vmatmul.f32.gmra.mxu0 %v5804
        %v5878 = vpop.f32.mrf.mxu0
        %v5879 = vadd.f32 %v5746, %v5878
        %5880 = vdwg.mxu0
        %5881 = vmatpush.msra.mxu0 0.0
        %5882 = vmatpush.msra.mxu0 0.0
        %5883 = vmatpush.msra.mxu0 0.0
        %5884 = vmatpush.msra.mxu0 0.0
        %5885 = vmatpush.msra.mxu0 0.0
        %5886 = vmatpush.msra.mxu0 0.0
        %5887 = vmatpush.msra.mxu0 0.0
        %5888 = vmatpush.msra.mxu0 0.0
        %5889 = vmatpush.msra.mxu0 0.0
        %5890 = vmatpush.msra.mxu0 0.0
        %5891 = vmatpush.msra.mxu0 0.0
        %5892 = vmatpush.msra.mxu0 0.0
        %5893 = vmatpush.msra.mxu0 0.0
        %5894 = vmatpush.msra.mxu0 0.0
        %5895 = vmatpush.msra.mxu0 0.0
        %5896 = vmatpush.msra.mxu0 %v5856
        %5897 = vmatmul.f32.gmra.mxu0 %v5853
        %v5898 = vpop.f32.mrf.mxu0
        %v5899 = vadd.f32 %v5879, %v5898
        %5900 = vdwg.mxu0
        %5901 = vmatpush.msra.mxu0 %v5595
        %5902 = vmatpush.msra.mxu0 %v5593
        %5903 = vmatpush.msra.mxu0 %v5591
        %5904 = vmatpush.msra.mxu0 %v5589
        %5905 = vmatpush.msra.mxu0 %v5587
        %5906 = vmatpush.msra.mxu0 %v5585
        %5907 = vmatpush.msra.mxu0 %v5583
        %5908 = vmatpush.msra.mxu0 %v5581
        %5909 = vmatpush.msra.mxu0 %v5579
        %5910 = vmatpush.msra.mxu0 %v5577
        %5911 = vmatpush.msra.mxu0 %v5575
        %5912 = vmatpush.msra.mxu0 %v5573
        %5913 = vmatpush.msra.mxu0 %v5571
        %5914 = vmatpush.msra.mxu0 %v5569
        %5915 = vmatpush.msra.mxu0 %v5567
        %5916 = vmatpush.msra.mxu0 %v5565
        %5917 = vmatmul.f32.gmra.mxu0 %v5804
        %v5918 = vpop.f32.mrf.mxu0
        %v5919 = vadd.f32 %v5786, %v5918
        %5920 = vdwg.mxu0
        %5921 = vmatpush.msra.mxu0 0.0
        %5922 = vmatpush.msra.mxu0 0.0
        %5923 = vmatpush.msra.mxu0 0.0
        %5924 = vmatpush.msra.mxu0 0.0
        %5925 = vmatpush.msra.mxu0 0.0
        %5926 = vmatpush.msra.mxu0 0.0
        %5927 = vmatpush.msra.mxu0 0.0
        %5928 = vmatpush.msra.mxu0 0.0
        %5929 = vmatpush.msra.mxu0 0.0
        %5930 = vmatpush.msra.mxu0 0.0
        %5931 = vmatpush.msra.mxu0 0.0
        %5932 = vmatpush.msra.mxu0 0.0
        %5933 = vmatpush.msra.mxu0 0.0
        %5934 = vmatpush.msra.mxu0 0.0
        %5935 = vmatpush.msra.mxu0 0.0
        %5936 = vmatpush.msra.mxu0 %v5859
        %5937 = vmatmul.f32.gmra.mxu0 %v5853
        %v5938 = vpop.f32.mrf.mxu0
        %v5939 = vadd.f32 %v5919, %v5938
        %5940 = vdwg.mxu0
        %v5942 = vrot.slane %v5899, 1
        %v5944 = vadd.f32 %v5939, %v5942
        %v5945 = vmul.f32 %v5944, %v5632
        %5946 = vst [vmem:[%s232] sm:$0x7f] %v5945
        %v5947 = vmul.f32 %v5939, %v5632
        %5948 = vst [vmem:[%s232] sm:$0x80] %v5947
        %s5949 = sand.u32 %s142, 1
        %s5950 = scalar_lea.sflag [#allocation3], %s5949
        %s5951 = sand.u32 %s142, 1
        %s5952 = smul.addr %s5951, 8
        %s5953 = scalar_lea.vmem [#allocation2], %s5952
        // Predicated region
        $region41: #{tpu_custom_call.1} parent=39 // pred_check
          %p5954 = pneg %p152
        $region42: #{tpu_custom_call.1} parent=39 // pred_check_branch
          %5956 = sbr.rel (%p5954) target = $region44
        $region43: #{tpu_custom_call.1} parent=39 // pred_region
          %5958 = vsyncadd %s5950, 0
          %s5959 = smul.addr %s19, 8
          %s5960 = scalar_lea.hbm %s5, %s5959
          %s5962 = sshll.u32 %s5953, 4
          %s5963 = int_to_ptr.vmem [resolvable:$true] %s5962
          %s5964 = sshll.u32 %s5960, 4
          %s5965 = int_to_ptr.hbm [resolvable:$true] %s5964
          %5967 = dma.vmem_to_hbm [thread:$0]  %s5963, 128, %s5965, %s5950
        $region44: #{tpu_custom_call.1} parent=39 // pred_fallthru
          _
      $region40: #{tpu_custom_call.1} parent=5 // pred_fallthru
        _
      %p5968 = scmp.le.s32.totalorder 2, %s14
      // Predicated region
      $region45: #{tpu_custom_call.1} parent=5 // pred_check
        %p5969 = pneg %p5968
      $region46: #{tpu_custom_call.1} parent=5 // pred_check_branch
        %5971 = sbr.rel (%p5969) target = $region48
      $region47: #{tpu_custom_call.1} parent=5 // pred_region
        %s5972 = ssub.s32 %s14, 2
        // Predicated region
        $region49: #{tpu_custom_call.1} parent=47 // pred_check
          %p5973 = pneg %p158
        $region50: #{tpu_custom_call.1} parent=47 // pred_check_branch
          %5975 = sbr.rel (%p5973) target = $region52
        $region51: #{tpu_custom_call.1} parent=47 // pred_region
          %s5976 = sand.u32 %s143, 1
          %s5977 = scalar_lea.sflag [#allocation3], %s5976
          %s5978 = sand.u32 %s143, 1
          %s5979 = smul.addr %s5978, 8
          %s5980 = scalar_lea.vmem [#allocation2], %s5979
          %5982 = dma.done %s5977, 128
        $region52: #{tpu_custom_call.1} parent=47 // pred_fallthru
          _
      $region48: #{tpu_custom_call.1} parent=5 // pred_fallthru
        _
    $region6: #{tpu_custom_call.1} parent=1 // loop_footer
      %s18 = sadd.s32 1, %s14
    $region7: #{tpu_custom_call.1} parent=1 // loop_footer_branch
      %13 = sbr.rel target = $region3
    $region8: #{tpu_custom_call.1} parent=1 // loop_exit
      _
    %5983 = vsyncpa [#allocation3], 1
    %s5984 = scalar_lea.sflag [#allocation3], 1
    %5985 = vsyncpa %s5984, 1

</llo_original>
